<compile_context>
chip_gen: v7x
topology: tpu7x:2x2x1
jax: 0.10.0
libtpu: 0.0.40
codegen_flags: <defaults>
</compile_context>

<pallas_src>
import math

import jax
import jax.numpy as jnp
import numpy as np
from jax.experimental import pallas as pl
from jax.experimental.pallas import tpu as pltpu

# ----------------------------- model config ---------------------------------
B = 2            # batch
T = 8            # sequence length
D_MODEL = 32     # d_model
D_FF = 64        # feed-forward hidden
H = 4            # num heads
D_HEAD = D_MODEL // H
CLIP = 4         # clipping_distance
N_LAYERS = 2     # number of encoder blocks (module default is 6; small here)


def _layer_norm(x, gamma, beta, eps=1e-5):
    mu = jnp.mean(x, axis=-1, keepdims=True)
    var = jnp.mean((x - mu) ** 2, axis=-1, keepdims=True)
    return (x - mu) * jax.lax.rsqrt(var + eps) * gamma + beta


# ------------------------------ Pallas kernel --------------------------------
def encoder_stack_kernel(vl_ref,                           # scalar-prefetch (SMEM)
                         x_ref, wqkv_ref, wo_ref, pk_ref, pv_ref,
                         w1_ref, b1_ref, w2_ref, b2_ref,
                         g1_ref, be1_ref, g2_ref, be2_ref,
                         out_ref,
                         x_vmem):                          # VMEM scratch (resident act.)
    layer = pl.program_id(0)
    n_layers = pl.num_programs(0)

    BT, D = x_vmem.shape
    T_ = pk_ref.shape[1]
    dh = pk_ref.shape[3]
    Bb = BT // T_
    nheads = D // dh
    G = nheads * Bb                                         # fused (head, batch) axis

    # Load the input activation from HBM exactly once (first layer).
    @pl.when(layer == 0)
    def _():
        x_vmem[...] = x_ref[...]

    x = x_vmem[...]                                         # (B*T, D)

    # ---- fused QKV projection: one MXU matmul instead of three -------------
    qkv = jnp.dot(x, wqkv_ref[0], preferred_element_type=jnp.float32)   # (B*T, 3D)

    # ---- split heads: gather (head, batch) tiles onto one leading batch axis
    q_tiles, k_tiles, v_tiles = [], [], []
    for h in range(nheads):
        qs = qkv[:, h * dh:(h + 1) * dh]
        ks = qkv[:, D + h * dh:D + (h + 1) * dh]
        vs = qkv[:, 2 * D + h * dh:2 * D + (h + 1) * dh]
        for b in range(Bb):
            q_tiles.append(qs[b * T_:(b + 1) * T_, :])
            k_tiles.append(ks[b * T_:(b + 1) * T_, :])
            v_tiles.append(vs[b * T_:(b + 1) * T_, :])
    q_g = jnp.stack(q_tiles, axis=0)                        # (G, T, dh), g = h*B + b
    k_g = jnp.stack(k_tiles, axis=0)
    v_g = jnp.stack(v_tiles, axis=0)

    pos_k = pk_ref[0]                                       # (T, T, dh)
    pos_v = pv_ref[0]

    # ---- content + relative-position scores (batched over all heads/batches)
    s_c = jnp.einsum('gtd,gsd->gts', q_g, k_g,
                     preferred_element_type=jnp.float32)                # (G, T, T)
    s_p = jnp.sum(q_g[:, :, None, :] * pos_k[None, :, :, :], axis=-1)   # (G, T, T)
    scale = 1.0 / math.sqrt(dh)
    s = (s_c + s_p) * scale

    # ---- per-batch key-validity mask from SMEM scalars ----------------------
    b_iota = jax.lax.broadcasted_iota(jnp.int32, (nheads, Bb, T_, T_), 1)
    col = jax.lax.broadcasted_iota(jnp.int32, (nheads, Bb, T_, T_), 3)
    lens = jnp.zeros((nheads, Bb, T_, T_), jnp.int32)
    for b in range(Bb):
        lens = jnp.where(b_iota == b, vl_ref[b], lens)
    mask = col.reshape(G, T_, T_) < lens.reshape(G, T_, T_)

    # ---- masked softmax (masked entries -> -1e6, as in the reference) ------
    s = jnp.where(mask, s, -1000000.0)
    s = s - jnp.max(s, axis=-1, keepdims=True)
    e = jnp.exp(s)
    attn = e * pl.reciprocal(jnp.sum(e, axis=-1, keepdims=True), approx=True)

    # ---- attention output + relative-position values ------------------------
    o_c = jnp.einsum('gts,gsd->gtd', attn, v_g,
                     preferred_element_type=jnp.float32)                # (G, T, dh)
    o_p = jnp.sum(attn[:, :, :, None] * pos_v[None, :, :, :], axis=2)   # (G, T, dh)
    o = o_c + o_p

    # ---- merge heads back to (B*T, D) ---------------------------------------
    rows = []
    for b in range(Bb):
        rows.append(jnp.concatenate(
            [o[h * Bb + b] for h in range(nheads)], axis=-1))           # (T, D)
    attn_out = jnp.concatenate(rows, axis=0)                            # (B*T, D)

    y = jnp.dot(attn_out, wo_ref[0], preferred_element_type=jnp.float32)

    # ---- AddNorm 1 (dropout == identity in eval mode) ------------------------
    h1 = _layer_norm(x + y, g1_ref[0], be1_ref[0])

    # ---- position-wise FFN ---------------------------------------------------
    z = jnp.dot(h1, w1_ref[0], preferred_element_type=jnp.float32) + b1_ref[0]
    z = jnp.maximum(z, 0.0)
    z = jnp.dot(z, w2_ref[0], preferred_element_type=jnp.float32) + b2_ref[0]

    # ---- AddNorm 2 -----------------------------------------------------------
    h2 = _layer_norm(h1 + z, g2_ref[0], be2_ref[0])

    # keep activation resident for the next layer; store result on last layer
    x_vmem[...] = h2

    @pl.when(layer == n_layers - 1)
    def _():
        out_ref[...] = h2.astype(out_ref.dtype)


def encoder_with_rpr_pallas(x, valid_lens, layers):
    """Full EncoderWithRPR forward in ONE pallas_call.  x: (B, T, D)."""
    B_, T_, D_ = x.shape
    L = len(layers)
    dh = layers[0]["pos_k"].shape[-1]
    dff = layers[0]["w1_t"].shape[1]
    BT = B_ * T_

    def stk(name):
        return jnp.stack([p[name] for p in layers], axis=0)

    # stacked (leading layer axis) parameters
    wqkv = jnp.concatenate([stk("wq_t"), stk("wk_t"), stk("wv_t")], axis=-1)  # (L,D,3D)
    wo = stk("wo_t")                      # (L, D, D)
    pos_k = stk("pos_k")                  # (L, T, T, dh)
    pos_v = stk("pos_v")                  # (L, T, T, dh)
    w1 = stk("w1_t"); b1 = stk("b1")      # (L, D, dff), (L, 1, dff)
    w2 = stk("w2_t"); b2 = stk("b2")      # (L, dff, D), (L, 1, D)
    g1 = stk("g1"); be1 = stk("be1")      # (L, 1, D)
    g2 = stk("g2"); be2 = stk("be2")      # (L, 1, D)

    x2 = x.reshape(BT, D_)

    def lspec(shape):
        n = len(shape)
        return pl.BlockSpec((1,) + shape, lambda l, vl, _n=n: (l,) + (0,) * _n)

    grid_spec = pltpu.PrefetchScalarGridSpec(
        num_scalar_prefetch=1,
        grid=(L,),
        in_specs=[
            pl.BlockSpec((BT, D_), lambda l, vl: (0, 0)),   # x (read at layer 0 only)
            lspec((D_, 3 * D_)),                            # wqkv
            lspec((D_, D_)),                                # wo
            lspec((T_, T_, dh)),                            # pos_k
            lspec((T_, T_, dh)),                            # pos_v
            lspec((D_, dff)),                               # w1
            lspec((1, dff)),                                # b1
            lspec((dff, D_)),                               # w2
            lspec((1, D_)),                                 # b2
            lspec((1, D_)),                                 # gamma1
            lspec((1, D_)),                                 # beta1
            lspec((1, D_)),                                 # gamma2
            lspec((1, D_)),                                 # beta2
        ],
        out_specs=pl.BlockSpec((BT, D_), lambda l, vl: (0, 0)),
        scratch_shapes=[pltpu.VMEM((BT, D_), jnp.float32)],
    )

    out = pl.pallas_call(
        encoder_stack_kernel,
        out_shape=jax.ShapeDtypeStruct((BT, D_), x.dtype),
        grid_spec=grid_spec,
        # layers are sequential (activation carried in scratch) -> "arbitrary"
        compiler_params=pltpu.CompilerParams(dimension_semantics=("arbitrary",)),
    )(valid_lens, x2, wqkv, wo, pos_k, pos_v, w1, b1, w2, b2, g1, be1, g2, be2)

    return out.reshape(B_, T_, D_)


# --------------------------- pure-JAX reference ------------------------------
def encoder_block_ref(x, valid_lens, p):
    B_, T_, D_ = x.shape
    dh = p["pos_k"].shape[-1]
    nheads = D_ // dh

    def split(z):  # (B,T,D) -> (B,H,T,dh)
        return z.reshape(B_, T_, nheads, dh).transpose(0, 2, 1, 3)

    qh = split(x @ p["wq_t"])
    kh = split(x @ p["wk_t"])
    vh = split(x @ p["wv_t"])

    scores = jnp.einsum("bhtd,bhsd->bhts", qh, kh)
    scores_pos = jnp.einsum("bhtd,tsd->bhts", qh, p["pos_k"])
    scores = (scores + scores_pos) / math.sqrt(dh)
    mask = jnp.arange(T_)[None, None, None, :] < valid_lens[:, None, None, None]
    scores = jnp.where(mask, scores, -1000000.0)
    attn = jax.nn.softmax(scores, axis=-1)

    out = jnp.einsum("bhts,bhsd->bhtd", attn, vh)
    out_pos = jnp.einsum("bhts,tsd->bhtd", attn, p["pos_v"])
    o = (out + out_pos).transpose(0, 2, 1, 3).reshape(B_, T_, D_)
    y = o @ p["wo_t"]
    h1 = _layer_norm(x + y, p["g1"], p["be1"])
    z = jnp.maximum(h1 @ p["w1_t"] + p["b1"], 0.0) @ p["w2_t"] + p["b2"]
    return _layer_norm(h1 + z, p["g2"], p["be2"])


def encoder_with_rpr_ref(x, valid_lens, layers):
    for p in layers:
        x = encoder_block_ref(x, valid_lens, p)
    return x


# ------------------------------ param init -----------------------------------
def make_layer_params(key):
    ks = jax.random.split(key, 10)
    scale = 0.1
    # relative-position distance table (static given T, CLIP)
    rng_q = jnp.arange(T)
    dist = jnp.clip(rng_q[None, :] - rng_q[:, None], -CLIP, CLIP) + CLIP  # (T,T)
    emb_k = scale * jax.random.normal(ks[8], (2 * CLIP + 1, D_HEAD), jnp.float32)
    emb_v = scale * jax.random.normal(ks[9], (2 * CLIP + 1, D_HEAD), jnp.float32)
    return dict(
        wq_t=scale * jax.random.normal(ks[0], (D_MODEL, D_MODEL), jnp.float32),
        wk_t=scale * jax.random.normal(ks[1], (D_MODEL, D_MODEL), jnp.float32),
        wv_t=scale * jax.random.normal(ks[2], (D_MODEL, D_MODEL), jnp.float32),
        wo_t=scale * jax.random.normal(ks[3], (D_MODEL, D_MODEL), jnp.float32),
        w1_t=scale * jax.random.normal(ks[4], (D_MODEL, D_FF), jnp.float32),
        b1=scale * jax.random.normal(ks[5], (1, D_FF), jnp.float32),
        w2_t=scale * jax.random.normal(ks[6], (D_FF, D_MODEL), jnp.float32),
        b2=scale * jax.random.normal(ks[7], (1, D_MODEL), jnp.float32),
        g1=jnp.ones((1, D_MODEL), jnp.float32),
        be1=jnp.zeros((1, D_MODEL), jnp.float32),
        g2=jnp.ones((1, D_MODEL), jnp.float32),
        be2=jnp.zeros((1, D_MODEL), jnp.float32),
        pos_k=emb_k[dist],   # (T, T, D_HEAD), gather done host-side (toy T)
        pos_v=emb_v[dist],
    )


if __name__ == "__main__":
    key = jax.random.PRNGKey(0)
    k_x, *k_layers = jax.random.split(key, 1 + N_LAYERS)

    x = jax.random.normal(k_x, (B, T, D_MODEL), jnp.float32)
    valid_lens = jnp.array([5, 8], dtype=jnp.int32)
    layers = [make_layer_params(k) for k in k_layers]

    out = encoder_with_rpr_pallas(x, valid_lens, layers)
    out = jax.block_until_ready(out)

    ref = encoder_with_rpr_ref(x, valid_lens, layers)
    np.testing.assert_allclose(np.asarray(out), np.asarray(ref),
                               rtol=2e-3, atol=2e-3)

    print("KERNEL_OK")
</pallas_src>

<mosaic_0001>
module attributes {stable_mosaic.version = 11 : i64} {
  func.func @encoder_stack_kernel(%arg0: i32, %arg1: memref<2xi32, #tpu.memory_space<smem>>, %arg2: memref<16x32xf32, #tpu.memory_space<vmem>>, %arg3: memref<1x32x96xf32, #tpu.memory_space<vmem>>, %arg4: memref<1x32x32xf32, #tpu.memory_space<vmem>>, %arg5: memref<1x8x8x8xf32, #tpu.memory_space<vmem>>, %arg6: memref<1x8x8x8xf32, #tpu.memory_space<vmem>>, %arg7: memref<1x32x64xf32, #tpu.memory_space<vmem>>, %arg8: memref<1x1x64xf32, #tpu.memory_space<vmem>>, %arg9: memref<1x64x32xf32, #tpu.memory_space<vmem>>, %arg10: memref<1x1x32xf32, #tpu.memory_space<vmem>>, %arg11: memref<1x1x32xf32, #tpu.memory_space<vmem>>, %arg12: memref<1x1x32xf32, #tpu.memory_space<vmem>>, %arg13: memref<1x1x32xf32, #tpu.memory_space<vmem>>, %arg14: memref<1x1x32xf32, #tpu.memory_space<vmem>>, %arg15: memref<16x32xf32, #tpu.memory_space<vmem>>, %arg16: memref<16x32xf32, #tpu.memory_space<vmem>>) attributes {dimension_semantics = [#tpu.dimension_semantics<arbitrary>], iteration_bounds = array<i64: 2>, scalar_prefetch = 1 : i64, scratch_operands = 1 : i64, tpu.core_type = #tpu.core_type<tc>, window_params = [{pipeline_mode = #tpu.pipeline_mode<synchronous>, transform_indices = @transform_0, window_bounds = array<i64: 16, 32>}, {transform_indices = @transform_1, window_bounds = array<i64: 1, 32, 96>}, {transform_indices = @transform_2, window_bounds = array<i64: 1, 32, 32>}, {transform_indices = @transform_3, window_bounds = array<i64: 1, 8, 8, 8>}, {transform_indices = @transform_4, window_bounds = array<i64: 1, 8, 8, 8>}, {transform_indices = @transform_5, window_bounds = array<i64: 1, 32, 64>}, {transform_indices = @transform_6, window_bounds = array<i64: 1, 1, 64>}, {transform_indices = @transform_7, window_bounds = array<i64: 1, 64, 32>}, {transform_indices = @transform_8, window_bounds = array<i64: 1, 1, 32>}, {transform_indices = @transform_9, window_bounds = array<i64: 1, 1, 32>}, {transform_indices = @transform_10, window_bounds = array<i64: 1, 1, 32>}, {transform_indices = @transform_11, window_bounds = array<i64: 1, 1, 32>}, {transform_indices = @transform_12, window_bounds = array<i64: 1, 1, 32>}, {pipeline_mode = #tpu.pipeline_mode<synchronous>, transform_indices = @transform_13, window_bounds = array<i64: 16, 32>}]} {
    %c0_i32 = arith.constant 0 : i32
    %0 = arith.cmpi eq, %arg0, %c0_i32 : i32
    %1 = arith.extui %0 : i1 to i32
    %c0_i32_0 = arith.constant 0 : i32
    %2 = arith.cmpi ne, %1, %c0_i32_0 : i32
    scf.if %2 {
      %c0_69 = arith.constant 0 : index
      %c0_70 = arith.constant 0 : index
      %216 = vector.load %arg2[%c0_69, %c0_70] : memref<16x32xf32, #tpu.memory_space<vmem>>, vector<16x32xf32>
      %c0_71 = arith.constant 0 : index
      %c0_72 = arith.constant 0 : index
      %217 = vector.load %arg16[%c0_71, %c0_72] : memref<16x32xf32, #tpu.memory_space<vmem>>, vector<16x32xf32>
      tpu.vector_store %arg16[%c0_71, %c0_72], %216 {strides = array<i32>} : memref<16x32xf32, #tpu.memory_space<vmem>>, vector<16x32xf32>,
    } else {
    }
    %c0 = arith.constant 0 : index
    %c0_1 = arith.constant 0 : index
    %3 = vector.load %arg16[%c0, %c0_1] : memref<16x32xf32, #tpu.memory_space<vmem>>, vector<16x32xf32>
    %c0_2 = arith.constant 0 : index
    %c0_3 = arith.constant 0 : index
    %c0_4 = arith.constant 0 : index
    %4 = vector.load %arg3[%c0_2, %c0_3, %c0_4] : memref<1x32x96xf32, #tpu.memory_space<vmem>>, vector<1x32x96xf32>
    %5 = vector.shape_cast %4 : vector<1x32x96xf32> to vector<32x96xf32>
    %cst = arith.constant dense<0.000000e+00> : vector<16x96xf32>
    %6 = tpu.matmul %3, %5, %cst {dimension_numbers = #tpu.dot_dimension_numbers<[1], [0], [0], [1], [0, 0, 1, 1], [], []>} : vector<16x32xf32>, vector<32x96xf32>, vector<16x96xf32> -> vector<16x96xf32>
    %7 = vector.extract_strided_slice %6 {offsets = [0, 0], sizes = [16, 8], strides = [1, 1]} : vector<16x96xf32> to vector<16x8xf32>
    %8 = vector.extract_strided_slice %6 {offsets = [0, 32], sizes = [16, 8], strides = [1, 1]} : vector<16x96xf32> to vector<16x8xf32>
    %9 = vector.extract_strided_slice %6 {offsets = [0, 64], sizes = [16, 8], strides = [1, 1]} : vector<16x96xf32> to vector<16x8xf32>
    %10 = vector.extract_strided_slice %7 {offsets = [0, 0], sizes = [8, 8], strides = [1, 1]} : vector<16x8xf32> to vector<8x8xf32>
    %11 = vector.extract_strided_slice %8 {offsets = [0, 0], sizes = [8, 8], strides = [1, 1]} : vector<16x8xf32> to vector<8x8xf32>
    %12 = vector.extract_strided_slice %9 {offsets = [0, 0], sizes = [8, 8], strides = [1, 1]} : vector<16x8xf32> to vector<8x8xf32>
    %13 = vector.extract_strided_slice %7 {offsets = [8, 0], sizes = [8, 8], strides = [1, 1]} : vector<16x8xf32> to vector<8x8xf32>
    %14 = vector.extract_strided_slice %8 {offsets = [8, 0], sizes = [8, 8], strides = [1, 1]} : vector<16x8xf32> to vector<8x8xf32>
    %15 = vector.extract_strided_slice %9 {offsets = [8, 0], sizes = [8, 8], strides = [1, 1]} : vector<16x8xf32> to vector<8x8xf32>
    %16 = vector.extract_strided_slice %6 {offsets = [0, 8], sizes = [16, 8], strides = [1, 1]} : vector<16x96xf32> to vector<16x8xf32>
    %17 = vector.extract_strided_slice %6 {offsets = [0, 40], sizes = [16, 8], strides = [1, 1]} : vector<16x96xf32> to vector<16x8xf32>
    %18 = vector.extract_strided_slice %6 {offsets = [0, 72], sizes = [16, 8], strides = [1, 1]} : vector<16x96xf32> to vector<16x8xf32>
    %19 = vector.extract_strided_slice %16 {offsets = [0, 0], sizes = [8, 8], strides = [1, 1]} : vector<16x8xf32> to vector<8x8xf32>
    %20 = vector.extract_strided_slice %17 {offsets = [0, 0], sizes = [8, 8], strides = [1, 1]} : vector<16x8xf32> to vector<8x8xf32>
    %21 = vector.extract_strided_slice %18 {offsets = [0, 0], sizes = [8, 8], strides = [1, 1]} : vector<16x8xf32> to vector<8x8xf32>
    %22 = vector.extract_strided_slice %16 {offsets = [8, 0], sizes = [8, 8], strides = [1, 1]} : vector<16x8xf32> to vector<8x8xf32>
    %23 = vector.extract_strided_slice %17 {offsets = [8, 0], sizes = [8, 8], strides = [1, 1]} : vector<16x8xf32> to vector<8x8xf32>
    %24 = vector.extract_strided_slice %18 {offsets = [8, 0], sizes = [8, 8], strides = [1, 1]} : vector<16x8xf32> to vector<8x8xf32>
    %25 = vector.extract_strided_slice %6 {offsets = [0, 16], sizes = [16, 8], strides = [1, 1]} : vector<16x96xf32> to vector<16x8xf32>
    %26 = vector.extract_strided_slice %6 {offsets = [0, 48], sizes = [16, 8], strides = [1, 1]} : vector<16x96xf32> to vector<16x8xf32>
    %27 = vector.extract_strided_slice %6 {offsets = [0, 80], sizes = [16, 8], strides = [1, 1]} : vector<16x96xf32> to vector<16x8xf32>
    %28 = vector.extract_strided_slice %25 {offsets = [0, 0], sizes = [8, 8], strides = [1, 1]} : vector<16x8xf32> to vector<8x8xf32>
    %29 = vector.extract_strided_slice %26 {offsets = [0, 0], sizes = [8, 8], strides = [1, 1]} : vector<16x8xf32> to vector<8x8xf32>
    %30 = vector.extract_strided_slice %27 {offsets = [0, 0], sizes = [8, 8], strides = [1, 1]} : vector<16x8xf32> to vector<8x8xf32>
    %31 = vector.extract_strided_slice %25 {offsets = [8, 0], sizes = [8, 8], strides = [1, 1]} : vector<16x8xf32> to vector<8x8xf32>
    %32 = vector.extract_strided_slice %26 {offsets = [8, 0], sizes = [8, 8], strides = [1, 1]} : vector<16x8xf32> to vector<8x8xf32>
    %33 = vector.extract_strided_slice %27 {offsets = [8, 0], sizes = [8, 8], strides = [1, 1]} : vector<16x8xf32> to vector<8x8xf32>
    %34 = vector.extract_strided_slice %6 {offsets = [0, 24], sizes = [16, 8], strides = [1, 1]} : vector<16x96xf32> to vector<16x8xf32>
    %35 = vector.extract_strided_slice %6 {offsets = [0, 56], sizes = [16, 8], strides = [1, 1]} : vector<16x96xf32> to vector<16x8xf32>
    %36 = vector.extract_strided_slice %6 {offsets = [0, 88], sizes = [16, 8], strides = [1, 1]} : vector<16x96xf32> to vector<16x8xf32>
    %37 = vector.extract_strided_slice %34 {offsets = [0, 0], sizes = [8, 8], strides = [1, 1]} : vector<16x8xf32> to vector<8x8xf32>
    %38 = vector.extract_strided_slice %35 {offsets = [0, 0], sizes = [8, 8], strides = [1, 1]} : vector<16x8xf32> to vector<8x8xf32>
    %39 = vector.extract_strided_slice %36 {offsets = [0, 0], sizes = [8, 8], strides = [1, 1]} : vector<16x8xf32> to vector<8x8xf32>
    %40 = vector.extract_strided_slice %34 {offsets = [8, 0], sizes = [8, 8], strides = [1, 1]} : vector<16x8xf32> to vector<8x8xf32>
    %41 = vector.extract_strided_slice %35 {offsets = [8, 0], sizes = [8, 8], strides = [1, 1]} : vector<16x8xf32> to vector<8x8xf32>
    %42 = vector.extract_strided_slice %36 {offsets = [8, 0], sizes = [8, 8], strides = [1, 1]} : vector<16x8xf32> to vector<8x8xf32>
    %43 = vector.shape_cast %10 : vector<8x8xf32> to vector<1x8x8xf32>
    %44 = vector.shape_cast %13 : vector<8x8xf32> to vector<1x8x8xf32>
    %45 = vector.shape_cast %19 : vector<8x8xf32> to vector<1x8x8xf32>
    %46 = vector.shape_cast %22 : vector<8x8xf32> to vector<1x8x8xf32>
    %47 = vector.shape_cast %28 : vector<8x8xf32> to vector<1x8x8xf32>
    %48 = vector.shape_cast %31 : vector<8x8xf32> to vector<1x8x8xf32>
    %49 = vector.shape_cast %37 : vector<8x8xf32> to vector<1x8x8xf32>
    %50 = vector.shape_cast %40 : vector<8x8xf32> to vector<1x8x8xf32>
    %51 = tpu.concatenate %43, %44, %45, %46, %47, %48, %49, %50 in 0 : vector<1x8x8xf32>, vector<1x8x8xf32>, vector<1x8x8xf32>, vector<1x8x8xf32>, vector<1x8x8xf32>, vector<1x8x8xf32>, vector<1x8x8xf32>, vector<1x8x8xf32> -> vector<8x8x8xf32>
    %52 = vector.shape_cast %11 : vector<8x8xf32> to vector<1x8x8xf32>
    %53 = vector.shape_cast %14 : vector<8x8xf32> to vector<1x8x8xf32>
    %54 = vector.shape_cast %20 : vector<8x8xf32> to vector<1x8x8xf32>
    %55 = vector.shape_cast %23 : vector<8x8xf32> to vector<1x8x8xf32>
    %56 = vector.shape_cast %29 : vector<8x8xf32> to vector<1x8x8xf32>
    %57 = vector.shape_cast %32 : vector<8x8xf32> to vector<1x8x8xf32>
    %58 = vector.shape_cast %38 : vector<8x8xf32> to vector<1x8x8xf32>
    %59 = vector.shape_cast %41 : vector<8x8xf32> to vector<1x8x8xf32>
    %60 = tpu.concatenate %52, %53, %54, %55, %56, %57, %58, %59 in 0 : vector<1x8x8xf32>, vector<1x8x8xf32>, vector<1x8x8xf32>, vector<1x8x8xf32>, vector<1x8x8xf32>, vector<1x8x8xf32>, vector<1x8x8xf32>, vector<1x8x8xf32> -> vector<8x8x8xf32>
    %61 = vector.shape_cast %12 : vector<8x8xf32> to vector<1x8x8xf32>
    %62 = vector.shape_cast %15 : vector<8x8xf32> to vector<1x8x8xf32>
    %63 = vector.shape_cast %21 : vector<8x8xf32> to vector<1x8x8xf32>
    %64 = vector.shape_cast %24 : vector<8x8xf32> to vector<1x8x8xf32>
    %65 = vector.shape_cast %30 : vector<8x8xf32> to vector<1x8x8xf32>
    %66 = vector.shape_cast %33 : vector<8x8xf32> to vector<1x8x8xf32>
    %67 = vector.shape_cast %39 : vector<8x8xf32> to vector<1x8x8xf32>
    %68 = vector.shape_cast %42 : vector<8x8xf32> to vector<1x8x8xf32>
    %69 = tpu.concatenate %61, %62, %63, %64, %65, %66, %67, %68 in 0 : vector<1x8x8xf32>, vector<1x8x8xf32>, vector<1x8x8xf32>, vector<1x8x8xf32>, vector<1x8x8xf32>, vector<1x8x8xf32>, vector<1x8x8xf32>, vector<1x8x8xf32> -> vector<8x8x8xf32>
    %c0_5 = arith.constant 0 : index
    %c0_6 = arith.constant 0 : index
    %c0_7 = arith.constant 0 : index
    %c0_8 = arith.constant 0 : index
    %70 = vector.load %arg5[%c0_5, %c0_6, %c0_7, %c0_8] : memref<1x8x8x8xf32, #tpu.memory_space<vmem>>, vector<1x8x8x8xf32>
    %71 = vector.shape_cast %70 : vector<1x8x8x8xf32> to vector<8x8x8xf32>
    %c0_9 = arith.constant 0 : index
    %c0_10 = arith.constant 0 : index
    %c0_11 = arith.constant 0 : index
    %c0_12 = arith.constant 0 : index
    %72 = vector.load %arg6[%c0_9, %c0_10, %c0_11, %c0_12] : memref<1x8x8x8xf32, #tpu.memory_space<vmem>>, vector<1x8x8x8xf32>
    %73 = vector.shape_cast %72 : vector<1x8x8x8xf32> to vector<8x8x8xf32>
    "tpu.trace_start"() <{level = 10 : i32, message = "gtd,gsd->gts"}> : () -> ()
    %cst_13 = arith.constant dense<0.000000e+00> : vector<8x8x8xf32>
    %74 = tpu.matmul %51, %60, %cst_13 {dimension_numbers = #tpu.dot_dimension_numbers<[2], [2], [1], [1], [0, 0, 0, 1, 1, 1], [0], [0]>} : vector<8x8x8xf32>, vector<8x8x8xf32>, vector<8x8x8xf32> -> vector<8x8x8xf32>
    "tpu.trace_stop"() : () -> ()
    %75 = vector.shape_cast %51 : vector<8x8x8xf32> to vector<8x8x1x8xf32>
    %76 = vector.shape_cast %71 : vector<8x8x8xf32> to vector<1x8x8x8xf32>
    %77 = vector.broadcast %75 : vector<8x8x1x8xf32> to vector<8x8x8x8xf32>
    %78 = vector.broadcast %76 : vector<1x8x8x8xf32> to vector<8x8x8x8xf32>
    %79 = arith.mulf %77, %78 : vector<8x8x8x8xf32>
    %cst_14 = arith.constant dense<0.000000e+00> : vector<8x8x8xf32>
    %80 = vector.multi_reduction <add>, %79, %cst_14 [3] : vector<8x8x8x8xf32> to vector<8x8x8xf32>
    %81 = arith.addf %74, %80 : vector<8x8x8xf32>
    %cst_15 = arith.constant 0.353553385 : f32
    %82 = vector.broadcast %cst_15 : f32 to vector<8x8x8xf32>
    %83 = arith.mulf %81, %82 : vector<8x8x8xf32>
    %84 = tpu.iota {dimensions = array<i32: 1>} : vector<4x2x8x8xi32>
    %85 = tpu.iota {dimensions = array<i32: 3>} : vector<4x2x8x8xi32>
    %c0_i32_16 = arith.constant 0 : i32
    %86 = vector.broadcast %c0_i32_16 : i32 to vector<4x2x8x8xi32>
    %c0_i32_17 = arith.constant 0 : i32
    %87 = vector.broadcast %c0_i32_17 : i32 to vector<4x2x8x8xi32>
    %88 = arith.cmpi eq, %84, %87 : vector<4x2x8x8xi32>
    %c0_18 = arith.constant 0 : index
    %89 = memref.load %arg1[%c0_18] : memref<2xi32, #tpu.memory_space<smem>>
    %90 = vector.broadcast %89 : i32 to vector<4x2x8x8xi32>
    %91 = arith.select %88, %90, %86 : vector<4x2x8x8xi1>, vector<4x2x8x8xi32>
    %c1_i32 = arith.constant 1 : i32
    %92 = vector.broadcast %c1_i32 : i32 to vector<4x2x8x8xi32>
    %93 = arith.cmpi eq, %84, %92 : vector<4x2x8x8xi32>
    %c1 = arith.constant 1 : index
    %94 = memref.load %arg1[%c1] : memref<2xi32, #tpu.memory_space<smem>>
    %95 = vector.broadcast %94 : i32 to vector<4x2x8x8xi32>
    %96 = arith.select %93, %95, %91 : vector<4x2x8x8xi1>, vector<4x2x8x8xi32>
    %97 = vector.shape_cast %85 : vector<4x2x8x8xi32> to vector<8x8x8xi32>
    %98 = vector.shape_cast %96 : vector<4x2x8x8xi32> to vector<8x8x8xi32>
    %99 = arith.cmpi slt, %97, %98 : vector<8x8x8xi32>
    %cst_19 = arith.constant -1.000000e+06 : f32
    %100 = vector.broadcast %cst_19 : f32 to vector<8x8x8xf32>
    %101 = arith.select %99, %83, %100 : vector<8x8x8xi1>, vector<8x8x8xf32>
    %cst_20 = arith.constant dense<0xFF800000> : vector<8x8xf32>
    %102 = vector.multi_reduction <maximumf>, %101, %cst_20 [2] : vector<8x8x8xf32> to vector<8x8xf32>
    %103 = vector.shape_cast %102 : vector<8x8xf32> to vector<8x8x1xf32>
    %104 = vector.broadcast %103 : vector<8x8x1xf32> to vector<8x8x8xf32>
    %105 = arith.subf %101, %104 : vector<8x8x8xf32>
    %106 = math.exp %105 : vector<8x8x8xf32>
    %cst_21 = arith.constant dense<0.000000e+00> : vector<8x8xf32>
    %107 = vector.multi_reduction <add>, %106, %cst_21 [2] : vector<8x8x8xf32> to vector<8x8xf32>
    %108 = vector.shape_cast %107 : vector<8x8xf32> to vector<8x8x1xf32>
    %109 = tpu.reciprocal %108 {approx = true} : vector<8x8x1xf32> -> vector<8x8x1xf32>
    %110 = vector.broadcast %109 : vector<8x8x1xf32> to vector<8x8x8xf32>
    %111 = arith.mulf %106, %110 : vector<8x8x8xf32>
    "tpu.trace_start"() <{level = 10 : i32, message = "gts,gsd->gtd"}> : () -> ()
    %cst_22 = arith.constant dense<0.000000e+00> : vector<8x8x8xf32>
    %112 = tpu.matmul %111, %69, %cst_22 {dimension_numbers = #tpu.dot_dimension_numbers<[2], [1], [1], [2], [0, 0, 0, 1, 1, 2], [0], [0]>} : vector<8x8x8xf32>, vector<8x8x8xf32>, vector<8x8x8xf32> -> vector<8x8x8xf32>
    "tpu.trace_stop"() : () -> ()
    %113 = vector.shape_cast %111 : vector<8x8x8xf32> to vector<8x8x8x1xf32>
    %114 = vector.shape_cast %73 : vector<8x8x8xf32> to vector<1x8x8x8xf32>
    %115 = vector.broadcast %113 : vector<8x8x8x1xf32> to vector<8x8x8x8xf32>
    %116 = vector.broadcast %114 : vector<1x8x8x8xf32> to vector<8x8x8x8xf32>
    %117 = arith.mulf %115, %116 : vector<8x8x8x8xf32>
    %cst_23 = arith.constant dense<0.000000e+00> : vector<8x8x8xf32>
    %118 = vector.multi_reduction <add>, %117, %cst_23 [2] : vector<8x8x8x8xf32> to vector<8x8x8xf32>
    %119 = arith.addf %112, %118 : vector<8x8x8xf32>
    %120 = vector.extract_strided_slice %119 {offsets = [0, 0, 0], sizes = [1, 8, 8], strides = [1, 1, 1]} : vector<8x8x8xf32> to vector<1x8x8xf32>
    %121 = vector.shape_cast %120 : vector<1x8x8xf32> to vector<8x8xf32>
    %122 = vector.extract_strided_slice %119 {offsets = [2, 0, 0], sizes = [1, 8, 8], strides = [1, 1, 1]} : vector<8x8x8xf32> to vector<1x8x8xf32>
    %123 = vector.shape_cast %122 : vector<1x8x8xf32> to vector<8x8xf32>
    %124 = vector.extract_strided_slice %119 {offsets = [4, 0, 0], sizes = [1, 8, 8], strides = [1, 1, 1]} : vector<8x8x8xf32> to vector<1x8x8xf32>
    %125 = vector.shape_cast %124 : vector<1x8x8xf32> to vector<8x8xf32>
    %126 = vector.extract_strided_slice %119 {offsets = [6, 0, 0], sizes = [1, 8, 8], strides = [1, 1, 1]} : vector<8x8x8xf32> to vector<1x8x8xf32>
    %127 = vector.shape_cast %126 : vector<1x8x8xf32> to vector<8x8xf32>
    %128 = tpu.concatenate %121, %123, %125, %127 in 1 : vector<8x8xf32>, vector<8x8xf32>, vector<8x8xf32>, vector<8x8xf32> -> vector<8x32xf32>
    %129 = vector.extract_strided_slice %119 {offsets = [1, 0, 0], sizes = [1, 8, 8], strides = [1, 1, 1]} : vector<8x8x8xf32> to vector<1x8x8xf32>
    %130 = vector.shape_cast %129 : vector<1x8x8xf32> to vector<8x8xf32>
    %131 = vector.extract_strided_slice %119 {offsets = [3, 0, 0], sizes = [1, 8, 8], strides = [1, 1, 1]} : vector<8x8x8xf32> to vector<1x8x8xf32>
    %132 = vector.shape_cast %131 : vector<1x8x8xf32> to vector<8x8xf32>
    %133 = vector.extract_strided_slice %119 {offsets = [5, 0, 0], sizes = [1, 8, 8], strides = [1, 1, 1]} : vector<8x8x8xf32> to vector<1x8x8xf32>
    %134 = vector.shape_cast %133 : vector<1x8x8xf32> to vector<8x8xf32>
    %135 = vector.extract_strided_slice %119 {offsets = [7, 0, 0], sizes = [1, 8, 8], strides = [1, 1, 1]} : vector<8x8x8xf32> to vector<1x8x8xf32>
    %136 = vector.shape_cast %135 : vector<1x8x8xf32> to vector<8x8xf32>
    %137 = tpu.concatenate %130, %132, %134, %136 in 1 : vector<8x8xf32>, vector<8x8xf32>, vector<8x8xf32>, vector<8x8xf32> -> vector<8x32xf32>
    %138 = tpu.concatenate %128, %137 in 0 : vector<8x32xf32>, vector<8x32xf32> -> vector<16x32xf32>
    %c0_24 = arith.constant 0 : index
    %c0_25 = arith.constant 0 : index
    %c0_26 = arith.constant 0 : index
    %139 = vector.load %arg4[%c0_24, %c0_25, %c0_26] : memref<1x32x32xf32, #tpu.memory_space<vmem>>, vector<1x32x32xf32>
    %140 = vector.shape_cast %139 : vector<1x32x32xf32> to vector<32x32xf32>
    %cst_27 = arith.constant dense<0.000000e+00> : vector<16x32xf32>
    %141 = tpu.matmul %138, %140, %cst_27 {dimension_numbers = #tpu.dot_dimension_numbers<[1], [0], [0], [1], [0, 0, 1, 1], [], []>} : vector<16x32xf32>, vector<32x32xf32>, vector<16x32xf32> -> vector<16x32xf32>
    %142 = arith.addf %3, %141 : vector<16x32xf32>
    %c0_28 = arith.constant 0 : index
    %c0_29 = arith.constant 0 : index
    %c0_30 = arith.constant 0 : index
    %143 = vector.load %arg11[%c0_28, %c0_29, %c0_30] : memref<1x1x32xf32, #tpu.memory_space<vmem>>, vector<1x1x32xf32>
    %144 = vector.shape_cast %143 : vector<1x1x32xf32> to vector<1x32xf32>
    %c0_31 = arith.constant 0 : index
    %c0_32 = arith.constant 0 : index
    %c0_33 = arith.constant 0 : index
    %145 = vector.load %arg12[%c0_31, %c0_32, %c0_33] : memref<1x1x32xf32, #tpu.memory_space<vmem>>, vector<1x1x32xf32>
    %146 = vector.shape_cast %145 : vector<1x1x32xf32> to vector<1x32xf32>
    %cst_34 = arith.constant dense<0.000000e+00> : vector<16xf32>
    %147 = vector.multi_reduction <add>, %142, %cst_34 [1] : vector<16x32xf32> to vector<16xf32>
    %148 = vector.shape_cast %147 : vector<16xf32> to vector<16x1xf32>
    %cst_35 = arith.constant 3.200000e+01 : f32
    %149 = vector.broadcast %cst_35 : f32 to vector<16x1xf32>
    %150 = arith.divf %148, %149 : vector<16x1xf32>
    %151 = vector.broadcast %150 : vector<16x1xf32> to vector<16x32xf32>
    %152 = arith.subf %142, %151 : vector<16x32xf32>
    %153 = arith.mulf %152, %152 : vector<16x32xf32>
    %cst_36 = arith.constant dense<0.000000e+00> : vector<16xf32>
    %154 = vector.multi_reduction <add>, %153, %cst_36 [1] : vector<16x32xf32> to vector<16xf32>
    %155 = vector.shape_cast %154 : vector<16xf32> to vector<16x1xf32>
    %cst_37 = arith.constant 3.200000e+01 : f32
    %156 = vector.broadcast %cst_37 : f32 to vector<16x1xf32>
    %157 = arith.divf %155, %156 : vector<16x1xf32>
    %158 = vector.broadcast %150 : vector<16x1xf32> to vector<16x32xf32>
    %159 = arith.subf %142, %158 : vector<16x32xf32>
    %cst_38 = arith.constant 9.99999974E-6 : f32
    %160 = vector.broadcast %cst_38 : f32 to vector<16x1xf32>
    %161 = arith.addf %157, %160 : vector<16x1xf32>
    %162 = math.rsqrt %161 : vector<16x1xf32>
    %163 = vector.broadcast %162 : vector<16x1xf32> to vector<16x32xf32>
    %164 = arith.mulf %159, %163 : vector<16x32xf32>
    %165 = vector.broadcast %144 : vector<1x32xf32> to vector<16x32xf32>
    %166 = arith.mulf %164, %165 : vector<16x32xf32>
    %167 = vector.broadcast %146 : vector<1x32xf32> to vector<16x32xf32>
    %168 = arith.addf %166, %167 : vector<16x32xf32>
    %c0_39 = arith.constant 0 : index
    %c0_40 = arith.constant 0 : index
    %c0_41 = arith.constant 0 : index
    %169 = vector.load %arg7[%c0_39, %c0_40, %c0_41] : memref<1x32x64xf32, #tpu.memory_space<vmem>>, vector<1x32x64xf32>
    %170 = vector.shape_cast %169 : vector<1x32x64xf32> to vector<32x64xf32>
    %cst_42 = arith.constant dense<0.000000e+00> : vector<16x64xf32>
    %171 = tpu.matmul %168, %170, %cst_42 {dimension_numbers = #tpu.dot_dimension_numbers<[1], [0], [0], [1], [0, 0, 1, 1], [], []>} : vector<16x32xf32>, vector<32x64xf32>, vector<16x64xf32> -> vector<16x64xf32>
    %c0_43 = arith.constant 0 : index
    %c0_44 = arith.constant 0 : index
    %c0_45 = arith.constant 0 : index
    %172 = vector.load %arg8[%c0_43, %c0_44, %c0_45] : memref<1x1x64xf32, #tpu.memory_space<vmem>>, vector<1x1x64xf32>
    %173 = vector.shape_cast %172 : vector<1x1x64xf32> to vector<1x64xf32>
    %174 = vector.broadcast %173 : vector<1x64xf32> to vector<16x64xf32>
    %175 = arith.addf %171, %174 : vector<16x64xf32>
    %cst_46 = arith.constant 0.000000e+00 : f32
    %176 = vector.broadcast %cst_46 : f32 to vector<16x64xf32>
    %177 = arith.maximumf %175, %176 : vector<16x64xf32>
    %c0_47 = arith.constant 0 : index
    %c0_48 = arith.constant 0 : index
    %c0_49 = arith.constant 0 : index
    %178 = vector.load %arg9[%c0_47, %c0_48, %c0_49] : memref<1x64x32xf32, #tpu.memory_space<vmem>>, vector<1x64x32xf32>
    %179 = vector.shape_cast %178 : vector<1x64x32xf32> to vector<64x32xf32>
    %cst_50 = arith.constant dense<0.000000e+00> : vector<16x32xf32>
    %180 = tpu.matmul %177, %179, %cst_50 {dimension_numbers = #tpu.dot_dimension_numbers<[1], [0], [0], [1], [0, 0, 1, 1], [], []>} : vector<16x64xf32>, vector<64x32xf32>, vector<16x32xf32> -> vector<16x32xf32>
    %c0_51 = arith.constant 0 : index
    %c0_52 = arith.constant 0 : index
    %c0_53 = arith.constant 0 : index
    %181 = vector.load %arg10[%c0_51, %c0_52, %c0_53] : memref<1x1x32xf32, #tpu.memory_space<vmem>>, vector<1x1x32xf32>
    %182 = vector.shape_cast %181 : vector<1x1x32xf32> to vector<1x32xf32>
    %183 = vector.broadcast %182 : vector<1x32xf32> to vector<16x32xf32>
    %184 = arith.addf %180, %183 : vector<16x32xf32>
    %185 = arith.addf %168, %184 : vector<16x32xf32>
    %c0_54 = arith.constant 0 : index
    %c0_55 = arith.constant 0 : index
    %c0_56 = arith.constant 0 : index
    %186 = vector.load %arg13[%c0_54, %c0_55, %c0_56] : memref<1x1x32xf32, #tpu.memory_space<vmem>>, vector<1x1x32xf32>
    %187 = vector.shape_cast %186 : vector<1x1x32xf32> to vector<1x32xf32>
    %c0_57 = arith.constant 0 : index
    %c0_58 = arith.constant 0 : index
    %c0_59 = arith.constant 0 : index
    %188 = vector.load %arg14[%c0_57, %c0_58, %c0_59] : memref<1x1x32xf32, #tpu.memory_space<vmem>>, vector<1x1x32xf32>
    %189 = vector.shape_cast %188 : vector<1x1x32xf32> to vector<1x32xf32>
    %cst_60 = arith.constant dense<0.000000e+00> : vector<16xf32>
    %190 = vector.multi_reduction <add>, %185, %cst_60 [1] : vector<16x32xf32> to vector<16xf32>
    %191 = vector.shape_cast %190 : vector<16xf32> to vector<16x1xf32>
    %cst_61 = arith.constant 3.200000e+01 : f32
    %192 = vector.broadcast %cst_61 : f32 to vector<16x1xf32>
    %193 = arith.divf %191, %192 : vector<16x1xf32>
    %194 = vector.broadcast %193 : vector<16x1xf32> to vector<16x32xf32>
    %195 = arith.subf %185, %194 : vector<16x32xf32>
    %196 = arith.mulf %195, %195 : vector<16x32xf32>
    %cst_62 = arith.constant dense<0.000000e+00> : vector<16xf32>
    %197 = vector.multi_reduction <add>, %196, %cst_62 [1] : vector<16x32xf32> to vector<16xf32>
    %198 = vector.shape_cast %197 : vector<16xf32> to vector<16x1xf32>
    %cst_63 = arith.constant 3.200000e+01 : f32
    %199 = vector.broadcast %cst_63 : f32 to vector<16x1xf32>
    %200 = arith.divf %198, %199 : vector<16x1xf32>
    %201 = vector.broadcast %193 : vector<16x1xf32> to vector<16x32xf32>
    %202 = arith.subf %185, %201 : vector<16x32xf32>
    %cst_64 = arith.constant 9.99999974E-6 : f32
    %203 = vector.broadcast %cst_64 : f32 to vector<16x1xf32>
    %204 = arith.addf %200, %203 : vector<16x1xf32>
    %205 = math.rsqrt %204 : vector<16x1xf32>
    %206 = vector.broadcast %205 : vector<16x1xf32> to vector<16x32xf32>
    %207 = arith.mulf %202, %206 : vector<16x32xf32>
    %208 = vector.broadcast %187 : vector<1x32xf32> to vector<16x32xf32>
    %209 = arith.mulf %207, %208 : vector<16x32xf32>
    %210 = vector.broadcast %189 : vector<1x32xf32> to vector<16x32xf32>
    %211 = arith.addf %209, %210 : vector<16x32xf32>
    %c0_65 = arith.constant 0 : index
    %c0_66 = arith.constant 0 : index
    %212 = vector.load %arg16[%c0_65, %c0_66] : memref<16x32xf32, #tpu.memory_space<vmem>>, vector<16x32xf32>
    tpu.vector_store %arg16[%c0_65, %c0_66], %211 {strides = array<i32>} : memref<16x32xf32, #tpu.memory_space<vmem>>, vector<16x32xf32>,
    %c1_i32_67 = arith.constant 1 : i32
    %213 = arith.cmpi eq, %arg0, %c1_i32_67 : i32
    %214 = arith.extui %213 : i1 to i32
    %c0_i32_68 = arith.constant 0 : i32
    %215 = arith.cmpi ne, %214, %c0_i32_68 : i32
    scf.if %215 {
      %c0_69 = arith.constant 0 : index
      %c0_70 = arith.constant 0 : index
      %216 = vector.load %arg15[%c0_69, %c0_70] : memref<16x32xf32, #tpu.memory_space<vmem>>, vector<16x32xf32>
      tpu.vector_store %arg15[%c0_69, %c0_70], %211 {strides = array<i32>} : memref<16x32xf32, #tpu.memory_space<vmem>>, vector<16x32xf32>,
    } else {
    }
    return
  }
  func.func @transform_0(%arg0: i32, %arg1: memref<2xi32, #tpu.memory_space<smem>>) -> (i32, i32) {
    %c0_i32 = arith.constant 0 : i32
    %c0_i32_0 = arith.constant 0 : i32
    %c0_i32_1 = arith.constant 0 : i32
    return %c0_i32, %c0_i32_0 : i32, i32
  }
  func.func @transform_1(%arg0: i32, %arg1: memref<2xi32, #tpu.memory_space<smem>>) -> (i32, i32, i32) {
    %c0_i32 = arith.constant 0 : i32
    %c0_i32_0 = arith.constant 0 : i32
    %c0_i32_1 = arith.constant 0 : i32
    return %arg0, %c0_i32, %c0_i32_0 : i32, i32, i32
  }
  func.func @transform_2(%arg0: i32, %arg1: memref<2xi32, #tpu.memory_space<smem>>) -> (i32, i32, i32) {
    %c0_i32 = arith.constant 0 : i32
    %c0_i32_0 = arith.constant 0 : i32
    %c0_i32_1 = arith.constant 0 : i32
    return %arg0, %c0_i32, %c0_i32_0 : i32, i32, i32
  }
  func.func @transform_3(%arg0: i32, %arg1: memref<2xi32, #tpu.memory_space<smem>>) -> (i32, i32, i32, i32) {
    %c0_i32 = arith.constant 0 : i32
    %c0_i32_0 = arith.constant 0 : i32
    %c0_i32_1 = arith.constant 0 : i32
    %c0_i32_2 = arith.constant 0 : i32
    return %arg0, %c0_i32, %c0_i32_0, %c0_i32_1 : i32, i32, i32, i32
  }
  func.func @transform_4(%arg0: i32, %arg1: memref<2xi32, #tpu.memory_space<smem>>) -> (i32, i32, i32, i32) {
    %c0_i32 = arith.constant 0 : i32
    %c0_i32_0 = arith.constant 0 : i32
    %c0_i32_1 = arith.constant 0 : i32
    %c0_i32_2 = arith.constant 0 : i32
    return %arg0, %c0_i32, %c0_i32_0, %c0_i32_1 : i32, i32, i32, i32
  }
  func.func @transform_5(%arg0: i32, %arg1: memref<2xi32, #tpu.memory_space<smem>>) -> (i32, i32, i32) {
    %c0_i32 = arith.constant 0 : i32
    %c0_i32_0 = arith.constant 0 : i32
    %c0_i32_1 = arith.constant 0 : i32
    return %arg0, %c0_i32, %c0_i32_0 : i32, i32, i32
  }
  func.func @transform_6(%arg0: i32, %arg1: memref<2xi32, #tpu.memory_space<smem>>) -> (i32, i32, i32) {
    %c0_i32 = arith.constant 0 : i32
    %c0_i32_0 = arith.constant 0 : i32
    %c0_i32_1 = arith.constant 0 : i32
    return %arg0, %c0_i32, %c0_i32_0 : i32, i32, i32
  }
  func.func @transform_7(%arg0: i32, %arg1: memref<2xi32, #tpu.memory_space<smem>>) -> (i32, i32, i32) {
    %c0_i32 = arith.constant 0 : i32
    %c0_i32_0 = arith.constant 0 : i32
    %c0_i32_1 = arith.constant 0 : i32
    return %arg0, %c0_i32, %c0_i32_0 : i32, i32, i32
  }
  func.func @transform_8(%arg0: i32, %arg1: memref<2xi32, #tpu.memory_space<smem>>) -> (i32, i32, i32) {
    %c0_i32 = arith.constant 0 : i32
    %c0_i32_0 = arith.constant 0 : i32
    %c0_i32_1 = arith.constant 0 : i32
    return %arg0, %c0_i32, %c0_i32_0 : i32, i32, i32
  }
  func.func @transform_9(%arg0: i32, %arg1: memref<2xi32, #tpu.memory_space<smem>>) -> (i32, i32, i32) {
    %c0_i32 = arith.constant 0 : i32
    %c0_i32_0 = arith.constant 0 : i32
    %c0_i32_1 = arith.constant 0 : i32
    return %arg0, %c0_i32, %c0_i32_0 : i32, i32, i32
  }
  func.func @transform_10(%arg0: i32, %arg1: memref<2xi32, #tpu.memory_space<smem>>) -> (i32, i32, i32) {
    %c0_i32 = arith.constant 0 : i32
    %c0_i32_0 = arith.constant 0 : i32
    %c0_i32_1 = arith.constant 0 : i32
    return %arg0, %c0_i32, %c0_i32_0 : i32, i32, i32
  }
  func.func @transform_11(%arg0: i32, %arg1: memref<2xi32, #tpu.memory_space<smem>>) -> (i32, i32, i32) {
    %c0_i32 = arith.constant 0 : i32
    %c0_i32_0 = arith.constant 0 : i32
    %c0_i32_1 = arith.constant 0 : i32
    return %arg0, %c0_i32, %c0_i32_0 : i32, i32, i32
  }
  func.func @transform_12(%arg0: i32, %arg1: memref<2xi32, #tpu.memory_space<smem>>) -> (i32, i32, i32) {
    %c0_i32 = arith.constant 0 : i32
    %c0_i32_0 = arith.constant 0 : i32
    %c0_i32_1 = arith.constant 0 : i32
    return %arg0, %c0_i32, %c0_i32_0 : i32, i32, i32
  }
  func.func @transform_13(%arg0: i32, %arg1: memref<2xi32, #tpu.memory_space<smem>>) -> (i32, i32) {
    %c0_i32 = arith.constant 0 : i32
    %c0_i32_0 = arith.constant 0 : i32
    %c0_i32_1 = arith.constant 0 : i32
    return %c0_i32, %c0_i32_0 : i32, i32
  }
}

</mosaic_0001>

<llo_original>
// kernel: tpu_custom_call.1
$region0: #{tpu_custom_call.1}
  #allocation0 [shape = 'u32[]', space=smem, size = 0x4, offset = 0x4, fixed_abs, tag = 'smem constant byte address 0x4 - core index']
  #allocation1 [shape = 'u32[144,128]{1,0:T(1,128)}', space=vmem, size = 0x12000, scoped, tag = 'internal scratch']
  #allocation2 [shape = 'f32[16,32]{1,0:T(8,128)}', space=vmem, size = 0x2000, scoped, tag = 'scratch operand']
  #allocation3 [shape = 's32[1]{0}', space=sflag, size = 0x4, scoped, tag = 'scoped memory for tpu_custom_call.1']
  #allocation4 [shape = 'u8[512]{0}', space=smem, size = 0x200, scoped, tag = 'prefetched SMEM operand 0']
  %s0 = inlined_call_operand.vmem [shape: s32[2], index: 0, kind: input, shape index: {}]
  %s1 = inlined_call_operand.hbm [shape: f32[16,32], index: 1, kind: input, shape index: {}]
  %s2 = inlined_call_operand.vmem [shape: f32[2,32,96], index: 2, kind: input, shape index: {}]
  %s3 = inlined_call_operand.hbm [shape: f32[2,32,32], index: 3, kind: input, shape index: {}]
  %s4 = inlined_call_operand.vmem [shape: f32[2,8,8,8], index: 4, kind: input, shape index: {}]
  %s5 = inlined_call_operand.hbm [shape: f32[2,8,8,8], index: 5, kind: input, shape index: {}]
  %s6 = inlined_call_operand.hbm [shape: f32[2,32,64], index: 6, kind: input, shape index: {}]
  %s7 = inlined_call_operand.vmem [shape: f32[2,1,64], index: 7, kind: input, shape index: {}]
  %s8 = inlined_call_operand.vmem [shape: f32[2,64,32], index: 8, kind: input, shape index: {}]
  %s9 = inlined_call_operand.vmem [shape: f32[2,1,32], index: 9, kind: input, shape index: {}]
  %s10 = inlined_call_operand.vmem [shape: f32[2,1,32], index: 10, kind: input, shape index: {}]
  %s11 = inlined_call_operand.vmem [shape: f32[2,1,32], index: 11, kind: input, shape index: {}]
  %s12 = inlined_call_operand.vmem [shape: f32[2,1,32], index: 12, kind: input, shape index: {}]
  %s13 = inlined_call_operand.vmem [shape: f32[2,1,32], index: 13, kind: input, shape index: {}]
  %s14 = inlined_call_operand.hbm [shape: f32[16,32], index: 14, kind: output, shape index: {}]
  %s15 = sld [smem:[#allocation0]]
  $region109: #{tpu_custom_call.1} parent=0
    _
  %s17 = ssub.s32 1, %s15
  %s18 = scalar_select 0, %s17, %s15
  %s19 = sshll.u32 %s0, 4
  %s20 = int_to_ptr.vmem [resolvable:$true] %s19
  %22 = dma.vmem_to_smem %s20, 16, [#allocation4], [#allocation3]
  %23 = dma.done [#allocation3], 16
  %24 = sfence
  $region1: #{tpu_custom_call.1} parent=0
    #allocation5 [shape = 'u8[8192]{0}', space=vmem, size = 0x2000, scoped, tag = 'input window, operand 1, single buffered']
    #allocation6 [shape = 's32[2]{0}', space=sflag, size = 0x8, scoped, tag = 'scoped memory for tpu_custom_call.1']
    #allocation7 [shape = 's32[2]{0}', space=sflag, size = 0x8, scoped, tag = 'scoped memory for tpu_custom_call.1']
    #allocation8 [shape = 'u8[32768]{0}', space=vmem, size = 0x8000, scoped, tag = 'input window, operand 3']
    #allocation9 [shape = 's32[2]{0}', space=sflag, size = 0x8, scoped, tag = 'scoped memory for tpu_custom_call.1']
    #allocation10 [shape = 'u8[65536]{0}', space=vmem, size = 0x10000, scoped, tag = 'input window, operand 5']
    #allocation11 [shape = 'u8[32768]{0}', space=vmem, size = 0x8000, scoped, tag = 'input window, operand 6']
    #allocation12 [shape = 's32[2]{0}', space=sflag, size = 0x8, scoped, tag = 'scoped memory for tpu_custom_call.1']
    #allocation13 [shape = 'u8[8192]{0}', space=vmem, size = 0x2000, scoped, tag = 'output window, operand 0, single buffered']
    %25 = vsyncpa [#allocation6], 0
    %26 = vsyncpa [#allocation9], 0
    %s27 = scalar_lea.sflag [#allocation9], 1
    %28 = vsyncpa %s27, 0
    %29 = vsyncpa [#allocation12], 0
    %s30 = scalar_lea.sflag [#allocation12], 1
    %31 = vsyncpa %s30, 0
    %32 = vsyncpa [#allocation7], 0
    loop: start=0, step=1, limit=4
    $region2: #{tpu_custom_call.1} parent=1 // loop_pre_header
      _
    $region3: #{tpu_custom_call.1} parent=1 // loop_header
      %s34 = sphi 0, %s38
      %p35 = scmp.ge.s32.totalorder %s34, 4
      %s42 = sphi 0, %s42
      %s44 = sphi 0, %s42
      %s45 = sphi 0, %s44
      %s59 = sphi 0, %s45
      %s65 = sphi 0, %s67
      %s68 = sphi 0, %s65
      %s69 = sphi 0, %s68
      %s85 = sphi 0, %s69
      %s91 = sphi 0, %s93
      %s94 = sphi 0, %s91
      %s95 = sphi 0, %s94
      %s111 = sphi 0, %s95
      %s117 = sphi 0, %s119
      %s120 = sphi 0, %s117
      %s121 = sphi 0, %s120
      %s137 = sphi 0, %s121
      %s143 = sphi 0, %s145
      %s146 = sphi 0, %s143
      %s147 = sphi 0, %s146
      %s163 = sphi 0, %s147
      %s169 = sphi 0, %s171
      %s172 = sphi 0, %s169
      %s173 = sphi 0, %s172
      %s189 = sphi 0, %s173
      %s195 = sphi 0, %s197
      %s198 = sphi 0, %s195
      %s199 = sphi 0, %s198
      %s215 = sphi 0, %s199
      %s221 = sphi 0, %s223
      %s224 = sphi 0, %s221
      %s225 = sphi 0, %s224
      %s241 = sphi 0, %s225
      %s247 = sphi 0, %s249
      %s250 = sphi 0, %s247
      %s251 = sphi 0, %s250
      %s267 = sphi 0, %s251
      %s273 = sphi 0, %s275
      %s276 = sphi 0, %s273
      %s277 = sphi 0, %s276
      %s293 = sphi 0, %s277
      %s299 = sphi 0, %s301
      %s302 = sphi 0, %s299
      %s303 = sphi 0, %s302
      %s319 = sphi 0, %s303
      %s325 = sphi 0, %s327
      %s328 = sphi 0, %s325
      %s329 = sphi 0, %s328
      %s345 = sphi 0, %s329
      %s351 = sphi 0, %s353
      %s354 = sphi 0, %s351
      %s355 = sphi 0, %s354
      %s371 = sphi 0, %s355
      %s375 = sphi 0, %s375
      %s377 = sphi 0, %s375
      %s378 = sphi 0, %s377
      %s392 = sphi 0, %s378
    $region4: #{tpu_custom_call.1} parent=1 // loop_header_branch
      %37 = sbr.rel (%p35) target = $region8
    $region5: #{tpu_custom_call.1} parent=1 // loop_body
      %s39 = ssub.s32 %s34, 1
      %s40 = ssub.s32 %s34, 2
      %s41 = sadd.s32 %s34, 1
      %s43 = sadd.s32 %s42, 1
      %p46 = scmp.eq.s32.totalorder %s34, 1
      %p47 = scmp.ne.s32.totalorder %s42, %s44
      %p48 = scmp.eq.s32.totalorder %s34, 0
      %p49 = por %p47, %p48
      %p50 = scmp.ne.s32.totalorder %s42, %s44
      %p51 = scmp.eq.s32.totalorder %s39, 1
      %p52 = por %p50, %p51
      %p53 = scmp.ne.s32.totalorder %s44, %s45
      %p54 = scmp.eq.s32.totalorder %s39, 0
      %p55 = por %p53, %p54
      %p56 = scmp.ne.s32.totalorder %s44, %s45
      %p57 = scmp.eq.s32.totalorder %s40, 1
      %p58 = por %p56, %p57
      %p60 = scmp.ne.s32.totalorder %s45, %s59
      %p61 = scmp.eq.s32.totalorder %s40, 0
      %p62 = por %p60, %p61
      %s63 = ssub.s32 %s34, %s41
      %p64 = scmp.eq.s32.totalorder %s63, 0
      %s66 = sadd.s32 %s65, 1
      %s67 = scalar_select %p64, %s65, %s66
      %p70 = pneg %p64
      %p71 = scmp.eq.s32.totalorder %s34, 1
      %p72 = por %p70, %p71
      %p73 = scmp.ne.s32.totalorder %s65, %s68
      %p74 = scmp.eq.s32.totalorder %s34, 0
      %p75 = por %p73, %p74
      %p76 = scmp.ne.s32.totalorder %s65, %s68
      %p77 = scmp.eq.s32.totalorder %s39, 1
      %p78 = por %p76, %p77
      %p79 = scmp.ne.s32.totalorder %s68, %s69
      %p80 = scmp.eq.s32.totalorder %s39, 0
      %p81 = por %p79, %p80
      %p82 = scmp.ne.s32.totalorder %s68, %s69
      %p83 = scmp.eq.s32.totalorder %s40, 1
      %p84 = por %p82, %p83
      %p86 = scmp.ne.s32.totalorder %s69, %s85
      %p87 = scmp.eq.s32.totalorder %s40, 0
      %p88 = por %p86, %p87
      %s89 = ssub.s32 %s34, %s41
      %p90 = scmp.eq.s32.totalorder %s89, 0
      %s92 = sadd.s32 %s91, 1
      %s93 = scalar_select %p90, %s91, %s92
      %p96 = pneg %p90
      %p97 = scmp.eq.s32.totalorder %s34, 1
      %p98 = por %p96, %p97
      %p99 = scmp.ne.s32.totalorder %s91, %s94
      %p100 = scmp.eq.s32.totalorder %s34, 0
      %p101 = por %p99, %p100
      %p102 = scmp.ne.s32.totalorder %s91, %s94
      %p103 = scmp.eq.s32.totalorder %s39, 1
      %p104 = por %p102, %p103
      %p105 = scmp.ne.s32.totalorder %s94, %s95
      %p106 = scmp.eq.s32.totalorder %s39, 0
      %p107 = por %p105, %p106
      %p108 = scmp.ne.s32.totalorder %s94, %s95
      %p109 = scmp.eq.s32.totalorder %s40, 1
      %p110 = por %p108, %p109
      %p112 = scmp.ne.s32.totalorder %s95, %s111
      %p113 = scmp.eq.s32.totalorder %s40, 0
      %p114 = por %p112, %p113
      %s115 = ssub.s32 %s34, %s41
      %p116 = scmp.eq.s32.totalorder %s115, 0
      %s118 = sadd.s32 %s117, 1
      %s119 = scalar_select %p116, %s117, %s118
      %p122 = pneg %p116
      %p123 = scmp.eq.s32.totalorder %s34, 1
      %p124 = por %p122, %p123
      %p125 = scmp.ne.s32.totalorder %s117, %s120
      %p126 = scmp.eq.s32.totalorder %s34, 0
      %p127 = por %p125, %p126
      %p128 = scmp.ne.s32.totalorder %s117, %s120
      %p129 = scmp.eq.s32.totalorder %s39, 1
      %p130 = por %p128, %p129
      %p131 = scmp.ne.s32.totalorder %s120, %s121
      %p132 = scmp.eq.s32.totalorder %s39, 0
      %p133 = por %p131, %p132
      %p134 = scmp.ne.s32.totalorder %s120, %s121
      %p135 = scmp.eq.s32.totalorder %s40, 1
      %p136 = por %p134, %p135
      %p138 = scmp.ne.s32.totalorder %s121, %s137
      %p139 = scmp.eq.s32.totalorder %s40, 0
      %p140 = por %p138, %p139
      %s141 = ssub.s32 %s34, %s41
      %p142 = scmp.eq.s32.totalorder %s141, 0
      %s144 = sadd.s32 %s143, 1
      %s145 = scalar_select %p142, %s143, %s144
      %p148 = pneg %p142
      %p149 = scmp.eq.s32.totalorder %s34, 1
      %p150 = por %p148, %p149
      %p151 = scmp.ne.s32.totalorder %s143, %s146
      %p152 = scmp.eq.s32.totalorder %s34, 0
      %p153 = por %p151, %p152
      %p154 = scmp.ne.s32.totalorder %s143, %s146
      %p155 = scmp.eq.s32.totalorder %s39, 1
      %p156 = por %p154, %p155
      %p157 = scmp.ne.s32.totalorder %s146, %s147
      %p158 = scmp.eq.s32.totalorder %s39, 0
      %p159 = por %p157, %p158
      %p160 = scmp.ne.s32.totalorder %s146, %s147
      %p161 = scmp.eq.s32.totalorder %s40, 1
      %p162 = por %p160, %p161
      %p164 = scmp.ne.s32.totalorder %s147, %s163
      %p165 = scmp.eq.s32.totalorder %s40, 0
      %p166 = por %p164, %p165
      %s167 = ssub.s32 %s34, %s41
      %p168 = scmp.eq.s32.totalorder %s167, 0
      %s170 = sadd.s32 %s169, 1
      %s171 = scalar_select %p168, %s169, %s170
      %p174 = pneg %p168
      %p175 = scmp.eq.s32.totalorder %s34, 1
      %p176 = por %p174, %p175
      %p177 = scmp.ne.s32.totalorder %s169, %s172
      %p178 = scmp.eq.s32.totalorder %s34, 0
      %p179 = por %p177, %p178
      %p180 = scmp.ne.s32.totalorder %s169, %s172
      %p181 = scmp.eq.s32.totalorder %s39, 1
      %p182 = por %p180, %p181
      %p183 = scmp.ne.s32.totalorder %s172, %s173
      %p184 = scmp.eq.s32.totalorder %s39, 0
      %p185 = por %p183, %p184
      %p186 = scmp.ne.s32.totalorder %s172, %s173
      %p187 = scmp.eq.s32.totalorder %s40, 1
      %p188 = por %p186, %p187
      %p190 = scmp.ne.s32.totalorder %s173, %s189
      %p191 = scmp.eq.s32.totalorder %s40, 0
      %p192 = por %p190, %p191
      %s193 = ssub.s32 %s34, %s41
      %p194 = scmp.eq.s32.totalorder %s193, 0
      %s196 = sadd.s32 %s195, 1
      %s197 = scalar_select %p194, %s195, %s196
      %p200 = pneg %p194
      %p201 = scmp.eq.s32.totalorder %s34, 1
      %p202 = por %p200, %p201
      %p203 = scmp.ne.s32.totalorder %s195, %s198
      %p204 = scmp.eq.s32.totalorder %s34, 0
      %p205 = por %p203, %p204
      %p206 = scmp.ne.s32.totalorder %s195, %s198
      %p207 = scmp.eq.s32.totalorder %s39, 1
      %p208 = por %p206, %p207
      %p209 = scmp.ne.s32.totalorder %s198, %s199
      %p210 = scmp.eq.s32.totalorder %s39, 0
      %p211 = por %p209, %p210
      %p212 = scmp.ne.s32.totalorder %s198, %s199
      %p213 = scmp.eq.s32.totalorder %s40, 1
      %p214 = por %p212, %p213
      %p216 = scmp.ne.s32.totalorder %s199, %s215
      %p217 = scmp.eq.s32.totalorder %s40, 0
      %p218 = por %p216, %p217
      %s219 = ssub.s32 %s34, %s41
      %p220 = scmp.eq.s32.totalorder %s219, 0
      %s222 = sadd.s32 %s221, 1
      %s223 = scalar_select %p220, %s221, %s222
      %p226 = pneg %p220
      %p227 = scmp.eq.s32.totalorder %s34, 1
      %p228 = por %p226, %p227
      %p229 = scmp.ne.s32.totalorder %s221, %s224
      %p230 = scmp.eq.s32.totalorder %s34, 0
      %p231 = por %p229, %p230
      %p232 = scmp.ne.s32.totalorder %s221, %s224
      %p233 = scmp.eq.s32.totalorder %s39, 1
      %p234 = por %p232, %p233
      %p235 = scmp.ne.s32.totalorder %s224, %s225
      %p236 = scmp.eq.s32.totalorder %s39, 0
      %p237 = por %p235, %p236
      %p238 = scmp.ne.s32.totalorder %s224, %s225
      %p239 = scmp.eq.s32.totalorder %s40, 1
      %p240 = por %p238, %p239
      %p242 = scmp.ne.s32.totalorder %s225, %s241
      %p243 = scmp.eq.s32.totalorder %s40, 0
      %p244 = por %p242, %p243
      %s245 = ssub.s32 %s34, %s41
      %p246 = scmp.eq.s32.totalorder %s245, 0
      %s248 = sadd.s32 %s247, 1
      %s249 = scalar_select %p246, %s247, %s248
      %p252 = pneg %p246
      %p253 = scmp.eq.s32.totalorder %s34, 1
      %p254 = por %p252, %p253
      %p255 = scmp.ne.s32.totalorder %s247, %s250
      %p256 = scmp.eq.s32.totalorder %s34, 0
      %p257 = por %p255, %p256
      %p258 = scmp.ne.s32.totalorder %s247, %s250
      %p259 = scmp.eq.s32.totalorder %s39, 1
      %p260 = por %p258, %p259
      %p261 = scmp.ne.s32.totalorder %s250, %s251
      %p262 = scmp.eq.s32.totalorder %s39, 0
      %p263 = por %p261, %p262
      %p264 = scmp.ne.s32.totalorder %s250, %s251
      %p265 = scmp.eq.s32.totalorder %s40, 1
      %p266 = por %p264, %p265
      %p268 = scmp.ne.s32.totalorder %s251, %s267
      %p269 = scmp.eq.s32.totalorder %s40, 0
      %p270 = por %p268, %p269
      %s271 = ssub.s32 %s34, %s41
      %p272 = scmp.eq.s32.totalorder %s271, 0
      %s274 = sadd.s32 %s273, 1
      %s275 = scalar_select %p272, %s273, %s274
      %p278 = pneg %p272
      %p279 = scmp.eq.s32.totalorder %s34, 1
      %p280 = por %p278, %p279
      %p281 = scmp.ne.s32.totalorder %s273, %s276
      %p282 = scmp.eq.s32.totalorder %s34, 0
      %p283 = por %p281, %p282
      %p284 = scmp.ne.s32.totalorder %s273, %s276
      %p285 = scmp.eq.s32.totalorder %s39, 1
      %p286 = por %p284, %p285
      %p287 = scmp.ne.s32.totalorder %s276, %s277
      %p288 = scmp.eq.s32.totalorder %s39, 0
      %p289 = por %p287, %p288
      %p290 = scmp.ne.s32.totalorder %s276, %s277
      %p291 = scmp.eq.s32.totalorder %s40, 1
      %p292 = por %p290, %p291
      %p294 = scmp.ne.s32.totalorder %s277, %s293
      %p295 = scmp.eq.s32.totalorder %s40, 0
      %p296 = por %p294, %p295
      %s297 = ssub.s32 %s34, %s41
      %p298 = scmp.eq.s32.totalorder %s297, 0
      %s300 = sadd.s32 %s299, 1
      %s301 = scalar_select %p298, %s299, %s300
      %p304 = pneg %p298
      %p305 = scmp.eq.s32.totalorder %s34, 1
      %p306 = por %p304, %p305
      %p307 = scmp.ne.s32.totalorder %s299, %s302
      %p308 = scmp.eq.s32.totalorder %s34, 0
      %p309 = por %p307, %p308
      %p310 = scmp.ne.s32.totalorder %s299, %s302
      %p311 = scmp.eq.s32.totalorder %s39, 1
      %p312 = por %p310, %p311
      %p313 = scmp.ne.s32.totalorder %s302, %s303
      %p314 = scmp.eq.s32.totalorder %s39, 0
      %p315 = por %p313, %p314
      %p316 = scmp.ne.s32.totalorder %s302, %s303
      %p317 = scmp.eq.s32.totalorder %s40, 1
      %p318 = por %p316, %p317
      %p320 = scmp.ne.s32.totalorder %s303, %s319
      %p321 = scmp.eq.s32.totalorder %s40, 0
      %p322 = por %p320, %p321
      %s323 = ssub.s32 %s34, %s41
      %p324 = scmp.eq.s32.totalorder %s323, 0
      %s326 = sadd.s32 %s325, 1
      %s327 = scalar_select %p324, %s325, %s326
      %p330 = pneg %p324
      %p331 = scmp.eq.s32.totalorder %s34, 1
      %p332 = por %p330, %p331
      %p333 = scmp.ne.s32.totalorder %s325, %s328
      %p334 = scmp.eq.s32.totalorder %s34, 0
      %p335 = por %p333, %p334
      %p336 = scmp.ne.s32.totalorder %s325, %s328
      %p337 = scmp.eq.s32.totalorder %s39, 1
      %p338 = por %p336, %p337
      %p339 = scmp.ne.s32.totalorder %s328, %s329
      %p340 = scmp.eq.s32.totalorder %s39, 0
      %p341 = por %p339, %p340
      %p342 = scmp.ne.s32.totalorder %s328, %s329
      %p343 = scmp.eq.s32.totalorder %s40, 1
      %p344 = por %p342, %p343
      %p346 = scmp.ne.s32.totalorder %s329, %s345
      %p347 = scmp.eq.s32.totalorder %s40, 0
      %p348 = por %p346, %p347
      %s349 = ssub.s32 %s34, %s41
      %p350 = scmp.eq.s32.totalorder %s349, 0
      %s352 = sadd.s32 %s351, 1
      %s353 = scalar_select %p350, %s351, %s352
      %p356 = pneg %p350
      %p357 = scmp.eq.s32.totalorder %s34, 1
      %p358 = por %p356, %p357
      %p359 = scmp.ne.s32.totalorder %s351, %s354
      %p360 = scmp.eq.s32.totalorder %s34, 0
      %p361 = por %p359, %p360
      %p362 = scmp.ne.s32.totalorder %s351, %s354
      %p363 = scmp.eq.s32.totalorder %s39, 1
      %p364 = por %p362, %p363
      %p365 = scmp.ne.s32.totalorder %s354, %s355
      %p366 = scmp.eq.s32.totalorder %s39, 0
      %p367 = por %p365, %p366
      %p368 = scmp.ne.s32.totalorder %s354, %s355
      %p369 = scmp.eq.s32.totalorder %s40, 1
      %p370 = por %p368, %p369
      %p372 = scmp.ne.s32.totalorder %s355, %s371
      %p373 = scmp.eq.s32.totalorder %s40, 0
      %p374 = por %p372, %p373
      %s376 = sadd.s32 %s375, 1
      %p379 = scmp.eq.s32.totalorder %s34, 1
      %p380 = scmp.ne.s32.totalorder %s375, %s377
      %p381 = scmp.eq.s32.totalorder %s34, 0
      %p382 = por %p380, %p381
      %p383 = scmp.ne.s32.totalorder %s375, %s377
      %p384 = scmp.eq.s32.totalorder %s39, 1
      %p385 = por %p383, %p384
      %p386 = scmp.ne.s32.totalorder %s377, %s378
      %p387 = scmp.eq.s32.totalorder %s39, 0
      %p388 = por %p386, %p387
      %p389 = scmp.ne.s32.totalorder %s377, %s378
      %p390 = scmp.eq.s32.totalorder %s40, 1
      %p391 = por %p389, %p390
      %p393 = scmp.ne.s32.totalorder %s378, %s392
      %p394 = scmp.eq.s32.totalorder %s40, 0
      %p395 = por %p393, %p394
      %p396 = scmp.le.s32.totalorder 1, %s34
      %p397 = scmp.lt.s32.totalorder %s34, 3
      %p398 = pnand %p396, %p397
      %p399 = pneg %p398
      // Predicated region
      $region9: #{tpu_custom_call.1} parent=5 // pred_check
        _
      $region10: #{tpu_custom_call.1} parent=5 // pred_check_branch
        %401 = sbr.rel (%p398) target = $region12
      $region11: #{tpu_custom_call.1} parent=5 // pred_region
        %s402 = ssub.s32 %s34, 1
        // Predicated region
        $region13: #{tpu_custom_call.1} parent=11 // pred_check
          %p403 = pneg %p55
        $region14: #{tpu_custom_call.1} parent=11 // pred_check_branch
          %405 = sbr.rel (%p403) target = $region16
        $region15: #{tpu_custom_call.1} parent=11 // pred_region
          %s407 = ssub.s32 256, 256
          %408 = vsyncadd [#allocation6], %s407
          %s409 = sshll.u32 [#allocation5], 4
          %s410 = int_to_ptr.vmem [resolvable:$true] %s409
          %415 = dma.hbm_to_vmem [thread:$0]  %s1, 256, %s410, [#allocation6], 128, 128, 8
        $region16: #{tpu_custom_call.1} parent=11 // pred_fallthru
          _
      $region12: #{tpu_custom_call.1} parent=5 // pred_fallthru
        _
      %p416 = scmp.lt.s32.totalorder %s34, 2
      // Predicated region
      $region17: #{tpu_custom_call.1} parent=5 // pred_check
        %p417 = pneg %p416
      $region18: #{tpu_custom_call.1} parent=5 // pred_check_branch
        %419 = sbr.rel (%p417) target = $region20
      $region19: #{tpu_custom_call.1} parent=5 // pred_region
        // Predicated region
        $region21: #{tpu_custom_call.1} parent=19 // pred_check
          %p420 = pneg %p75
        $region22: #{tpu_custom_call.1} parent=19 // pred_check_branch
          %422 = sbr.rel (%p420) target = $region24
        $region23: #{tpu_custom_call.1} parent=19 // pred_region
          %p423 = scmp.lt.s32.totalorder %s34, 1
          %s424 = scalar_select %p423, %s34, 1
          %s425 = smul.addr %s424, 4
          %s426 = smul.addr %s425, 8
          %s427 = scalar_lea.vmem %s2, %s426
        $region24: #{tpu_custom_call.1} parent=19 // pred_fallthru
          _
        // Predicated region
        $region25: #{tpu_custom_call.1} parent=19 // pred_check
          %p428 = pneg %p101
        $region26: #{tpu_custom_call.1} parent=19 // pred_check_branch
          %430 = sbr.rel (%p428) target = $region28
        $region27: #{tpu_custom_call.1} parent=19 // pred_region
          %s431 = sand.u32 %s34, 1
          %s432 = scalar_lea.sflag [#allocation9], %s431
          %s433 = sand.u32 %s91, 1
          %s434 = smul.addr %s433, 32
          %s435 = scalar_lea.vmem [#allocation8], %s434
          %s437 = ssub.s32 512, 512
          %438 = vsyncadd %s432, %s437
          %s439 = smul.addr %s34, 4
          %s440 = smul.addr %s439, 128
          %s441 = scalar_lea.hbm %s3, %s440
          %s442 = sshll.u32 %s435, 4
          %s443 = int_to_ptr.vmem [resolvable:$true] %s442
          %448 = dma.hbm_to_vmem [thread:$0]  %s441, 512, %s443, %s432, 128, 128, 8
        $region28: #{tpu_custom_call.1} parent=19 // pred_fallthru
          _
        // Predicated region
        $region29: #{tpu_custom_call.1} parent=19 // pred_check
          %p449 = pneg %p127
        $region30: #{tpu_custom_call.1} parent=19 // pred_check_branch
          %451 = sbr.rel (%p449) target = $region32
        $region31: #{tpu_custom_call.1} parent=19 // pred_region
          %p452 = scmp.lt.s32.totalorder %s34, 1
          %s453 = scalar_select %p452, %s34, 1
          %s454 = smul.addr %s453, 8
          %s455 = smul.addr %s454, 8
          %s456 = scalar_lea.vmem %s4, %s455
        $region32: #{tpu_custom_call.1} parent=19 // pred_fallthru
          _
        // Predicated region
        $region33: #{tpu_custom_call.1} parent=19 // pred_check
          %p457 = pneg %p153
        $region34: #{tpu_custom_call.1} parent=19 // pred_check_branch
          %459 = sbr.rel (%p457) target = $region36
        $region35: #{tpu_custom_call.1} parent=19 // pred_region
          %s460 = sand.u32 %s34, 1
          %s461 = scalar_lea.sflag [#allocation9], %s460
          %s462 = sand.u32 %s143, 1
          %s463 = smul.addr %s462, 64
          %s464 = scalar_lea.vmem [#allocation10], %s463
          %s466 = ssub.s32 1024, 1024
          %467 = vsyncadd %s461, %s466
          %s468 = smul.addr %s34, 8
          %s469 = smul.addr %s468, 128
          %s470 = scalar_lea.hbm %s5, %s469
          %s471 = sshll.u32 %s464, 4
          %s472 = int_to_ptr.vmem [resolvable:$true] %s471
          %477 = dma.hbm_to_vmem [thread:$0]  %s470, 1024, %s472, %s461, 128, 128, 8
        $region36: #{tpu_custom_call.1} parent=19 // pred_fallthru
          _
        // Predicated region
        $region37: #{tpu_custom_call.1} parent=19 // pred_check
          %p478 = pneg %p179
        $region38: #{tpu_custom_call.1} parent=19 // pred_check_branch
          %480 = sbr.rel (%p478) target = $region40
        $region39: #{tpu_custom_call.1} parent=19 // pred_region
          %s481 = sand.u32 %s169, 1
          %s482 = scalar_lea.sflag [#allocation12], %s481
          %s483 = sand.u32 %s169, 1
          %s484 = smul.addr %s483, 32
          %s485 = scalar_lea.vmem [#allocation11], %s484
          %s487 = ssub.s32 512, 512
          %488 = vsyncadd %s482, %s487
          %s489 = smul.addr %s34, 4
          %s490 = smul.addr %s489, 128
          %s491 = scalar_lea.hbm %s6, %s490
          %s492 = sshll.u32 %s485, 4
          %s493 = int_to_ptr.vmem [resolvable:$true] %s492
          %498 = dma.hbm_to_vmem [thread:$0]  %s491, 512, %s493, %s482, 128, 128, 8
        $region40: #{tpu_custom_call.1} parent=19 // pred_fallthru
          _
        // Predicated region
        $region41: #{tpu_custom_call.1} parent=19 // pred_check
          %p499 = pneg %p205
        $region42: #{tpu_custom_call.1} parent=19 // pred_check_branch
          %501 = sbr.rel (%p499) target = $region44
        $region43: #{tpu_custom_call.1} parent=19 // pred_region
          %p502 = scmp.lt.s32.totalorder %s34, 1
          %s503 = scalar_select %p502, %s34, 1
          %s504 = scalar_lea.vmem %s7, %s503
        $region44: #{tpu_custom_call.1} parent=19 // pred_fallthru
          _
        // Predicated region
        $region45: #{tpu_custom_call.1} parent=19 // pred_check
          %p505 = pneg %p231
        $region46: #{tpu_custom_call.1} parent=19 // pred_check_branch
          %507 = sbr.rel (%p505) target = $region48
        $region47: #{tpu_custom_call.1} parent=19 // pred_region
          %p508 = scmp.lt.s32.totalorder %s34, 1
          %s509 = scalar_select %p508, %s34, 1
          %s510 = smul.addr %s509, 8
          %s511 = smul.addr %s510, 8
          %s512 = scalar_lea.vmem %s8, %s511
        $region48: #{tpu_custom_call.1} parent=19 // pred_fallthru
          _
        // Predicated region
        $region49: #{tpu_custom_call.1} parent=19 // pred_check
          %p513 = pneg %p257
        $region50: #{tpu_custom_call.1} parent=19 // pred_check_branch
          %515 = sbr.rel (%p513) target = $region52
        $region51: #{tpu_custom_call.1} parent=19 // pred_region
          %p516 = scmp.lt.s32.totalorder %s34, 1
          %s517 = scalar_select %p516, %s34, 1
          %s518 = scalar_lea.vmem %s9, %s517
        $region52: #{tpu_custom_call.1} parent=19 // pred_fallthru
          _
        // Predicated region
        $region53: #{tpu_custom_call.1} parent=19 // pred_check
          %p519 = pneg %p283
        $region54: #{tpu_custom_call.1} parent=19 // pred_check_branch
          %521 = sbr.rel (%p519) target = $region56
        $region55: #{tpu_custom_call.1} parent=19 // pred_region
          %p522 = scmp.lt.s32.totalorder %s34, 1
          %s523 = scalar_select %p522, %s34, 1
          %s524 = scalar_lea.vmem %s10, %s523
        $region56: #{tpu_custom_call.1} parent=19 // pred_fallthru
          _
        // Predicated region
        $region57: #{tpu_custom_call.1} parent=19 // pred_check
          %p525 = pneg %p309
        $region58: #{tpu_custom_call.1} parent=19 // pred_check_branch
          %527 = sbr.rel (%p525) target = $region60
        $region59: #{tpu_custom_call.1} parent=19 // pred_region
          %p528 = scmp.lt.s32.totalorder %s34, 1
          %s529 = scalar_select %p528, %s34, 1
          %s530 = scalar_lea.vmem %s11, %s529
        $region60: #{tpu_custom_call.1} parent=19 // pred_fallthru
          _
        // Predicated region
        $region61: #{tpu_custom_call.1} parent=19 // pred_check
          %p531 = pneg %p335
        $region62: #{tpu_custom_call.1} parent=19 // pred_check_branch
          %533 = sbr.rel (%p531) target = $region64
        $region63: #{tpu_custom_call.1} parent=19 // pred_region
          %p534 = scmp.lt.s32.totalorder %s34, 1
          %s535 = scalar_select %p534, %s34, 1
          %s536 = scalar_lea.vmem %s12, %s535
        $region64: #{tpu_custom_call.1} parent=19 // pred_fallthru
          _
        // Predicated region
        $region65: #{tpu_custom_call.1} parent=19 // pred_check
          %p537 = pneg %p361
        $region66: #{tpu_custom_call.1} parent=19 // pred_check_branch
          %539 = sbr.rel (%p537) target = $region68
        $region67: #{tpu_custom_call.1} parent=19 // pred_region
          %p540 = scmp.lt.s32.totalorder %s34, 1
          %s541 = scalar_select %p540, %s34, 1
          %s542 = scalar_lea.vmem %s13, %s541
        $region68: #{tpu_custom_call.1} parent=19 // pred_fallthru
          _
      $region20: #{tpu_custom_call.1} parent=5 // pred_fallthru
        _
      %p543 = scmp.le.s32.totalorder 1, %s34
      %p544 = scmp.lt.s32.totalorder %s34, 3
      %p545 = pnand %p543, %p544
      %p546 = pneg %p545
      // Predicated region
      $region69: #{tpu_custom_call.1} parent=5 // pred_check
        _
      $region70: #{tpu_custom_call.1} parent=5 // pred_check_branch
        %548 = sbr.rel (%p545) target = $region72
      $region71: #{tpu_custom_call.1} parent=5 // pred_region
        %s549 = ssub.s32 %s34, 1
        // Predicated region
        $region73: #{tpu_custom_call.1} parent=71 // pred_check
          %p550 = pneg %p55
        $region74: #{tpu_custom_call.1} parent=71 // pred_check_branch
          %552 = sbr.rel (%p550) target = $region76
        $region75: #{tpu_custom_call.1} parent=71 // pred_region
          %553 = dma.done [#allocation6], 256
        $region76: #{tpu_custom_call.1} parent=71 // pred_fallthru
          _
        %s554 = sand.u32 %s39, 1
        %s555 = scalar_lea.sflag [#allocation9], %s554
        %s556 = sand.u32 %s94, 1
        %s557 = smul.addr %s556, 32
        %s558 = scalar_lea.vmem [#allocation8], %s557
        // Predicated region
        $region77: #{tpu_custom_call.1} parent=71 // pred_check
          %p559 = pneg %p107
        $region78: #{tpu_custom_call.1} parent=71 // pred_check_branch
          %561 = sbr.rel (%p559) target = $region80
        $region79: #{tpu_custom_call.1} parent=71 // pred_region
          %562 = dma.done %s555, 512
        $region80: #{tpu_custom_call.1} parent=71 // pred_fallthru
          _
        %s563 = sand.u32 %s39, 1
        %s564 = scalar_lea.sflag [#allocation9], %s563
        %s565 = sand.u32 %s146, 1
        %s566 = smul.addr %s565, 64
        %s567 = scalar_lea.vmem [#allocation10], %s566
        // Predicated region
        $region81: #{tpu_custom_call.1} parent=71 // pred_check
          %p568 = pneg %p159
        $region82: #{tpu_custom_call.1} parent=71 // pred_check_branch
          %570 = sbr.rel (%p568) target = $region84
        $region83: #{tpu_custom_call.1} parent=71 // pred_region
          %571 = dma.done %s564, 1024
        $region84: #{tpu_custom_call.1} parent=71 // pred_fallthru
          _
        %s572 = sand.u32 %s172, 1
        %s573 = scalar_lea.sflag [#allocation12], %s572
        %s574 = sand.u32 %s172, 1
        %s575 = smul.addr %s574, 32
        %s576 = scalar_lea.vmem [#allocation11], %s575
        // Predicated region
        $region85: #{tpu_custom_call.1} parent=71 // pred_check
          %p577 = pneg %p185
        $region86: #{tpu_custom_call.1} parent=71 // pred_check_branch
          %579 = sbr.rel (%p577) target = $region88
        $region87: #{tpu_custom_call.1} parent=71 // pred_region
          %580 = dma.done %s573, 512
        $region88: #{tpu_custom_call.1} parent=71 // pred_fallthru
          _
        %p581 = pneg %p55
        %p582 = pneg %p52
        %p583 = scmp.lt.s32.totalorder %s39, 1
        %s584 = scalar_select %p583, %s39, 1
        %s585 = smul.addr %s584, 4
        %s586 = smul.addr %s585, 8
        %s587 = scalar_lea.vmem %s2, %s586
        %p588 = pneg %p81
        %p589 = pneg %p78
        %s590 = sand.u32 %s39, 1
        %s591 = scalar_lea.sflag [#allocation9], %s590
        %s592 = sand.u32 %s94, 1
        %s593 = smul.addr %s592, 32
        %s594 = scalar_lea.vmem [#allocation8], %s593
        %p595 = pneg %p107
        %p596 = pneg %p104
        %p597 = scmp.lt.s32.totalorder %s39, 1
        %s598 = scalar_select %p597, %s39, 1
        %s599 = smul.addr %s598, 8
        %s600 = smul.addr %s599, 8
        %s601 = scalar_lea.vmem %s4, %s600
        %p602 = pneg %p133
        %p603 = pneg %p130
        %s604 = sand.u32 %s39, 1
        %s605 = scalar_lea.sflag [#allocation9], %s604
        %s606 = sand.u32 %s146, 1
        %s607 = smul.addr %s606, 64
        %s608 = scalar_lea.vmem [#allocation10], %s607
        %p609 = pneg %p159
        %p610 = pneg %p156
        %s611 = sand.u32 %s172, 1
        %s612 = scalar_lea.sflag [#allocation12], %s611
        %s613 = sand.u32 %s172, 1
        %s614 = smul.addr %s613, 32
        %s615 = scalar_lea.vmem [#allocation11], %s614
        %p616 = pneg %p185
        %p617 = pneg %p182
        %p618 = scmp.lt.s32.totalorder %s39, 1
        %s619 = scalar_select %p618, %s39, 1
        %s620 = scalar_lea.vmem %s7, %s619
        %p621 = pneg %p211
        %p622 = pneg %p208
        %p623 = scmp.lt.s32.totalorder %s39, 1
        %s624 = scalar_select %p623, %s39, 1
        %s625 = smul.addr %s624, 8
        %s626 = smul.addr %s625, 8
        %s627 = scalar_lea.vmem %s8, %s626
        %p628 = pneg %p237
        %p629 = pneg %p234
        %p630 = scmp.lt.s32.totalorder %s39, 1
        %s631 = scalar_select %p630, %s39, 1
        %s632 = scalar_lea.vmem %s9, %s631
        %p633 = pneg %p263
        %p634 = pneg %p260
        %p635 = scmp.lt.s32.totalorder %s39, 1
        %s636 = scalar_select %p635, %s39, 1
        %s637 = scalar_lea.vmem %s10, %s636
        %p638 = pneg %p289
        %p639 = pneg %p286
        %p640 = scmp.lt.s32.totalorder %s39, 1
        %s641 = scalar_select %p640, %s39, 1
        %s642 = scalar_lea.vmem %s11, %s641
        %p643 = pneg %p315
        %p644 = pneg %p312
        %p645 = scmp.lt.s32.totalorder %s39, 1
        %s646 = scalar_select %p645, %s39, 1
        %s647 = scalar_lea.vmem %s12, %s646
        %p648 = pneg %p341
        %p649 = pneg %p338
        %p650 = scmp.lt.s32.totalorder %s39, 1
        %s651 = scalar_select %p650, %s39, 1
        %s652 = scalar_lea.vmem %s13, %s651
        %p653 = pneg %p367
        %p654 = pneg %p364
        %p655 = pneg %p388
        %p656 = pneg %p385
        %p657 = scmp.lt.s32.totalorder %s39, 1
        %s658 = scalar_select %p657, %s39, 1
        %s659 = smul.addr %s658, 4
        %s660 = smul.addr %s659, 8
        %s661 = scalar_lea.vmem %s2, %s660
        %p662 = scmp.lt.s32.totalorder %s39, 1
        %s663 = scalar_select %p662, %s39, 1
        %s664 = smul.addr %s663, 8
        %s665 = smul.addr %s664, 8
        %s666 = scalar_lea.vmem %s4, %s665
        %p667 = scmp.lt.s32.totalorder %s39, 1
        %s668 = scalar_select %p667, %s39, 1
        %s669 = scalar_lea.vmem %s7, %s668
        %p670 = scmp.lt.s32.totalorder %s39, 1
        %s671 = scalar_select %p670, %s39, 1
        %s672 = smul.addr %s671, 8
        %s673 = smul.addr %s672, 8
        %s674 = scalar_lea.vmem %s8, %s673
        %p675 = scmp.lt.s32.totalorder %s39, 1
        %s676 = scalar_select %p675, %s39, 1
        %s677 = scalar_lea.vmem %s9, %s676
        %p678 = scmp.lt.s32.totalorder %s39, 1
        %s679 = scalar_select %p678, %s39, 1
        %s680 = scalar_lea.vmem %s10, %s679
        %p681 = scmp.lt.s32.totalorder %s39, 1
        %s682 = scalar_select %p681, %s39, 1
        %s683 = scalar_lea.vmem %s11, %s682
        %p684 = scmp.lt.s32.totalorder %s39, 1
        %s685 = scalar_select %p684, %s39, 1
        %s686 = scalar_lea.vmem %s12, %s685
        %p687 = scmp.lt.s32.totalorder %s39, 1
        %s688 = scalar_select %p687, %s39, 1
        %s689 = scalar_lea.vmem %s13, %s688
        %p690 = scmp.eq.s32.totalorder %s39, 0
        // Predicated region
        $region89: #{tpu_custom_call.1} parent=71 // pred_check
          %p691 = pneg %p690
        $region90: #{tpu_custom_call.1} parent=71 // pred_check_branch
          %693 = sbr.rel (%p691) target = $region92
        $region91: #{tpu_custom_call.1} parent=71 // pred_region
          %v694 = vld [vmem:[#allocation5] sm:$0xff]
          %v695 = vld [vmem:[#allocation5 + $0x8] sm:$0xff]
          %vm696 = vcmask 261120
          %697 = vst.msk [vmem:[#allocation2] sm:$0xff] %vm696, %v694
          %698 = vst.msk [vmem:[#allocation2 + $0x8] sm:$0xff] %vm696, %v695
        $region92: #{tpu_custom_call.1} parent=71 // pred_fallthru
          _
        %v699 = vld [vmem:[#allocation2] sm:$0xff]
        %v700 = vld [vmem:[#allocation2 + $0x8] sm:$0xff]
        %v701 = vld [vmem:[%s661] sm:$0xff]
        %v702 = vld [vmem:[%s661 + $0x8] sm:$0xff]
        %v703 = vld [vmem:[%s661 + $0x10] sm:$0xff]
        %v704 = vld [vmem:[%s661 + $0x18] sm:$0xff]
        %vm705 = vcmask 261120
        %v707 = vsel %vm705, %v699, 0
        %v710 = vsel %vm705, %v700, 0
        %712 = vmatprep.subr.mxu0 0.0
        %713 = vmatpush1.msra.mxu0 %v701
        %714 = vmatprep.subr.mxu0 0.0
        %715 = vmatpush1.msra.mxu0 %v702
        %716 = vmatprep.subr.mxu0 0.0
        %717 = vmatpush1.msra.mxu0 %v703
        %718 = vmatprep.subr.mxu0 0.0
        %719 = vmatpush1.msra.mxu0 %v704
        %720 = vmatprep.subr.mxu0 0.0
        %721 = vmatpush1.msra.mxu0 0.0
        %722 = vmatprep.subr.mxu0 0.0
        %723 = vmatpush1.msra.mxu0 0.0
        %724 = vmatprep.subr.mxu0 0.0
        %725 = vmatpush1.msra.mxu0 0.0
        %726 = vmatprep.subr.mxu0 0.0
        %727 = vmatpush1.msra.mxu0 0.0
        %728 = vmatprep.subr.mxu0 0.0
        %729 = vmatpush1.msra.mxu0 0.0
        %730 = vmatprep.subr.mxu0 0.0
        %731 = vmatpush1.msra.mxu0 0.0
        %732 = vmatprep.subr.mxu0 0.0
        %733 = vmatpush1.msra.mxu0 0.0
        %734 = vmatprep.subr.mxu0 0.0
        %735 = vmatpush1.msra.mxu0 0.0
        %736 = vmatprep.subr.mxu0 0.0
        %737 = vmatpush1.msra.mxu0 0.0
        %738 = vmatprep.subr.mxu0 0.0
        %739 = vmatpush1.msra.mxu0 0.0
        %740 = vmatprep.subr.mxu0 0.0
        %741 = vmatpush1.msra.mxu0 0.0
        %742 = vmatprep.subr.mxu0 0.0
        %743 = vmatpush1.msra.mxu0 0.0
        %744 = vmatprep.subr.mxu0 0.0
        %745 = vmatpush1.msra.mxu0 0.0
        %746 = vmatprep.subr.mxu0 0.0
        %747 = vmatpush1.msra.mxu0 0.0
        %748 = vmatprep.subr.mxu0 0.0
        %749 = vmatpush1.msra.mxu0 0.0
        %750 = vmatprep.subr.mxu0 0.0
        %751 = vmatpush1.msra.mxu0 0.0
        %752 = vmatprep.subr.mxu0 0.0
        %753 = vmatpush1.msra.mxu0 0.0
        %754 = vmatprep.subr.mxu0 0.0
        %755 = vmatpush1.msra.mxu0 0.0
        %756 = vmatprep.subr.mxu0 0.0
        %757 = vmatpush1.msra.mxu0 0.0
        %758 = vmatprep.subr.mxu0 0.0
        %759 = vmatpush1.msra.mxu0 0.0
        %760 = vmatprep.subr.mxu0 0.0
        %761 = vmatpush1.msra.mxu0 0.0
        %762 = vmatprep.subr.mxu0 0.0
        %763 = vmatpush1.msra.mxu0 0.0
        %764 = vmatprep.subr.mxu0 0.0
        %765 = vmatpush1.msra.mxu0 0.0
        %766 = vmatprep.subr.mxu0 0.0
        %767 = vmatpush1.msra.mxu0 0.0
        %768 = vmatprep.subr.mxu0 0.0
        %769 = vmatpush1.msra.mxu0 0.0
        %770 = vmatprep.subr.mxu0 0.0
        %771 = vmatpush1.msra.mxu0 0.0
        %772 = vmatprep.subr.mxu0 0.0
        %773 = vmatpush1.msra.mxu0 0.0
        %774 = vmatprep.subr.mxu0 0.0
        %775 = vmatpush1.msra.mxu0 0.0
        %776 = vmatprep.mubr.f32.mxu0 0.0
        %777 = vmatmul.mubr.f32.gmra.mrb[0].mxu0 %v707
        %v778 = vpop.f32.mrb[0].mxu0
        %v779 = vadd.f32 0.0, %v778
        %v780 = vpop.f32.mrb[0].mxu0
        %781 = vmatprep.mubr.f32.mxu0 0.0
        %782 = vmatmul.mubr.f32.gmra.mrb[0].mxu0 %v710
        %v783 = vpop.f32.mrb[0].mxu0
        %v784 = vadd.f32 0.0, %v783
        %v785 = vpop.f32.mrb[0].mxu0
        %786 = vdwg.mxu0
        %788 = vrot.lane.b32.xlu0 %v779, 120
        %v789 = vpop.permute.xlu0 %788
        %791 = vrot.lane.b32.xlu0 %v784, 120
        %v792 = vpop.permute.xlu0 %791
        %793 = vrot.lane.b32.xlu0 %v779, 112
        %v794 = vpop.permute.xlu0 %793
        %795 = vrot.lane.b32.xlu0 %v784, 112
        %v796 = vpop.permute.xlu0 %795
        %797 = vrot.lane.b32.xlu0 %v779, 104
        %v798 = vpop.permute.xlu0 %797
        %799 = vrot.lane.b32.xlu0 %v784, 104
        %v800 = vpop.permute.xlu0 %799
        %v801 = vld [vmem:[%s666] sm:$0xff]
        %v802 = vld [vmem:[%s666 + $0x8] sm:$0xff]
        %v803 = vld [vmem:[%s666 + $0x10] sm:$0xff]
        %v804 = vld [vmem:[%s666 + $0x18] sm:$0xff]
        %v805 = vld [vmem:[%s666 + $0x20] sm:$0xff]
        %v806 = vld [vmem:[%s666 + $0x28] sm:$0xff]
        %v807 = vld [vmem:[%s666 + $0x30] sm:$0xff]
        %v808 = vld [vmem:[%s666 + $0x38] sm:$0xff]
        %v809 = vld [vmem:[%s567] sm:$0xff]
        %v810 = vld [vmem:[%s567 + $0x8] sm:$0xff]
        %v811 = vld [vmem:[%s567 + $0x10] sm:$0xff]
        %v812 = vld [vmem:[%s567 + $0x18] sm:$0xff]
        %v813 = vld [vmem:[%s567 + $0x20] sm:$0xff]
        %v814 = vld [vmem:[%s567 + $0x28] sm:$0xff]
        %v815 = vld [vmem:[%s567 + $0x30] sm:$0xff]
        %v816 = vld [vmem:[%s567 + $0x38] sm:$0xff]
        %v817 = vcombine.high %v779, %v779
        %v819 = vunpack.c.l.s4 1966171168
        %v820 = vunpack.c.0.s8 %v819
        %v821 = vlaneseq
        %v822 = vshrl.u32 %v821, 7
        %v823 = vsub.s32 %v820, %v822
        %v824 = vrot.slane %v779, %v823
        %v826 = vunpack.c.l.s4 1966171168
        %v827 = vunpack.c.0.s8 %v826
        %v828 = vlaneseq
        %v829 = vshrl.u32 %v828, 7
        %v830 = vsub.s32 %v827, %v829
        %v831 = vrot.slane %v817, %v830
        %v832 = vcombine.high %v824, %v824
        %v833 = vcombine.high %v831, %v831
        %v835 = vunpack.c.l.s4 1966171168
        %v836 = vunpack.c.0.s8 %v835
        %v837 = vlaneseq
        %v838 = vshrl.u32 %v837, 7
        %v839 = vsub.s32 %v836, %v838
        %v840 = vrot.slane %v824, %v839
        %v842 = vunpack.c.l.s4 1966171168
        %v843 = vunpack.c.0.s8 %v842
        %v844 = vlaneseq
        %v845 = vshrl.u32 %v844, 7
        %v846 = vsub.s32 %v843, %v845
        %v847 = vrot.slane %v831, %v846
        %v849 = vunpack.c.l.s4 1966171168
        %v850 = vunpack.c.0.s8 %v849
        %v851 = vlaneseq
        %v852 = vshrl.u32 %v851, 7
        %v853 = vsub.s32 %v850, %v852
        %v854 = vrot.slane %v832, %v853
        %v856 = vunpack.c.l.s4 1966171168
        %v857 = vunpack.c.0.s8 %v856
        %v858 = vlaneseq
        %v859 = vshrl.u32 %v858, 7
        %v860 = vsub.s32 %v857, %v859
        %v861 = vrot.slane %v833, %v860
        %v862 = vcombine.high %v840, %v840
        %v863 = vcombine.high %v847, %v847
        %v864 = vcombine.high %v854, %v854
        %v865 = vcombine.high %v861, %v861
        %v866 = vcombine.high %v784, %v784
        %v868 = vunpack.c.l.s4 1966171168
        %v869 = vunpack.c.0.s8 %v868
        %v870 = vlaneseq
        %v871 = vshrl.u32 %v870, 7
        %v872 = vsub.s32 %v869, %v871
        %v873 = vrot.slane %v784, %v872
        %v875 = vunpack.c.l.s4 1966171168
        %v876 = vunpack.c.0.s8 %v875
        %v877 = vlaneseq
        %v878 = vshrl.u32 %v877, 7
        %v879 = vsub.s32 %v876, %v878
        %v880 = vrot.slane %v866, %v879
        %v881 = vcombine.high %v873, %v873
        %v882 = vcombine.high %v880, %v880
        %v884 = vunpack.c.l.s4 1966171168
        %v885 = vunpack.c.0.s8 %v884
        %v886 = vlaneseq
        %v887 = vshrl.u32 %v886, 7
        %v888 = vsub.s32 %v885, %v887
        %v889 = vrot.slane %v873, %v888
        %v891 = vunpack.c.l.s4 1966171168
        %v892 = vunpack.c.0.s8 %v891
        %v893 = vlaneseq
        %v894 = vshrl.u32 %v893, 7
        %v895 = vsub.s32 %v892, %v894
        %v896 = vrot.slane %v880, %v895
        %v898 = vunpack.c.l.s4 1966171168
        %v899 = vunpack.c.0.s8 %v898
        %v900 = vlaneseq
        %v901 = vshrl.u32 %v900, 7
        %v902 = vsub.s32 %v899, %v901
        %v903 = vrot.slane %v881, %v902
        %v905 = vunpack.c.l.s4 1966171168
        %v906 = vunpack.c.0.s8 %v905
        %v907 = vlaneseq
        %v908 = vshrl.u32 %v907, 7
        %v909 = vsub.s32 %v906, %v908
        %v910 = vrot.slane %v882, %v909
        %v911 = vcombine.high %v889, %v889
        %v912 = vcombine.high %v896, %v896
        %v913 = vcombine.high %v903, %v903
        %v914 = vcombine.high %v910, %v910
        %v915 = vcombine.high %v789, %v789
        %v917 = vunpack.c.l.s4 1966171168
        %v918 = vunpack.c.0.s8 %v917
        %v919 = vlaneseq
        %v920 = vshrl.u32 %v919, 7
        %v921 = vsub.s32 %v918, %v920
        %v922 = vrot.slane %v789, %v921
        %v924 = vunpack.c.l.s4 1966171168
        %v925 = vunpack.c.0.s8 %v924
        %v926 = vlaneseq
        %v927 = vshrl.u32 %v926, 7
        %v928 = vsub.s32 %v925, %v927
        %v929 = vrot.slane %v915, %v928
        %v930 = vcombine.high %v922, %v922
        %v931 = vcombine.high %v929, %v929
        %v933 = vunpack.c.l.s4 1966171168
        %v934 = vunpack.c.0.s8 %v933
        %v935 = vlaneseq
        %v936 = vshrl.u32 %v935, 7
        %v937 = vsub.s32 %v934, %v936
        %v938 = vrot.slane %v922, %v937
        %v940 = vunpack.c.l.s4 1966171168
        %v941 = vunpack.c.0.s8 %v940
        %v942 = vlaneseq
        %v943 = vshrl.u32 %v942, 7
        %v944 = vsub.s32 %v941, %v943
        %v945 = vrot.slane %v929, %v944
        %v947 = vunpack.c.l.s4 1966171168
        %v948 = vunpack.c.0.s8 %v947
        %v949 = vlaneseq
        %v950 = vshrl.u32 %v949, 7
        %v951 = vsub.s32 %v948, %v950
        %v952 = vrot.slane %v930, %v951
        %v954 = vunpack.c.l.s4 1966171168
        %v955 = vunpack.c.0.s8 %v954
        %v956 = vlaneseq
        %v957 = vshrl.u32 %v956, 7
        %v958 = vsub.s32 %v955, %v957
        %v959 = vrot.slane %v931, %v958
        %v960 = vcombine.high %v938, %v938
        %v961 = vcombine.high %v945, %v945
        %v962 = vcombine.high %v952, %v952
        %v963 = vcombine.high %v959, %v959
        %v964 = vcombine.high %v792, %v792
        %v966 = vunpack.c.l.s4 1966171168
        %v967 = vunpack.c.0.s8 %v966
        %v968 = vlaneseq
        %v969 = vshrl.u32 %v968, 7
        %v970 = vsub.s32 %v967, %v969
        %v971 = vrot.slane %v792, %v970
        %v973 = vunpack.c.l.s4 1966171168
        %v974 = vunpack.c.0.s8 %v973
        %v975 = vlaneseq
        %v976 = vshrl.u32 %v975, 7
        %v977 = vsub.s32 %v974, %v976
        %v978 = vrot.slane %v964, %v977
        %v979 = vcombine.high %v971, %v971
        %v980 = vcombine.high %v978, %v978
        %v982 = vunpack.c.l.s4 1966171168
        %v983 = vunpack.c.0.s8 %v982
        %v984 = vlaneseq
        %v985 = vshrl.u32 %v984, 7
        %v986 = vsub.s32 %v983, %v985
        %v987 = vrot.slane %v971, %v986
        %v989 = vunpack.c.l.s4 1966171168
        %v990 = vunpack.c.0.s8 %v989
        %v991 = vlaneseq
        %v992 = vshrl.u32 %v991, 7
        %v993 = vsub.s32 %v990, %v992
        %v994 = vrot.slane %v978, %v993
        %v996 = vunpack.c.l.s4 1966171168
        %v997 = vunpack.c.0.s8 %v996
        %v998 = vlaneseq
        %v999 = vshrl.u32 %v998, 7
        %v1000 = vsub.s32 %v997, %v999
        %v1001 = vrot.slane %v979, %v1000
        %v1003 = vunpack.c.l.s4 1966171168
        %v1004 = vunpack.c.0.s8 %v1003
        %v1005 = vlaneseq
        %v1006 = vshrl.u32 %v1005, 7
        %v1007 = vsub.s32 %v1004, %v1006
        %v1008 = vrot.slane %v980, %v1007
        %v1009 = vcombine.high %v987, %v987
        %v1010 = vcombine.high %v994, %v994
        %v1011 = vcombine.high %v1001, %v1001
        %v1012 = vcombine.high %v1008, %v1008
        %v1013 = vcombine.high %v794, %v794
        %v1015 = vunpack.c.l.s4 1966171168
        %v1016 = vunpack.c.0.s8 %v1015
        %v1017 = vlaneseq
        %v1018 = vshrl.u32 %v1017, 7
        %v1019 = vsub.s32 %v1016, %v1018
        %v1020 = vrot.slane %v794, %v1019
        %v1022 = vunpack.c.l.s4 1966171168
        %v1023 = vunpack.c.0.s8 %v1022
        %v1024 = vlaneseq
        %v1025 = vshrl.u32 %v1024, 7
        %v1026 = vsub.s32 %v1023, %v1025
        %v1027 = vrot.slane %v1013, %v1026
        %v1028 = vcombine.high %v1020, %v1020
        %v1029 = vcombine.high %v1027, %v1027
        %v1031 = vunpack.c.l.s4 1966171168
        %v1032 = vunpack.c.0.s8 %v1031
        %v1033 = vlaneseq
        %v1034 = vshrl.u32 %v1033, 7
        %v1035 = vsub.s32 %v1032, %v1034
        %v1036 = vrot.slane %v1020, %v1035
        %v1038 = vunpack.c.l.s4 1966171168
        %v1039 = vunpack.c.0.s8 %v1038
        %v1040 = vlaneseq
        %v1041 = vshrl.u32 %v1040, 7
        %v1042 = vsub.s32 %v1039, %v1041
        %v1043 = vrot.slane %v1027, %v1042
        %v1045 = vunpack.c.l.s4 1966171168
        %v1046 = vunpack.c.0.s8 %v1045
        %v1047 = vlaneseq
        %v1048 = vshrl.u32 %v1047, 7
        %v1049 = vsub.s32 %v1046, %v1048
        %v1050 = vrot.slane %v1028, %v1049
        %v1052 = vunpack.c.l.s4 1966171168
        %v1053 = vunpack.c.0.s8 %v1052
        %v1054 = vlaneseq
        %v1055 = vshrl.u32 %v1054, 7
        %v1056 = vsub.s32 %v1053, %v1055
        %v1057 = vrot.slane %v1029, %v1056
        %v1058 = vcombine.high %v1036, %v1036
        %v1059 = vcombine.high %v1043, %v1043
        %v1060 = vcombine.high %v1050, %v1050
        %v1061 = vcombine.high %v1057, %v1057
        %v1062 = vcombine.high %v796, %v796
        %v1064 = vunpack.c.l.s4 1966171168
        %v1065 = vunpack.c.0.s8 %v1064
        %v1066 = vlaneseq
        %v1067 = vshrl.u32 %v1066, 7
        %v1068 = vsub.s32 %v1065, %v1067
        %v1069 = vrot.slane %v796, %v1068
        %v1071 = vunpack.c.l.s4 1966171168
        %v1072 = vunpack.c.0.s8 %v1071
        %v1073 = vlaneseq
        %v1074 = vshrl.u32 %v1073, 7
        %v1075 = vsub.s32 %v1072, %v1074
        %v1076 = vrot.slane %v1062, %v1075
        %v1077 = vcombine.high %v1069, %v1069
        %v1078 = vcombine.high %v1076, %v1076
        %v1080 = vunpack.c.l.s4 1966171168
        %v1081 = vunpack.c.0.s8 %v1080
        %v1082 = vlaneseq
        %v1083 = vshrl.u32 %v1082, 7
        %v1084 = vsub.s32 %v1081, %v1083
        %v1085 = vrot.slane %v1069, %v1084
        %v1087 = vunpack.c.l.s4 1966171168
        %v1088 = vunpack.c.0.s8 %v1087
        %v1089 = vlaneseq
        %v1090 = vshrl.u32 %v1089, 7
        %v1091 = vsub.s32 %v1088, %v1090
        %v1092 = vrot.slane %v1076, %v1091
        %v1094 = vunpack.c.l.s4 1966171168
        %v1095 = vunpack.c.0.s8 %v1094
        %v1096 = vlaneseq
        %v1097 = vshrl.u32 %v1096, 7
        %v1098 = vsub.s32 %v1095, %v1097
        %v1099 = vrot.slane %v1077, %v1098
        %v1101 = vunpack.c.l.s4 1966171168
        %v1102 = vunpack.c.0.s8 %v1101
        %v1103 = vlaneseq
        %v1104 = vshrl.u32 %v1103, 7
        %v1105 = vsub.s32 %v1102, %v1104
        %v1106 = vrot.slane %v1078, %v1105
        %v1107 = vcombine.high %v1085, %v1085
        %v1108 = vcombine.high %v1092, %v1092
        %v1109 = vcombine.high %v1099, %v1099
        %v1110 = vcombine.high %v1106, %v1106
        %v1111 = vcombine.high %v798, %v798
        %v1113 = vunpack.c.l.s4 1966171168
        %v1114 = vunpack.c.0.s8 %v1113
        %v1115 = vlaneseq
        %v1116 = vshrl.u32 %v1115, 7
        %v1117 = vsub.s32 %v1114, %v1116
        %v1118 = vrot.slane %v798, %v1117
        %v1120 = vunpack.c.l.s4 1966171168
        %v1121 = vunpack.c.0.s8 %v1120
        %v1122 = vlaneseq
        %v1123 = vshrl.u32 %v1122, 7
        %v1124 = vsub.s32 %v1121, %v1123
        %v1125 = vrot.slane %v1111, %v1124
        %v1126 = vcombine.high %v1118, %v1118
        %v1127 = vcombine.high %v1125, %v1125
        %v1129 = vunpack.c.l.s4 1966171168
        %v1130 = vunpack.c.0.s8 %v1129
        %v1131 = vlaneseq
        %v1132 = vshrl.u32 %v1131, 7
        %v1133 = vsub.s32 %v1130, %v1132
        %v1134 = vrot.slane %v1118, %v1133
        %v1136 = vunpack.c.l.s4 1966171168
        %v1137 = vunpack.c.0.s8 %v1136
        %v1138 = vlaneseq
        %v1139 = vshrl.u32 %v1138, 7
        %v1140 = vsub.s32 %v1137, %v1139
        %v1141 = vrot.slane %v1125, %v1140
        %v1143 = vunpack.c.l.s4 1966171168
        %v1144 = vunpack.c.0.s8 %v1143
        %v1145 = vlaneseq
        %v1146 = vshrl.u32 %v1145, 7
        %v1147 = vsub.s32 %v1144, %v1146
        %v1148 = vrot.slane %v1126, %v1147
        %v1150 = vunpack.c.l.s4 1966171168
        %v1151 = vunpack.c.0.s8 %v1150
        %v1152 = vlaneseq
        %v1153 = vshrl.u32 %v1152, 7
        %v1154 = vsub.s32 %v1151, %v1153
        %v1155 = vrot.slane %v1127, %v1154
        %v1156 = vcombine.high %v1134, %v1134
        %v1157 = vcombine.high %v1141, %v1141
        %v1158 = vcombine.high %v1148, %v1148
        %v1159 = vcombine.high %v1155, %v1155
        %v1160 = vcombine.high %v800, %v800
        %v1162 = vunpack.c.l.s4 1966171168
        %v1163 = vunpack.c.0.s8 %v1162
        %v1164 = vlaneseq
        %v1165 = vshrl.u32 %v1164, 7
        %v1166 = vsub.s32 %v1163, %v1165
        %v1167 = vrot.slane %v800, %v1166
        %v1169 = vunpack.c.l.s4 1966171168
        %v1170 = vunpack.c.0.s8 %v1169
        %v1171 = vlaneseq
        %v1172 = vshrl.u32 %v1171, 7
        %v1173 = vsub.s32 %v1170, %v1172
        %v1174 = vrot.slane %v1160, %v1173
        %v1175 = vcombine.high %v1167, %v1167
        %v1176 = vcombine.high %v1174, %v1174
        %v1178 = vunpack.c.l.s4 1966171168
        %v1179 = vunpack.c.0.s8 %v1178
        %v1180 = vlaneseq
        %v1181 = vshrl.u32 %v1180, 7
        %v1182 = vsub.s32 %v1179, %v1181
        %v1183 = vrot.slane %v1167, %v1182
        %v1185 = vunpack.c.l.s4 1966171168
        %v1186 = vunpack.c.0.s8 %v1185
        %v1187 = vlaneseq
        %v1188 = vshrl.u32 %v1187, 7
        %v1189 = vsub.s32 %v1186, %v1188
        %v1190 = vrot.slane %v1174, %v1189
        %v1192 = vunpack.c.l.s4 1966171168
        %v1193 = vunpack.c.0.s8 %v1192
        %v1194 = vlaneseq
        %v1195 = vshrl.u32 %v1194, 7
        %v1196 = vsub.s32 %v1193, %v1195
        %v1197 = vrot.slane %v1175, %v1196
        %v1199 = vunpack.c.l.s4 1966171168
        %v1200 = vunpack.c.0.s8 %v1199
        %v1201 = vlaneseq
        %v1202 = vshrl.u32 %v1201, 7
        %v1203 = vsub.s32 %v1200, %v1202
        %v1204 = vrot.slane %v1176, %v1203
        %v1205 = vcombine.high %v1183, %v1183
        %v1206 = vcombine.high %v1190, %v1190
        %v1207 = vcombine.high %v1197, %v1197
        %v1208 = vcombine.high %v1204, %v1204
        %v1209 = vlaneseq
        %v1210 = vshrl.u32 %v1209, 7
        %v1211 = vsub.s32 0, %v1210
        %v1212 = vrot.slane %v840, %v1211
        %v1213 = vlaneseq
        %v1214 = vshrl.u32 %v1213, 7
        %v1215 = vsub.s32 0, %v1214
        %v1216 = vrot.slane %v854, %v1215
        %v1217 = vlaneseq
        %v1218 = vshrl.u32 %v1217, 7
        %v1219 = vsub.s32 0, %v1218
        %v1220 = vrot.slane %v862, %v1219
        %v1221 = vlaneseq
        %v1222 = vshrl.u32 %v1221, 7
        %v1223 = vsub.s32 0, %v1222
        %v1224 = vrot.slane %v864, %v1223
        %v1225 = vlaneseq
        %v1226 = vshrl.u32 %v1225, 7
        %v1227 = vsub.s32 0, %v1226
        %v1228 = vrot.slane %v847, %v1227
        %v1229 = vlaneseq
        %v1230 = vshrl.u32 %v1229, 7
        %v1231 = vsub.s32 0, %v1230
        %v1232 = vrot.slane %v861, %v1231
        %v1233 = vlaneseq
        %v1234 = vshrl.u32 %v1233, 7
        %v1235 = vsub.s32 0, %v1234
        %v1236 = vrot.slane %v863, %v1235
        %v1237 = vlaneseq
        %v1238 = vshrl.u32 %v1237, 7
        %v1239 = vsub.s32 0, %v1238
        %v1240 = vrot.slane %v865, %v1239
        %v1241 = vlaneseq
        %v1242 = vshrl.u32 %v1241, 7
        %v1243 = vsub.s32 0, %v1242
        %v1244 = vrot.slane %v889, %v1243
        %v1245 = vlaneseq
        %v1246 = vshrl.u32 %v1245, 7
        %v1247 = vsub.s32 0, %v1246
        %v1248 = vrot.slane %v903, %v1247
        %v1249 = vlaneseq
        %v1250 = vshrl.u32 %v1249, 7
        %v1251 = vsub.s32 0, %v1250
        %v1252 = vrot.slane %v911, %v1251
        %v1253 = vlaneseq
        %v1254 = vshrl.u32 %v1253, 7
        %v1255 = vsub.s32 0, %v1254
        %v1256 = vrot.slane %v913, %v1255
        %v1257 = vlaneseq
        %v1258 = vshrl.u32 %v1257, 7
        %v1259 = vsub.s32 0, %v1258
        %v1260 = vrot.slane %v896, %v1259
        %v1261 = vlaneseq
        %v1262 = vshrl.u32 %v1261, 7
        %v1263 = vsub.s32 0, %v1262
        %v1264 = vrot.slane %v910, %v1263
        %v1265 = vlaneseq
        %v1266 = vshrl.u32 %v1265, 7
        %v1267 = vsub.s32 0, %v1266
        %v1268 = vrot.slane %v912, %v1267
        %v1269 = vlaneseq
        %v1270 = vshrl.u32 %v1269, 7
        %v1271 = vsub.s32 0, %v1270
        %v1272 = vrot.slane %v914, %v1271
        %v1273 = vlaneseq
        %v1274 = vshrl.u32 %v1273, 7
        %v1275 = vsub.s32 0, %v1274
        %v1276 = vrot.slane %v938, %v1275
        %v1277 = vlaneseq
        %v1278 = vshrl.u32 %v1277, 7
        %v1279 = vsub.s32 0, %v1278
        %v1280 = vrot.slane %v952, %v1279
        %v1281 = vlaneseq
        %v1282 = vshrl.u32 %v1281, 7
        %v1283 = vsub.s32 0, %v1282
        %v1284 = vrot.slane %v960, %v1283
        %v1285 = vlaneseq
        %v1286 = vshrl.u32 %v1285, 7
        %v1287 = vsub.s32 0, %v1286
        %v1288 = vrot.slane %v962, %v1287
        %v1289 = vlaneseq
        %v1290 = vshrl.u32 %v1289, 7
        %v1291 = vsub.s32 0, %v1290
        %v1292 = vrot.slane %v945, %v1291
        %v1293 = vlaneseq
        %v1294 = vshrl.u32 %v1293, 7
        %v1295 = vsub.s32 0, %v1294
        %v1296 = vrot.slane %v959, %v1295
        %v1297 = vlaneseq
        %v1298 = vshrl.u32 %v1297, 7
        %v1299 = vsub.s32 0, %v1298
        %v1300 = vrot.slane %v961, %v1299
        %v1301 = vlaneseq
        %v1302 = vshrl.u32 %v1301, 7
        %v1303 = vsub.s32 0, %v1302
        %v1304 = vrot.slane %v963, %v1303
        %v1305 = vlaneseq
        %v1306 = vshrl.u32 %v1305, 7
        %v1307 = vsub.s32 0, %v1306
        %v1308 = vrot.slane %v987, %v1307
        %v1309 = vlaneseq
        %v1310 = vshrl.u32 %v1309, 7
        %v1311 = vsub.s32 0, %v1310
        %v1312 = vrot.slane %v1001, %v1311
        %v1313 = vlaneseq
        %v1314 = vshrl.u32 %v1313, 7
        %v1315 = vsub.s32 0, %v1314
        %v1316 = vrot.slane %v1009, %v1315
        %v1317 = vlaneseq
        %v1318 = vshrl.u32 %v1317, 7
        %v1319 = vsub.s32 0, %v1318
        %v1320 = vrot.slane %v1011, %v1319
        %v1321 = vlaneseq
        %v1322 = vshrl.u32 %v1321, 7
        %v1323 = vsub.s32 0, %v1322
        %v1324 = vrot.slane %v994, %v1323
        %v1325 = vlaneseq
        %v1326 = vshrl.u32 %v1325, 7
        %v1327 = vsub.s32 0, %v1326
        %v1328 = vrot.slane %v1008, %v1327
        %v1329 = vlaneseq
        %v1330 = vshrl.u32 %v1329, 7
        %v1331 = vsub.s32 0, %v1330
        %v1332 = vrot.slane %v1010, %v1331
        %v1333 = vlaneseq
        %v1334 = vshrl.u32 %v1333, 7
        %v1335 = vsub.s32 0, %v1334
        %v1336 = vrot.slane %v1012, %v1335
        %v1337 = vlaneseq
        %v1338 = vshrl.u32 %v1337, 7
        %v1339 = vsub.s32 0, %v1338
        %v1340 = vrot.slane %v1036, %v1339
        %v1341 = vlaneseq
        %v1342 = vshrl.u32 %v1341, 7
        %v1343 = vsub.s32 0, %v1342
        %v1344 = vrot.slane %v1050, %v1343
        %v1345 = vlaneseq
        %v1346 = vshrl.u32 %v1345, 7
        %v1347 = vsub.s32 0, %v1346
        %v1348 = vrot.slane %v1058, %v1347
        %v1349 = vlaneseq
        %v1350 = vshrl.u32 %v1349, 7
        %v1351 = vsub.s32 0, %v1350
        %v1352 = vrot.slane %v1060, %v1351
        %v1353 = vlaneseq
        %v1354 = vshrl.u32 %v1353, 7
        %v1355 = vsub.s32 0, %v1354
        %v1356 = vrot.slane %v1043, %v1355
        %v1357 = vlaneseq
        %v1358 = vshrl.u32 %v1357, 7
        %v1359 = vsub.s32 0, %v1358
        %v1360 = vrot.slane %v1057, %v1359
        %v1361 = vlaneseq
        %v1362 = vshrl.u32 %v1361, 7
        %v1363 = vsub.s32 0, %v1362
        %v1364 = vrot.slane %v1059, %v1363
        %v1365 = vlaneseq
        %v1366 = vshrl.u32 %v1365, 7
        %v1367 = vsub.s32 0, %v1366
        %v1368 = vrot.slane %v1061, %v1367
        %v1369 = vlaneseq
        %v1370 = vshrl.u32 %v1369, 7
        %v1371 = vsub.s32 0, %v1370
        %v1372 = vrot.slane %v1085, %v1371
        %v1373 = vlaneseq
        %v1374 = vshrl.u32 %v1373, 7
        %v1375 = vsub.s32 0, %v1374
        %v1376 = vrot.slane %v1099, %v1375
        %v1377 = vlaneseq
        %v1378 = vshrl.u32 %v1377, 7
        %v1379 = vsub.s32 0, %v1378
        %v1380 = vrot.slane %v1107, %v1379
        %v1381 = vlaneseq
        %v1382 = vshrl.u32 %v1381, 7
        %v1383 = vsub.s32 0, %v1382
        %v1384 = vrot.slane %v1109, %v1383
        %v1385 = vlaneseq
        %v1386 = vshrl.u32 %v1385, 7
        %v1387 = vsub.s32 0, %v1386
        %v1388 = vrot.slane %v1092, %v1387
        %v1389 = vlaneseq
        %v1390 = vshrl.u32 %v1389, 7
        %v1391 = vsub.s32 0, %v1390
        %v1392 = vrot.slane %v1106, %v1391
        %v1393 = vlaneseq
        %v1394 = vshrl.u32 %v1393, 7
        %v1395 = vsub.s32 0, %v1394
        %v1396 = vrot.slane %v1108, %v1395
        %v1397 = vlaneseq
        %v1398 = vshrl.u32 %v1397, 7
        %v1399 = vsub.s32 0, %v1398
        %v1400 = vrot.slane %v1110, %v1399
        %v1401 = vlaneseq
        %v1402 = vshrl.u32 %v1401, 7
        %v1403 = vsub.s32 0, %v1402
        %v1404 = vrot.slane %v1134, %v1403
        %v1405 = vlaneseq
        %v1406 = vshrl.u32 %v1405, 7
        %v1407 = vsub.s32 0, %v1406
        %v1408 = vrot.slane %v1148, %v1407
        %v1409 = vlaneseq
        %v1410 = vshrl.u32 %v1409, 7
        %v1411 = vsub.s32 0, %v1410
        %v1412 = vrot.slane %v1156, %v1411
        %v1413 = vlaneseq
        %v1414 = vshrl.u32 %v1413, 7
        %v1415 = vsub.s32 0, %v1414
        %v1416 = vrot.slane %v1158, %v1415
        %v1417 = vlaneseq
        %v1418 = vshrl.u32 %v1417, 7
        %v1419 = vsub.s32 0, %v1418
        %v1420 = vrot.slane %v1141, %v1419
        %v1421 = vlaneseq
        %v1422 = vshrl.u32 %v1421, 7
        %v1423 = vsub.s32 0, %v1422
        %v1424 = vrot.slane %v1155, %v1423
        %v1425 = vlaneseq
        %v1426 = vshrl.u32 %v1425, 7
        %v1427 = vsub.s32 0, %v1426
        %v1428 = vrot.slane %v1157, %v1427
        %v1429 = vlaneseq
        %v1430 = vshrl.u32 %v1429, 7
        %v1431 = vsub.s32 0, %v1430
        %v1432 = vrot.slane %v1159, %v1431
        %v1433 = vlaneseq
        %v1434 = vshrl.u32 %v1433, 7
        %v1435 = vsub.s32 0, %v1434
        %v1436 = vrot.slane %v1183, %v1435
        %v1437 = vlaneseq
        %v1438 = vshrl.u32 %v1437, 7
        %v1439 = vsub.s32 0, %v1438
        %v1440 = vrot.slane %v1197, %v1439
        %v1441 = vlaneseq
        %v1442 = vshrl.u32 %v1441, 7
        %v1443 = vsub.s32 0, %v1442
        %v1444 = vrot.slane %v1205, %v1443
        %v1445 = vlaneseq
        %v1446 = vshrl.u32 %v1445, 7
        %v1447 = vsub.s32 0, %v1446
        %v1448 = vrot.slane %v1207, %v1447
        %v1449 = vlaneseq
        %v1450 = vshrl.u32 %v1449, 7
        %v1451 = vsub.s32 0, %v1450
        %v1452 = vrot.slane %v1190, %v1451
        %v1453 = vlaneseq
        %v1454 = vshrl.u32 %v1453, 7
        %v1455 = vsub.s32 0, %v1454
        %v1456 = vrot.slane %v1204, %v1455
        %v1457 = vlaneseq
        %v1458 = vshrl.u32 %v1457, 7
        %v1459 = vsub.s32 0, %v1458
        %v1460 = vrot.slane %v1206, %v1459
        %v1461 = vlaneseq
        %v1462 = vshrl.u32 %v1461, 7
        %v1463 = vsub.s32 0, %v1462
        %v1464 = vrot.slane %v1208, %v1463
        %v1529 = vmul.f32 %v1212, %v801
        %v1530 = vmul.f32 %v1216, %v802
        %v1531 = vmul.f32 %v1220, %v803
        %v1532 = vmul.f32 %v1224, %v804
        %v1533 = vmul.f32 %v1228, %v805
        %v1534 = vmul.f32 %v1232, %v806
        %v1535 = vmul.f32 %v1236, %v807
        %v1536 = vmul.f32 %v1240, %v808
        %v1537 = vmul.f32 %v1244, %v801
        %v1538 = vmul.f32 %v1248, %v802
        %v1539 = vmul.f32 %v1252, %v803
        %v1540 = vmul.f32 %v1256, %v804
        %v1541 = vmul.f32 %v1260, %v805
        %v1542 = vmul.f32 %v1264, %v806
        %v1543 = vmul.f32 %v1268, %v807
        %v1544 = vmul.f32 %v1272, %v808
        %v1545 = vmul.f32 %v1276, %v801
        %v1546 = vmul.f32 %v1280, %v802
        %v1547 = vmul.f32 %v1284, %v803
        %v1548 = vmul.f32 %v1288, %v804
        %v1549 = vmul.f32 %v1292, %v805
        %v1550 = vmul.f32 %v1296, %v806
        %v1551 = vmul.f32 %v1300, %v807
        %v1552 = vmul.f32 %v1304, %v808
        %v1553 = vmul.f32 %v1308, %v801
        %v1554 = vmul.f32 %v1312, %v802
        %v1555 = vmul.f32 %v1316, %v803
        %v1556 = vmul.f32 %v1320, %v804
        %v1557 = vmul.f32 %v1324, %v805
        %v1558 = vmul.f32 %v1328, %v806
        %v1559 = vmul.f32 %v1332, %v807
        %v1560 = vmul.f32 %v1336, %v808
        %v1561 = vmul.f32 %v1340, %v801
        %v1562 = vmul.f32 %v1344, %v802
        %v1563 = vmul.f32 %v1348, %v803
        %v1564 = vmul.f32 %v1352, %v804
        %v1565 = vmul.f32 %v1356, %v805
        %v1566 = vmul.f32 %v1360, %v806
        %v1567 = vmul.f32 %v1364, %v807
        %v1568 = vmul.f32 %v1368, %v808
        %v1569 = vmul.f32 %v1372, %v801
        %v1570 = vmul.f32 %v1376, %v802
        %v1571 = vmul.f32 %v1380, %v803
        %v1572 = vmul.f32 %v1384, %v804
        %v1573 = vmul.f32 %v1388, %v805
        %v1574 = vmul.f32 %v1392, %v806
        %v1575 = vmul.f32 %v1396, %v807
        %v1576 = vmul.f32 %v1400, %v808
        %v1577 = vmul.f32 %v1404, %v801
        %v1578 = vmul.f32 %v1408, %v802
        %v1579 = vmul.f32 %v1412, %v803
        %v1580 = vmul.f32 %v1416, %v804
        %v1581 = vmul.f32 %v1420, %v805
        %v1582 = vmul.f32 %v1424, %v806
        %v1583 = vmul.f32 %v1428, %v807
        %v1584 = vmul.f32 %v1432, %v808
        %v1585 = vmul.f32 %v1436, %v801
        %v1586 = vmul.f32 %v1440, %v802
        %v1587 = vmul.f32 %v1444, %v803
        %v1588 = vmul.f32 %v1448, %v804
        %v1589 = vmul.f32 %v1452, %v805
        %v1590 = vmul.f32 %v1456, %v806
        %v1591 = vmul.f32 %v1460, %v807
        %v1592 = vmul.f32 %v1464, %v808
        %vm1593 = vcmask 64512
        %v1594 = vsel %vm1593, %v1529, 0.0
        %1595 = vadd.xlane.f32.xlu0 %v1594
        %v1596 = vpop.xlane.xlu0 %1595
        %v1597 = vsel %vm1593, %v1530, 0.0
        %1598 = vadd.xlane.f32.xlu0 %v1597
        %v1599 = vpop.xlane.xlu0 %1598
        %v1600 = vsel %vm1593, %v1531, 0.0
        %1601 = vadd.xlane.f32.xlu0 %v1600
        %v1602 = vpop.xlane.xlu0 %1601
        %v1603 = vsel %vm1593, %v1532, 0.0
        %1604 = vadd.xlane.f32.xlu0 %v1603
        %v1605 = vpop.xlane.xlu0 %1604
        %v1606 = vsel %vm1593, %v1533, 0.0
        %1607 = vadd.xlane.f32.xlu0 %v1606
        %v1608 = vpop.xlane.xlu0 %1607
        %v1609 = vsel %vm1593, %v1534, 0.0
        %1610 = vadd.xlane.f32.xlu0 %v1609
        %v1611 = vpop.xlane.xlu0 %1610
        %v1612 = vsel %vm1593, %v1535, 0.0
        %1613 = vadd.xlane.f32.xlu0 %v1612
        %v1614 = vpop.xlane.xlu0 %1613
        %v1615 = vsel %vm1593, %v1536, 0.0
        %1616 = vadd.xlane.f32.xlu0 %v1615
        %v1617 = vpop.xlane.xlu0 %1616
        %v1618 = vsel %vm1593, %v1537, 0.0
        %1619 = vadd.xlane.f32.xlu0 %v1618
        %v1620 = vpop.xlane.xlu0 %1619
        %v1621 = vsel %vm1593, %v1538, 0.0
        %1622 = vadd.xlane.f32.xlu0 %v1621
        %v1623 = vpop.xlane.xlu0 %1622
        %v1624 = vsel %vm1593, %v1539, 0.0
        %1625 = vadd.xlane.f32.xlu0 %v1624
        %v1626 = vpop.xlane.xlu0 %1625
        %v1627 = vsel %vm1593, %v1540, 0.0
        %1628 = vadd.xlane.f32.xlu0 %v1627
        %v1629 = vpop.xlane.xlu0 %1628
        %v1630 = vsel %vm1593, %v1541, 0.0
        %1631 = vadd.xlane.f32.xlu0 %v1630
        %v1632 = vpop.xlane.xlu0 %1631
        %v1633 = vsel %vm1593, %v1542, 0.0
        %1634 = vadd.xlane.f32.xlu0 %v1633
        %v1635 = vpop.xlane.xlu0 %1634
        %v1636 = vsel %vm1593, %v1543, 0.0
        %1637 = vadd.xlane.f32.xlu0 %v1636
        %v1638 = vpop.xlane.xlu0 %1637
        %v1639 = vsel %vm1593, %v1544, 0.0
        %1640 = vadd.xlane.f32.xlu0 %v1639
        %v1641 = vpop.xlane.xlu0 %1640
        %v1642 = vsel %vm1593, %v1545, 0.0
        %1643 = vadd.xlane.f32.xlu0 %v1642
        %v1644 = vpop.xlane.xlu0 %1643
        %v1645 = vsel %vm1593, %v1546, 0.0
        %1646 = vadd.xlane.f32.xlu0 %v1645
        %v1647 = vpop.xlane.xlu0 %1646
        %v1648 = vsel %vm1593, %v1547, 0.0
        %1649 = vadd.xlane.f32.xlu0 %v1648
        %v1650 = vpop.xlane.xlu0 %1649
        %v1651 = vsel %vm1593, %v1548, 0.0
        %1652 = vadd.xlane.f32.xlu0 %v1651
        %v1653 = vpop.xlane.xlu0 %1652
        %v1654 = vsel %vm1593, %v1549, 0.0
        %1655 = vadd.xlane.f32.xlu0 %v1654
        %v1656 = vpop.xlane.xlu0 %1655
        %v1657 = vsel %vm1593, %v1550, 0.0
        %1658 = vadd.xlane.f32.xlu0 %v1657
        %v1659 = vpop.xlane.xlu0 %1658
        %v1660 = vsel %vm1593, %v1551, 0.0
        %1661 = vadd.xlane.f32.xlu0 %v1660
        %v1662 = vpop.xlane.xlu0 %1661
        %v1663 = vsel %vm1593, %v1552, 0.0
        %1664 = vadd.xlane.f32.xlu0 %v1663
        %v1665 = vpop.xlane.xlu0 %1664
        %v1666 = vsel %vm1593, %v1553, 0.0
        %1667 = vadd.xlane.f32.xlu0 %v1666
        %v1668 = vpop.xlane.xlu0 %1667
        %v1669 = vsel %vm1593, %v1554, 0.0
        %1670 = vadd.xlane.f32.xlu0 %v1669
        %v1671 = vpop.xlane.xlu0 %1670
        %v1672 = vsel %vm1593, %v1555, 0.0
        %1673 = vadd.xlane.f32.xlu0 %v1672
        %v1674 = vpop.xlane.xlu0 %1673
        %v1675 = vsel %vm1593, %v1556, 0.0
        %1676 = vadd.xlane.f32.xlu0 %v1675
        %v1677 = vpop.xlane.xlu0 %1676
        %v1678 = vsel %vm1593, %v1557, 0.0
        %1679 = vadd.xlane.f32.xlu0 %v1678
        %v1680 = vpop.xlane.xlu0 %1679
        %v1681 = vsel %vm1593, %v1558, 0.0
        %1682 = vadd.xlane.f32.xlu0 %v1681
        %v1683 = vpop.xlane.xlu0 %1682
        %v1684 = vsel %vm1593, %v1559, 0.0
        %1685 = vadd.xlane.f32.xlu0 %v1684
        %v1686 = vpop.xlane.xlu0 %1685
        %v1687 = vsel %vm1593, %v1560, 0.0
        %1688 = vadd.xlane.f32.xlu0 %v1687
        %v1689 = vpop.xlane.xlu0 %1688
        %v1690 = vsel %vm1593, %v1561, 0.0
        %1691 = vadd.xlane.f32.xlu0 %v1690
        %v1692 = vpop.xlane.xlu0 %1691
        %v1693 = vsel %vm1593, %v1562, 0.0
        %1694 = vadd.xlane.f32.xlu0 %v1693
        %v1695 = vpop.xlane.xlu0 %1694
        %v1696 = vsel %vm1593, %v1563, 0.0
        %1697 = vadd.xlane.f32.xlu0 %v1696
        %v1698 = vpop.xlane.xlu0 %1697
        %v1699 = vsel %vm1593, %v1564, 0.0
        %1700 = vadd.xlane.f32.xlu0 %v1699
        %v1701 = vpop.xlane.xlu0 %1700
        %v1702 = vsel %vm1593, %v1565, 0.0
        %1703 = vadd.xlane.f32.xlu0 %v1702
        %v1704 = vpop.xlane.xlu0 %1703
        %v1705 = vsel %vm1593, %v1566, 0.0
        %1706 = vadd.xlane.f32.xlu0 %v1705
        %v1707 = vpop.xlane.xlu0 %1706
        %v1708 = vsel %vm1593, %v1567, 0.0
        %1709 = vadd.xlane.f32.xlu0 %v1708
        %v1710 = vpop.xlane.xlu0 %1709
        %v1711 = vsel %vm1593, %v1568, 0.0
        %1712 = vadd.xlane.f32.xlu0 %v1711
        %v1713 = vpop.xlane.xlu0 %1712
        %v1714 = vsel %vm1593, %v1569, 0.0
        %1715 = vadd.xlane.f32.xlu0 %v1714
        %v1716 = vpop.xlane.xlu0 %1715
        %v1717 = vsel %vm1593, %v1570, 0.0
        %1718 = vadd.xlane.f32.xlu0 %v1717
        %v1719 = vpop.xlane.xlu0 %1718
        %v1720 = vsel %vm1593, %v1571, 0.0
        %1721 = vadd.xlane.f32.xlu0 %v1720
        %v1722 = vpop.xlane.xlu0 %1721
        %v1723 = vsel %vm1593, %v1572, 0.0
        %1724 = vadd.xlane.f32.xlu0 %v1723
        %v1725 = vpop.xlane.xlu0 %1724
        %v1726 = vsel %vm1593, %v1573, 0.0
        %1727 = vadd.xlane.f32.xlu0 %v1726
        %v1728 = vpop.xlane.xlu0 %1727
        %v1729 = vsel %vm1593, %v1574, 0.0
        %1730 = vadd.xlane.f32.xlu0 %v1729
        %v1731 = vpop.xlane.xlu0 %1730
        %v1732 = vsel %vm1593, %v1575, 0.0
        %1733 = vadd.xlane.f32.xlu0 %v1732
        %v1734 = vpop.xlane.xlu0 %1733
        %v1735 = vsel %vm1593, %v1576, 0.0
        %1736 = vadd.xlane.f32.xlu0 %v1735
        %v1737 = vpop.xlane.xlu0 %1736
        %v1738 = vsel %vm1593, %v1577, 0.0
        %1739 = vadd.xlane.f32.xlu0 %v1738
        %v1740 = vpop.xlane.xlu0 %1739
        %v1741 = vsel %vm1593, %v1578, 0.0
        %1742 = vadd.xlane.f32.xlu0 %v1741
        %v1743 = vpop.xlane.xlu0 %1742
        %v1744 = vsel %vm1593, %v1579, 0.0
        %1745 = vadd.xlane.f32.xlu0 %v1744
        %v1746 = vpop.xlane.xlu0 %1745
        %v1747 = vsel %vm1593, %v1580, 0.0
        %1748 = vadd.xlane.f32.xlu0 %v1747
        %v1749 = vpop.xlane.xlu0 %1748
        %v1750 = vsel %vm1593, %v1581, 0.0
        %1751 = vadd.xlane.f32.xlu0 %v1750
        %v1752 = vpop.xlane.xlu0 %1751
        %v1753 = vsel %vm1593, %v1582, 0.0
        %1754 = vadd.xlane.f32.xlu0 %v1753
        %v1755 = vpop.xlane.xlu0 %1754
        %v1756 = vsel %vm1593, %v1583, 0.0
        %1757 = vadd.xlane.f32.xlu0 %v1756
        %v1758 = vpop.xlane.xlu0 %1757
        %v1759 = vsel %vm1593, %v1584, 0.0
        %1760 = vadd.xlane.f32.xlu0 %v1759
        %v1761 = vpop.xlane.xlu0 %1760
        %v1762 = vsel %vm1593, %v1585, 0.0
        %1763 = vadd.xlane.f32.xlu0 %v1762
        %v1764 = vpop.xlane.xlu0 %1763
        %v1765 = vsel %vm1593, %v1586, 0.0
        %1766 = vadd.xlane.f32.xlu0 %v1765
        %v1767 = vpop.xlane.xlu0 %1766
        %v1768 = vsel %vm1593, %v1587, 0.0
        %1769 = vadd.xlane.f32.xlu0 %v1768
        %v1770 = vpop.xlane.xlu0 %1769
        %v1771 = vsel %vm1593, %v1588, 0.0
        %1772 = vadd.xlane.f32.xlu0 %v1771
        %v1773 = vpop.xlane.xlu0 %1772
        %v1774 = vsel %vm1593, %v1589, 0.0
        %1775 = vadd.xlane.f32.xlu0 %v1774
        %v1776 = vpop.xlane.xlu0 %1775
        %v1777 = vsel %vm1593, %v1590, 0.0
        %1778 = vadd.xlane.f32.xlu0 %v1777
        %v1779 = vpop.xlane.xlu0 %1778
        %v1780 = vsel %vm1593, %v1591, 0.0
        %1781 = vadd.xlane.f32.xlu0 %v1780
        %v1782 = vpop.xlane.xlu0 %1781
        %v1783 = vsel %vm1593, %v1592, 0.0
        %1784 = vadd.xlane.f32.xlu0 %v1783
        %v1785 = vpop.xlane.xlu0 %1784
        %1786 = vrot.lane.b32.xlu0 %v779, 96
        %v1787 = vpop.permute.xlu0 %1786
        %v1796 = vlaneseq
        %v1797 = vand.u32 %v1796, 127
        %v1798 = vlaneseq
        %v1799 = vshrl.u32 %v1798, 7
        %v1800 = vsub.s32 %v1797, %v1799
        %v1801 = vrot.slane %v1596, %v1800
        %v1802 = vlaneseq
        %v1803 = vshrl.u32 %v1802, 7
        %v1804 = vsub.s32 %v1797, %v1803
        %v1805 = vrot.slane %v1599, %v1804
        %v1806 = vlaneseq
        %v1807 = vshrl.u32 %v1806, 7
        %v1808 = vsub.s32 %v1797, %v1807
        %v1809 = vrot.slane %v1602, %v1808
        %v1810 = vlaneseq
        %v1811 = vshrl.u32 %v1810, 7
        %v1812 = vsub.s32 %v1797, %v1811
        %v1813 = vrot.slane %v1605, %v1812
        %v1814 = vlaneseq
        %v1815 = vshrl.u32 %v1814, 7
        %v1816 = vsub.s32 %v1797, %v1815
        %v1817 = vrot.slane %v1608, %v1816
        %v1818 = vlaneseq
        %v1819 = vshrl.u32 %v1818, 7
        %v1820 = vsub.s32 %v1797, %v1819
        %v1821 = vrot.slane %v1611, %v1820
        %v1822 = vlaneseq
        %v1823 = vshrl.u32 %v1822, 7
        %v1824 = vsub.s32 %v1797, %v1823
        %v1825 = vrot.slane %v1614, %v1824
        %v1826 = vlaneseq
        %v1827 = vshrl.u32 %v1826, 7
        %v1828 = vsub.s32 %v1797, %v1827
        %v1829 = vrot.slane %v1617, %v1828
        %vm1830 = vcmask 1041409
        %v1831 = vsel %vm1830, %v1805, %v1801
        %vm1832 = vcmask 1042434
        %v1833 = vsel %vm1832, %v1809, %v1831
        %vm1834 = vcmask 1043459
        %v1835 = vsel %vm1834, %v1813, %v1833
        %vm1836 = vcmask 1044484
        %v1837 = vsel %vm1836, %v1817, %v1835
        %vm1838 = vcmask 1045509
        %v1839 = vsel %vm1838, %v1821, %v1837
        %vm1840 = vcmask 1046534
        %v1841 = vsel %vm1840, %v1825, %v1839
        %vm1842 = vcmask 1047559
        %v1843 = vsel %vm1842, %v1829, %v1841
        %v1845 = vsel %vm1593, %v779, 0
        %v1847 = vsel %vm1593, %v1787, 0
        %1849 = vmatprep.subr.mxu0 0.0
        %1850 = vmatpush1.xpose.msra.mxu0 %v1847
        %1851 = vmatprep.subr.mxu0 0.0
        %1852 = vmatpush1.xpose.msra.mxu0 0.0
        %1853 = vmatprep.subr.mxu0 0.0
        %1854 = vmatpush1.xpose.msra.mxu0 0.0
        %1855 = vmatprep.subr.mxu0 0.0
        %1856 = vmatpush1.xpose.msra.mxu0 0.0
        %1857 = vmatprep.subr.mxu0 0.0
        %1858 = vmatpush1.xpose.msra.mxu0 0.0
        %1859 = vmatprep.subr.mxu0 0.0
        %1860 = vmatpush1.xpose.msra.mxu0 0.0
        %1861 = vmatprep.subr.mxu0 0.0
        %1862 = vmatpush1.xpose.msra.mxu0 0.0
        %1863 = vmatprep.subr.mxu0 0.0
        %1864 = vmatpush1.xpose.msra.mxu0 0.0
        %1865 = vmatprep.subr.mxu0 0.0
        %1866 = vmatpush1.xpose.msra.mxu0 0.0
        %1867 = vmatprep.subr.mxu0 0.0
        %1868 = vmatpush1.xpose.msra.mxu0 0.0
        %1869 = vmatprep.subr.mxu0 0.0
        %1870 = vmatpush1.xpose.msra.mxu0 0.0
        %1871 = vmatprep.subr.mxu0 0.0
        %1872 = vmatpush1.xpose.msra.mxu0 0.0
        %1873 = vmatprep.subr.mxu0 0.0
        %1874 = vmatpush1.xpose.msra.mxu0 0.0
        %1875 = vmatprep.subr.mxu0 0.0
        %1876 = vmatpush1.xpose.msra.mxu0 0.0
        %1877 = vmatprep.subr.mxu0 0.0
        %1878 = vmatpush1.xpose.msra.mxu0 0.0
        %1879 = vmatprep.subr.mxu0 0.0
        %1880 = vmatpush1.xpose.msra.mxu0 0.0
        %1881 = vmatprep.subr.mxu0 0.0
        %1882 = vmatpush1.xpose.msra.mxu0 0.0
        %1883 = vmatprep.subr.mxu0 0.0
        %1884 = vmatpush1.xpose.msra.mxu0 0.0
        %1885 = vmatprep.subr.mxu0 0.0
        %1886 = vmatpush1.xpose.msra.mxu0 0.0
        %1887 = vmatprep.subr.mxu0 0.0
        %1888 = vmatpush1.xpose.msra.mxu0 0.0
        %1889 = vmatprep.subr.mxu0 0.0
        %1890 = vmatpush1.xpose.msra.mxu0 0.0
        %1891 = vmatprep.subr.mxu0 0.0
        %1892 = vmatpush1.xpose.msra.mxu0 0.0
        %1893 = vmatprep.subr.mxu0 0.0
        %1894 = vmatpush1.xpose.msra.mxu0 0.0
        %1895 = vmatprep.subr.mxu0 0.0
        %1896 = vmatpush1.xpose.msra.mxu0 0.0
        %1897 = vmatprep.subr.mxu0 0.0
        %1898 = vmatpush1.xpose.msra.mxu0 0.0
        %1899 = vmatprep.subr.mxu0 0.0
        %1900 = vmatpush1.xpose.msra.mxu0 0.0
        %1901 = vmatprep.subr.mxu0 0.0
        %1902 = vmatpush1.xpose.msra.mxu0 0.0
        %1903 = vmatprep.subr.mxu0 0.0
        %1904 = vmatpush1.xpose.msra.mxu0 0.0
        %1905 = vmatprep.subr.mxu0 0.0
        %1906 = vmatpush1.xpose.msra.mxu0 0.0
        %1907 = vmatprep.subr.mxu0 0.0
        %1908 = vmatpush1.xpose.msra.mxu0 0.0
        %1909 = vmatprep.subr.mxu0 0.0
        %1910 = vmatpush1.xpose.msra.mxu0 0.0
        %1911 = vmatprep.subr.mxu0 0.0
        %1912 = vmatpush1.xpose.msra.mxu0 0.0
        %1913 = vmatprep.mubr.f32.mxu0 0.0
        %1914 = vmatmul.mubr.f32.gmra.mrb[0].mxu0 %v1845
        %v1915 = vpop.f32.mrb[0].mxu0
        %v1916 = vadd.f32 %v1843, %v1915
        %v1917 = vpop.f32.mrb[0].mxu0
        %1918 = vdwg.mxu0
        %1919 = vrot.lane.b32.xlu0 %v784, 96
        %v1920 = vpop.permute.xlu0 %1919
        %v1929 = vlaneseq
        %v1930 = vshrl.u32 %v1929, 7
        %v1931 = vsub.s32 %v1797, %v1930
        %v1932 = vrot.slane %v1620, %v1931
        %v1933 = vlaneseq
        %v1934 = vshrl.u32 %v1933, 7
        %v1935 = vsub.s32 %v1797, %v1934
        %v1936 = vrot.slane %v1623, %v1935
        %v1937 = vlaneseq
        %v1938 = vshrl.u32 %v1937, 7
        %v1939 = vsub.s32 %v1797, %v1938
        %v1940 = vrot.slane %v1626, %v1939
        %v1941 = vlaneseq
        %v1942 = vshrl.u32 %v1941, 7
        %v1943 = vsub.s32 %v1797, %v1942
        %v1944 = vrot.slane %v1629, %v1943
        %v1945 = vlaneseq
        %v1946 = vshrl.u32 %v1945, 7
        %v1947 = vsub.s32 %v1797, %v1946
        %v1948 = vrot.slane %v1632, %v1947
        %v1949 = vlaneseq
        %v1950 = vshrl.u32 %v1949, 7
        %v1951 = vsub.s32 %v1797, %v1950
        %v1952 = vrot.slane %v1635, %v1951
        %v1953 = vlaneseq
        %v1954 = vshrl.u32 %v1953, 7
        %v1955 = vsub.s32 %v1797, %v1954
        %v1956 = vrot.slane %v1638, %v1955
        %v1957 = vlaneseq
        %v1958 = vshrl.u32 %v1957, 7
        %v1959 = vsub.s32 %v1797, %v1958
        %v1960 = vrot.slane %v1641, %v1959
        %v1961 = vsel %vm1830, %v1936, %v1932
        %v1962 = vsel %vm1832, %v1940, %v1961
        %v1963 = vsel %vm1834, %v1944, %v1962
        %v1964 = vsel %vm1836, %v1948, %v1963
        %v1965 = vsel %vm1838, %v1952, %v1964
        %v1966 = vsel %vm1840, %v1956, %v1965
        %v1967 = vsel %vm1842, %v1960, %v1966
        %v1969 = vsel %vm1593, %v784, 0
        %v1971 = vsel %vm1593, %v1920, 0
        %1973 = vmatprep.subr.mxu0 0.0
        %1974 = vmatpush1.xpose.msra.mxu0 %v1971
        %1975 = vmatprep.subr.mxu0 0.0
        %1976 = vmatpush1.xpose.msra.mxu0 0.0
        %1977 = vmatprep.subr.mxu0 0.0
        %1978 = vmatpush1.xpose.msra.mxu0 0.0
        %1979 = vmatprep.subr.mxu0 0.0
        %1980 = vmatpush1.xpose.msra.mxu0 0.0
        %1981 = vmatprep.subr.mxu0 0.0
        %1982 = vmatpush1.xpose.msra.mxu0 0.0
        %1983 = vmatprep.subr.mxu0 0.0
        %1984 = vmatpush1.xpose.msra.mxu0 0.0
        %1985 = vmatprep.subr.mxu0 0.0
        %1986 = vmatpush1.xpose.msra.mxu0 0.0
        %1987 = vmatprep.subr.mxu0 0.0
        %1988 = vmatpush1.xpose.msra.mxu0 0.0
        %1989 = vmatprep.subr.mxu0 0.0
        %1990 = vmatpush1.xpose.msra.mxu0 0.0
        %1991 = vmatprep.subr.mxu0 0.0
        %1992 = vmatpush1.xpose.msra.mxu0 0.0
        %1993 = vmatprep.subr.mxu0 0.0
        %1994 = vmatpush1.xpose.msra.mxu0 0.0
        %1995 = vmatprep.subr.mxu0 0.0
        %1996 = vmatpush1.xpose.msra.mxu0 0.0
        %1997 = vmatprep.subr.mxu0 0.0
        %1998 = vmatpush1.xpose.msra.mxu0 0.0
        %1999 = vmatprep.subr.mxu0 0.0
        %2000 = vmatpush1.xpose.msra.mxu0 0.0
        %2001 = vmatprep.subr.mxu0 0.0
        %2002 = vmatpush1.xpose.msra.mxu0 0.0
        %2003 = vmatprep.subr.mxu0 0.0
        %2004 = vmatpush1.xpose.msra.mxu0 0.0
        %2005 = vmatprep.subr.mxu0 0.0
        %2006 = vmatpush1.xpose.msra.mxu0 0.0
        %2007 = vmatprep.subr.mxu0 0.0
        %2008 = vmatpush1.xpose.msra.mxu0 0.0
        %2009 = vmatprep.subr.mxu0 0.0
        %2010 = vmatpush1.xpose.msra.mxu0 0.0
        %2011 = vmatprep.subr.mxu0 0.0
        %2012 = vmatpush1.xpose.msra.mxu0 0.0
        %2013 = vmatprep.subr.mxu0 0.0
        %2014 = vmatpush1.xpose.msra.mxu0 0.0
        %2015 = vmatprep.subr.mxu0 0.0
        %2016 = vmatpush1.xpose.msra.mxu0 0.0
        %2017 = vmatprep.subr.mxu0 0.0
        %2018 = vmatpush1.xpose.msra.mxu0 0.0
        %2019 = vmatprep.subr.mxu0 0.0
        %2020 = vmatpush1.xpose.msra.mxu0 0.0
        %2021 = vmatprep.subr.mxu0 0.0
        %2022 = vmatpush1.xpose.msra.mxu0 0.0
        %2023 = vmatprep.subr.mxu0 0.0
        %2024 = vmatpush1.xpose.msra.mxu0 0.0
        %2025 = vmatprep.subr.mxu0 0.0
        %2026 = vmatpush1.xpose.msra.mxu0 0.0
        %2027 = vmatprep.subr.mxu0 0.0
        %2028 = vmatpush1.xpose.msra.mxu0 0.0
        %2029 = vmatprep.subr.mxu0 0.0
        %2030 = vmatpush1.xpose.msra.mxu0 0.0
        %2031 = vmatprep.subr.mxu0 0.0
        %2032 = vmatpush1.xpose.msra.mxu0 0.0
        %2033 = vmatprep.subr.mxu0 0.0
        %2034 = vmatpush1.xpose.msra.mxu0 0.0
        %2035 = vmatprep.subr.mxu0 0.0
        %2036 = vmatpush1.xpose.msra.mxu0 0.0
        %2037 = vmatprep.mubr.f32.mxu0 0.0
        %2038 = vmatmul.mubr.f32.gmra.mrb[0].mxu0 %v1969
        %v2039 = vpop.f32.mrb[0].mxu0
        %v2040 = vadd.f32 %v1967, %v2039
        %v2041 = vpop.f32.mrb[0].mxu0
        %2042 = vdwg.mxu0
        %2043 = vrot.lane.b32.xlu0 %v789, 96
        %v2044 = vpop.permute.xlu0 %2043
        %v2053 = vlaneseq
        %v2054 = vshrl.u32 %v2053, 7
        %v2055 = vsub.s32 %v1797, %v2054
        %v2056 = vrot.slane %v1644, %v2055
        %v2057 = vlaneseq
        %v2058 = vshrl.u32 %v2057, 7
        %v2059 = vsub.s32 %v1797, %v2058
        %v2060 = vrot.slane %v1647, %v2059
        %v2061 = vlaneseq
        %v2062 = vshrl.u32 %v2061, 7
        %v2063 = vsub.s32 %v1797, %v2062
        %v2064 = vrot.slane %v1650, %v2063
        %v2065 = vlaneseq
        %v2066 = vshrl.u32 %v2065, 7
        %v2067 = vsub.s32 %v1797, %v2066
        %v2068 = vrot.slane %v1653, %v2067
        %v2069 = vlaneseq
        %v2070 = vshrl.u32 %v2069, 7
        %v2071 = vsub.s32 %v1797, %v2070
        %v2072 = vrot.slane %v1656, %v2071
        %v2073 = vlaneseq
        %v2074 = vshrl.u32 %v2073, 7
        %v2075 = vsub.s32 %v1797, %v2074
        %v2076 = vrot.slane %v1659, %v2075
        %v2077 = vlaneseq
        %v2078 = vshrl.u32 %v2077, 7
        %v2079 = vsub.s32 %v1797, %v2078
        %v2080 = vrot.slane %v1662, %v2079
        %v2081 = vlaneseq
        %v2082 = vshrl.u32 %v2081, 7
        %v2083 = vsub.s32 %v1797, %v2082
        %v2084 = vrot.slane %v1665, %v2083
        %v2085 = vsel %vm1830, %v2060, %v2056
        %v2086 = vsel %vm1832, %v2064, %v2085
        %v2087 = vsel %vm1834, %v2068, %v2086
        %v2088 = vsel %vm1836, %v2072, %v2087
        %v2089 = vsel %vm1838, %v2076, %v2088
        %v2090 = vsel %vm1840, %v2080, %v2089
        %v2091 = vsel %vm1842, %v2084, %v2090
        %v2093 = vsel %vm1593, %v789, 0
        %v2095 = vsel %vm1593, %v2044, 0
        %2097 = vmatprep.subr.mxu0 0.0
        %2098 = vmatpush1.xpose.msra.mxu0 %v2095
        %2099 = vmatprep.subr.mxu0 0.0
        %2100 = vmatpush1.xpose.msra.mxu0 0.0
        %2101 = vmatprep.subr.mxu0 0.0
        %2102 = vmatpush1.xpose.msra.mxu0 0.0
        %2103 = vmatprep.subr.mxu0 0.0
        %2104 = vmatpush1.xpose.msra.mxu0 0.0
        %2105 = vmatprep.subr.mxu0 0.0
        %2106 = vmatpush1.xpose.msra.mxu0 0.0
        %2107 = vmatprep.subr.mxu0 0.0
        %2108 = vmatpush1.xpose.msra.mxu0 0.0
        %2109 = vmatprep.subr.mxu0 0.0
        %2110 = vmatpush1.xpose.msra.mxu0 0.0
        %2111 = vmatprep.subr.mxu0 0.0
        %2112 = vmatpush1.xpose.msra.mxu0 0.0
        %2113 = vmatprep.subr.mxu0 0.0
        %2114 = vmatpush1.xpose.msra.mxu0 0.0
        %2115 = vmatprep.subr.mxu0 0.0
        %2116 = vmatpush1.xpose.msra.mxu0 0.0
        %2117 = vmatprep.subr.mxu0 0.0
        %2118 = vmatpush1.xpose.msra.mxu0 0.0
        %2119 = vmatprep.subr.mxu0 0.0
        %2120 = vmatpush1.xpose.msra.mxu0 0.0
        %2121 = vmatprep.subr.mxu0 0.0
        %2122 = vmatpush1.xpose.msra.mxu0 0.0
        %2123 = vmatprep.subr.mxu0 0.0
        %2124 = vmatpush1.xpose.msra.mxu0 0.0
        %2125 = vmatprep.subr.mxu0 0.0
        %2126 = vmatpush1.xpose.msra.mxu0 0.0
        %2127 = vmatprep.subr.mxu0 0.0
        %2128 = vmatpush1.xpose.msra.mxu0 0.0
        %2129 = vmatprep.subr.mxu0 0.0
        %2130 = vmatpush1.xpose.msra.mxu0 0.0
        %2131 = vmatprep.subr.mxu0 0.0
        %2132 = vmatpush1.xpose.msra.mxu0 0.0
        %2133 = vmatprep.subr.mxu0 0.0
        %2134 = vmatpush1.xpose.msra.mxu0 0.0
        %2135 = vmatprep.subr.mxu0 0.0
        %2136 = vmatpush1.xpose.msra.mxu0 0.0
        %2137 = vmatprep.subr.mxu0 0.0
        %2138 = vmatpush1.xpose.msra.mxu0 0.0
        %2139 = vmatprep.subr.mxu0 0.0
        %2140 = vmatpush1.xpose.msra.mxu0 0.0
        %2141 = vmatprep.subr.mxu0 0.0
        %2142 = vmatpush1.xpose.msra.mxu0 0.0
        %2143 = vmatprep.subr.mxu0 0.0
        %2144 = vmatpush1.xpose.msra.mxu0 0.0
        %2145 = vmatprep.subr.mxu0 0.0
        %2146 = vmatpush1.xpose.msra.mxu0 0.0
        %2147 = vmatprep.subr.mxu0 0.0
        %2148 = vmatpush1.xpose.msra.mxu0 0.0
        %2149 = vmatprep.subr.mxu0 0.0
        %2150 = vmatpush1.xpose.msra.mxu0 0.0
        %2151 = vmatprep.subr.mxu0 0.0
        %2152 = vmatpush1.xpose.msra.mxu0 0.0
        %2153 = vmatprep.subr.mxu0 0.0
        %2154 = vmatpush1.xpose.msra.mxu0 0.0
        %2155 = vmatprep.subr.mxu0 0.0
        %2156 = vmatpush1.xpose.msra.mxu0 0.0
        %2157 = vmatprep.subr.mxu0 0.0
        %2158 = vmatpush1.xpose.msra.mxu0 0.0
        %2159 = vmatprep.subr.mxu0 0.0
        %2160 = vmatpush1.xpose.msra.mxu0 0.0
        %2161 = vmatprep.mubr.f32.mxu0 0.0
        %2162 = vmatmul.mubr.f32.gmra.mrb[0].mxu0 %v2093
        %v2163 = vpop.f32.mrb[0].mxu0
        %v2164 = vadd.f32 %v2091, %v2163
        %v2165 = vpop.f32.mrb[0].mxu0
        %2166 = vdwg.mxu0
        %2167 = vrot.lane.b32.xlu0 %v792, 96
        %v2168 = vpop.permute.xlu0 %2167
        %v2177 = vlaneseq
        %v2178 = vshrl.u32 %v2177, 7
        %v2179 = vsub.s32 %v1797, %v2178
        %v2180 = vrot.slane %v1668, %v2179
        %v2181 = vlaneseq
        %v2182 = vshrl.u32 %v2181, 7
        %v2183 = vsub.s32 %v1797, %v2182
        %v2184 = vrot.slane %v1671, %v2183
        %v2185 = vlaneseq
        %v2186 = vshrl.u32 %v2185, 7
        %v2187 = vsub.s32 %v1797, %v2186
        %v2188 = vrot.slane %v1674, %v2187
        %v2189 = vlaneseq
        %v2190 = vshrl.u32 %v2189, 7
        %v2191 = vsub.s32 %v1797, %v2190
        %v2192 = vrot.slane %v1677, %v2191
        %v2193 = vlaneseq
        %v2194 = vshrl.u32 %v2193, 7
        %v2195 = vsub.s32 %v1797, %v2194
        %v2196 = vrot.slane %v1680, %v2195
        %v2197 = vlaneseq
        %v2198 = vshrl.u32 %v2197, 7
        %v2199 = vsub.s32 %v1797, %v2198
        %v2200 = vrot.slane %v1683, %v2199
        %v2201 = vlaneseq
        %v2202 = vshrl.u32 %v2201, 7
        %v2203 = vsub.s32 %v1797, %v2202
        %v2204 = vrot.slane %v1686, %v2203
        %v2205 = vlaneseq
        %v2206 = vshrl.u32 %v2205, 7
        %v2207 = vsub.s32 %v1797, %v2206
        %v2208 = vrot.slane %v1689, %v2207
        %v2209 = vsel %vm1830, %v2184, %v2180
        %v2210 = vsel %vm1832, %v2188, %v2209
        %v2211 = vsel %vm1834, %v2192, %v2210
        %v2212 = vsel %vm1836, %v2196, %v2211
        %v2213 = vsel %vm1838, %v2200, %v2212
        %v2214 = vsel %vm1840, %v2204, %v2213
        %v2215 = vsel %vm1842, %v2208, %v2214
        %v2217 = vsel %vm1593, %v792, 0
        %v2219 = vsel %vm1593, %v2168, 0
        %2221 = vmatprep.subr.mxu0 0.0
        %2222 = vmatpush1.xpose.msra.mxu0 %v2219
        %2223 = vmatprep.subr.mxu0 0.0
        %2224 = vmatpush1.xpose.msra.mxu0 0.0
        %2225 = vmatprep.subr.mxu0 0.0
        %2226 = vmatpush1.xpose.msra.mxu0 0.0
        %2227 = vmatprep.subr.mxu0 0.0
        %2228 = vmatpush1.xpose.msra.mxu0 0.0
        %2229 = vmatprep.subr.mxu0 0.0
        %2230 = vmatpush1.xpose.msra.mxu0 0.0
        %2231 = vmatprep.subr.mxu0 0.0
        %2232 = vmatpush1.xpose.msra.mxu0 0.0
        %2233 = vmatprep.subr.mxu0 0.0
        %2234 = vmatpush1.xpose.msra.mxu0 0.0
        %2235 = vmatprep.subr.mxu0 0.0
        %2236 = vmatpush1.xpose.msra.mxu0 0.0
        %2237 = vmatprep.subr.mxu0 0.0
        %2238 = vmatpush1.xpose.msra.mxu0 0.0
        %2239 = vmatprep.subr.mxu0 0.0
        %2240 = vmatpush1.xpose.msra.mxu0 0.0
        %2241 = vmatprep.subr.mxu0 0.0
        %2242 = vmatpush1.xpose.msra.mxu0 0.0
        %2243 = vmatprep.subr.mxu0 0.0
        %2244 = vmatpush1.xpose.msra.mxu0 0.0
        %2245 = vmatprep.subr.mxu0 0.0
        %2246 = vmatpush1.xpose.msra.mxu0 0.0
        %2247 = vmatprep.subr.mxu0 0.0
        %2248 = vmatpush1.xpose.msra.mxu0 0.0
        %2249 = vmatprep.subr.mxu0 0.0
        %2250 = vmatpush1.xpose.msra.mxu0 0.0
        %2251 = vmatprep.subr.mxu0 0.0
        %2252 = vmatpush1.xpose.msra.mxu0 0.0
        %2253 = vmatprep.subr.mxu0 0.0
        %2254 = vmatpush1.xpose.msra.mxu0 0.0
        %2255 = vmatprep.subr.mxu0 0.0
        %2256 = vmatpush1.xpose.msra.mxu0 0.0
        %2257 = vmatprep.subr.mxu0 0.0
        %2258 = vmatpush1.xpose.msra.mxu0 0.0
        %2259 = vmatprep.subr.mxu0 0.0
        %2260 = vmatpush1.xpose.msra.mxu0 0.0
        %2261 = vmatprep.subr.mxu0 0.0
        %2262 = vmatpush1.xpose.msra.mxu0 0.0
        %2263 = vmatprep.subr.mxu0 0.0
        %2264 = vmatpush1.xpose.msra.mxu0 0.0
        %2265 = vmatprep.subr.mxu0 0.0
        %2266 = vmatpush1.xpose.msra.mxu0 0.0
        %2267 = vmatprep.subr.mxu0 0.0
        %2268 = vmatpush1.xpose.msra.mxu0 0.0
        %2269 = vmatprep.subr.mxu0 0.0
        %2270 = vmatpush1.xpose.msra.mxu0 0.0
        %2271 = vmatprep.subr.mxu0 0.0
        %2272 = vmatpush1.xpose.msra.mxu0 0.0
        %2273 = vmatprep.subr.mxu0 0.0
        %2274 = vmatpush1.xpose.msra.mxu0 0.0
        %2275 = vmatprep.subr.mxu0 0.0
        %2276 = vmatpush1.xpose.msra.mxu0 0.0
        %2277 = vmatprep.subr.mxu0 0.0
        %2278 = vmatpush1.xpose.msra.mxu0 0.0
        %2279 = vmatprep.subr.mxu0 0.0
        %2280 = vmatpush1.xpose.msra.mxu0 0.0
        %2281 = vmatprep.subr.mxu0 0.0
        %2282 = vmatpush1.xpose.msra.mxu0 0.0
        %2283 = vmatprep.subr.mxu0 0.0
        %2284 = vmatpush1.xpose.msra.mxu0 0.0
        %2285 = vmatprep.mubr.f32.mxu0 0.0
        %2286 = vmatmul.mubr.f32.gmra.mrb[0].mxu0 %v2217
        %v2287 = vpop.f32.mrb[0].mxu0
        %v2288 = vadd.f32 %v2215, %v2287
        %v2289 = vpop.f32.mrb[0].mxu0
        %2290 = vdwg.mxu0
        %2291 = vrot.lane.b32.xlu0 %v794, 96
        %v2292 = vpop.permute.xlu0 %2291
        %v2301 = vlaneseq
        %v2302 = vshrl.u32 %v2301, 7
        %v2303 = vsub.s32 %v1797, %v2302
        %v2304 = vrot.slane %v1692, %v2303
        %v2305 = vlaneseq
        %v2306 = vshrl.u32 %v2305, 7
        %v2307 = vsub.s32 %v1797, %v2306
        %v2308 = vrot.slane %v1695, %v2307
        %v2309 = vlaneseq
        %v2310 = vshrl.u32 %v2309, 7
        %v2311 = vsub.s32 %v1797, %v2310
        %v2312 = vrot.slane %v1698, %v2311
        %v2313 = vlaneseq
        %v2314 = vshrl.u32 %v2313, 7
        %v2315 = vsub.s32 %v1797, %v2314
        %v2316 = vrot.slane %v1701, %v2315
        %v2317 = vlaneseq
        %v2318 = vshrl.u32 %v2317, 7
        %v2319 = vsub.s32 %v1797, %v2318
        %v2320 = vrot.slane %v1704, %v2319
        %v2321 = vlaneseq
        %v2322 = vshrl.u32 %v2321, 7
        %v2323 = vsub.s32 %v1797, %v2322
        %v2324 = vrot.slane %v1707, %v2323
        %v2325 = vlaneseq
        %v2326 = vshrl.u32 %v2325, 7
        %v2327 = vsub.s32 %v1797, %v2326
        %v2328 = vrot.slane %v1710, %v2327
        %v2329 = vlaneseq
        %v2330 = vshrl.u32 %v2329, 7
        %v2331 = vsub.s32 %v1797, %v2330
        %v2332 = vrot.slane %v1713, %v2331
        %v2333 = vsel %vm1830, %v2308, %v2304
        %v2334 = vsel %vm1832, %v2312, %v2333
        %v2335 = vsel %vm1834, %v2316, %v2334
        %v2336 = vsel %vm1836, %v2320, %v2335
        %v2337 = vsel %vm1838, %v2324, %v2336
        %v2338 = vsel %vm1840, %v2328, %v2337
        %v2339 = vsel %vm1842, %v2332, %v2338
        %v2341 = vsel %vm1593, %v794, 0
        %v2343 = vsel %vm1593, %v2292, 0
        %2345 = vmatprep.subr.mxu0 0.0
        %2346 = vmatpush1.xpose.msra.mxu0 %v2343
        %2347 = vmatprep.subr.mxu0 0.0
        %2348 = vmatpush1.xpose.msra.mxu0 0.0
        %2349 = vmatprep.subr.mxu0 0.0
        %2350 = vmatpush1.xpose.msra.mxu0 0.0
        %2351 = vmatprep.subr.mxu0 0.0
        %2352 = vmatpush1.xpose.msra.mxu0 0.0
        %2353 = vmatprep.subr.mxu0 0.0
        %2354 = vmatpush1.xpose.msra.mxu0 0.0
        %2355 = vmatprep.subr.mxu0 0.0
        %2356 = vmatpush1.xpose.msra.mxu0 0.0
        %2357 = vmatprep.subr.mxu0 0.0
        %2358 = vmatpush1.xpose.msra.mxu0 0.0
        %2359 = vmatprep.subr.mxu0 0.0
        %2360 = vmatpush1.xpose.msra.mxu0 0.0
        %2361 = vmatprep.subr.mxu0 0.0
        %2362 = vmatpush1.xpose.msra.mxu0 0.0
        %2363 = vmatprep.subr.mxu0 0.0
        %2364 = vmatpush1.xpose.msra.mxu0 0.0
        %2365 = vmatprep.subr.mxu0 0.0
        %2366 = vmatpush1.xpose.msra.mxu0 0.0
        %2367 = vmatprep.subr.mxu0 0.0
        %2368 = vmatpush1.xpose.msra.mxu0 0.0
        %2369 = vmatprep.subr.mxu0 0.0
        %2370 = vmatpush1.xpose.msra.mxu0 0.0
        %2371 = vmatprep.subr.mxu0 0.0
        %2372 = vmatpush1.xpose.msra.mxu0 0.0
        %2373 = vmatprep.subr.mxu0 0.0
        %2374 = vmatpush1.xpose.msra.mxu0 0.0
        %2375 = vmatprep.subr.mxu0 0.0
        %2376 = vmatpush1.xpose.msra.mxu0 0.0
        %2377 = vmatprep.subr.mxu0 0.0
        %2378 = vmatpush1.xpose.msra.mxu0 0.0
        %2379 = vmatprep.subr.mxu0 0.0
        %2380 = vmatpush1.xpose.msra.mxu0 0.0
        %2381 = vmatprep.subr.mxu0 0.0
        %2382 = vmatpush1.xpose.msra.mxu0 0.0
        %2383 = vmatprep.subr.mxu0 0.0
        %2384 = vmatpush1.xpose.msra.mxu0 0.0
        %2385 = vmatprep.subr.mxu0 0.0
        %2386 = vmatpush1.xpose.msra.mxu0 0.0
        %2387 = vmatprep.subr.mxu0 0.0
        %2388 = vmatpush1.xpose.msra.mxu0 0.0
        %2389 = vmatprep.subr.mxu0 0.0
        %2390 = vmatpush1.xpose.msra.mxu0 0.0
        %2391 = vmatprep.subr.mxu0 0.0
        %2392 = vmatpush1.xpose.msra.mxu0 0.0
        %2393 = vmatprep.subr.mxu0 0.0
        %2394 = vmatpush1.xpose.msra.mxu0 0.0
        %2395 = vmatprep.subr.mxu0 0.0
        %2396 = vmatpush1.xpose.msra.mxu0 0.0
        %2397 = vmatprep.subr.mxu0 0.0
        %2398 = vmatpush1.xpose.msra.mxu0 0.0
        %2399 = vmatprep.subr.mxu0 0.0
        %2400 = vmatpush1.xpose.msra.mxu0 0.0
        %2401 = vmatprep.subr.mxu0 0.0
        %2402 = vmatpush1.xpose.msra.mxu0 0.0
        %2403 = vmatprep.subr.mxu0 0.0
        %2404 = vmatpush1.xpose.msra.mxu0 0.0
        %2405 = vmatprep.subr.mxu0 0.0
        %2406 = vmatpush1.xpose.msra.mxu0 0.0
        %2407 = vmatprep.subr.mxu0 0.0
        %2408 = vmatpush1.xpose.msra.mxu0 0.0
        %2409 = vmatprep.mubr.f32.mxu0 0.0
        %2410 = vmatmul.mubr.f32.gmra.mrb[0].mxu0 %v2341
        %v2411 = vpop.f32.mrb[0].mxu0
        %v2412 = vadd.f32 %v2339, %v2411
        %v2413 = vpop.f32.mrb[0].mxu0
        %2414 = vdwg.mxu0
        %2415 = vrot.lane.b32.xlu0 %v796, 96
        %v2416 = vpop.permute.xlu0 %2415
        %v2425 = vlaneseq
        %v2426 = vshrl.u32 %v2425, 7
        %v2427 = vsub.s32 %v1797, %v2426
        %v2428 = vrot.slane %v1716, %v2427
        %v2429 = vlaneseq
        %v2430 = vshrl.u32 %v2429, 7
        %v2431 = vsub.s32 %v1797, %v2430
        %v2432 = vrot.slane %v1719, %v2431
        %v2433 = vlaneseq
        %v2434 = vshrl.u32 %v2433, 7
        %v2435 = vsub.s32 %v1797, %v2434
        %v2436 = vrot.slane %v1722, %v2435
        %v2437 = vlaneseq
        %v2438 = vshrl.u32 %v2437, 7
        %v2439 = vsub.s32 %v1797, %v2438
        %v2440 = vrot.slane %v1725, %v2439
        %v2441 = vlaneseq
        %v2442 = vshrl.u32 %v2441, 7
        %v2443 = vsub.s32 %v1797, %v2442
        %v2444 = vrot.slane %v1728, %v2443
        %v2445 = vlaneseq
        %v2446 = vshrl.u32 %v2445, 7
        %v2447 = vsub.s32 %v1797, %v2446
        %v2448 = vrot.slane %v1731, %v2447
        %v2449 = vlaneseq
        %v2450 = vshrl.u32 %v2449, 7
        %v2451 = vsub.s32 %v1797, %v2450
        %v2452 = vrot.slane %v1734, %v2451
        %v2453 = vlaneseq
        %v2454 = vshrl.u32 %v2453, 7
        %v2455 = vsub.s32 %v1797, %v2454
        %v2456 = vrot.slane %v1737, %v2455
        %v2457 = vsel %vm1830, %v2432, %v2428
        %v2458 = vsel %vm1832, %v2436, %v2457
        %v2459 = vsel %vm1834, %v2440, %v2458
        %v2460 = vsel %vm1836, %v2444, %v2459
        %v2461 = vsel %vm1838, %v2448, %v2460
        %v2462 = vsel %vm1840, %v2452, %v2461
        %v2463 = vsel %vm1842, %v2456, %v2462
        %v2465 = vsel %vm1593, %v796, 0
        %v2467 = vsel %vm1593, %v2416, 0
        %2469 = vmatprep.subr.mxu0 0.0
        %2470 = vmatpush1.xpose.msra.mxu0 %v2467
        %2471 = vmatprep.subr.mxu0 0.0
        %2472 = vmatpush1.xpose.msra.mxu0 0.0
        %2473 = vmatprep.subr.mxu0 0.0
        %2474 = vmatpush1.xpose.msra.mxu0 0.0
        %2475 = vmatprep.subr.mxu0 0.0
        %2476 = vmatpush1.xpose.msra.mxu0 0.0
        %2477 = vmatprep.subr.mxu0 0.0
        %2478 = vmatpush1.xpose.msra.mxu0 0.0
        %2479 = vmatprep.subr.mxu0 0.0
        %2480 = vmatpush1.xpose.msra.mxu0 0.0
        %2481 = vmatprep.subr.mxu0 0.0
        %2482 = vmatpush1.xpose.msra.mxu0 0.0
        %2483 = vmatprep.subr.mxu0 0.0
        %2484 = vmatpush1.xpose.msra.mxu0 0.0
        %2485 = vmatprep.subr.mxu0 0.0
        %2486 = vmatpush1.xpose.msra.mxu0 0.0
        %2487 = vmatprep.subr.mxu0 0.0
        %2488 = vmatpush1.xpose.msra.mxu0 0.0
        %2489 = vmatprep.subr.mxu0 0.0
        %2490 = vmatpush1.xpose.msra.mxu0 0.0
        %2491 = vmatprep.subr.mxu0 0.0
        %2492 = vmatpush1.xpose.msra.mxu0 0.0
        %2493 = vmatprep.subr.mxu0 0.0
        %2494 = vmatpush1.xpose.msra.mxu0 0.0
        %2495 = vmatprep.subr.mxu0 0.0
        %2496 = vmatpush1.xpose.msra.mxu0 0.0
        %2497 = vmatprep.subr.mxu0 0.0
        %2498 = vmatpush1.xpose.msra.mxu0 0.0
        %2499 = vmatprep.subr.mxu0 0.0
        %2500 = vmatpush1.xpose.msra.mxu0 0.0
        %2501 = vmatprep.subr.mxu0 0.0
        %2502 = vmatpush1.xpose.msra.mxu0 0.0
        %2503 = vmatprep.subr.mxu0 0.0
        %2504 = vmatpush1.xpose.msra.mxu0 0.0
        %2505 = vmatprep.subr.mxu0 0.0
        %2506 = vmatpush1.xpose.msra.mxu0 0.0
        %2507 = vmatprep.subr.mxu0 0.0
        %2508 = vmatpush1.xpose.msra.mxu0 0.0
        %2509 = vmatprep.subr.mxu0 0.0
        %2510 = vmatpush1.xpose.msra.mxu0 0.0
        %2511 = vmatprep.subr.mxu0 0.0
        %2512 = vmatpush1.xpose.msra.mxu0 0.0
        %2513 = vmatprep.subr.mxu0 0.0
        %2514 = vmatpush1.xpose.msra.mxu0 0.0
        %2515 = vmatprep.subr.mxu0 0.0
        %2516 = vmatpush1.xpose.msra.mxu0 0.0
        %2517 = vmatprep.subr.mxu0 0.0
        %2518 = vmatpush1.xpose.msra.mxu0 0.0
        %2519 = vmatprep.subr.mxu0 0.0
        %2520 = vmatpush1.xpose.msra.mxu0 0.0
        %2521 = vmatprep.subr.mxu0 0.0
        %2522 = vmatpush1.xpose.msra.mxu0 0.0
        %2523 = vmatprep.subr.mxu0 0.0
        %2524 = vmatpush1.xpose.msra.mxu0 0.0
        %2525 = vmatprep.subr.mxu0 0.0
        %2526 = vmatpush1.xpose.msra.mxu0 0.0
        %2527 = vmatprep.subr.mxu0 0.0
        %2528 = vmatpush1.xpose.msra.mxu0 0.0
        %2529 = vmatprep.subr.mxu0 0.0
        %2530 = vmatpush1.xpose.msra.mxu0 0.0
        %2531 = vmatprep.subr.mxu0 0.0
        %2532 = vmatpush1.xpose.msra.mxu0 0.0
        %2533 = vmatprep.mubr.f32.mxu0 0.0
        %2534 = vmatmul.mubr.f32.gmra.mrb[0].mxu0 %v2465
        %v2535 = vpop.f32.mrb[0].mxu0
        %v2536 = vadd.f32 %v2463, %v2535
        %v2537 = vpop.f32.mrb[0].mxu0
        %2538 = vdwg.mxu0
        %2539 = vrot.lane.b32.xlu0 %v798, 96
        %v2540 = vpop.permute.xlu0 %2539
        %v2549 = vlaneseq
        %v2550 = vshrl.u32 %v2549, 7
        %v2551 = vsub.s32 %v1797, %v2550
        %v2552 = vrot.slane %v1740, %v2551
        %v2553 = vlaneseq
        %v2554 = vshrl.u32 %v2553, 7
        %v2555 = vsub.s32 %v1797, %v2554
        %v2556 = vrot.slane %v1743, %v2555
        %v2557 = vlaneseq
        %v2558 = vshrl.u32 %v2557, 7
        %v2559 = vsub.s32 %v1797, %v2558
        %v2560 = vrot.slane %v1746, %v2559
        %v2561 = vlaneseq
        %v2562 = vshrl.u32 %v2561, 7
        %v2563 = vsub.s32 %v1797, %v2562
        %v2564 = vrot.slane %v1749, %v2563
        %v2565 = vlaneseq
        %v2566 = vshrl.u32 %v2565, 7
        %v2567 = vsub.s32 %v1797, %v2566
        %v2568 = vrot.slane %v1752, %v2567
        %v2569 = vlaneseq
        %v2570 = vshrl.u32 %v2569, 7
        %v2571 = vsub.s32 %v1797, %v2570
        %v2572 = vrot.slane %v1755, %v2571
        %v2573 = vlaneseq
        %v2574 = vshrl.u32 %v2573, 7
        %v2575 = vsub.s32 %v1797, %v2574
        %v2576 = vrot.slane %v1758, %v2575
        %v2577 = vlaneseq
        %v2578 = vshrl.u32 %v2577, 7
        %v2579 = vsub.s32 %v1797, %v2578
        %v2580 = vrot.slane %v1761, %v2579
        %v2581 = vsel %vm1830, %v2556, %v2552
        %v2582 = vsel %vm1832, %v2560, %v2581
        %v2583 = vsel %vm1834, %v2564, %v2582
        %v2584 = vsel %vm1836, %v2568, %v2583
        %v2585 = vsel %vm1838, %v2572, %v2584
        %v2586 = vsel %vm1840, %v2576, %v2585
        %v2587 = vsel %vm1842, %v2580, %v2586
        %v2589 = vsel %vm1593, %v798, 0
        %v2591 = vsel %vm1593, %v2540, 0
        %2593 = vmatprep.subr.mxu0 0.0
        %2594 = vmatpush1.xpose.msra.mxu0 %v2591
        %2595 = vmatprep.subr.mxu0 0.0
        %2596 = vmatpush1.xpose.msra.mxu0 0.0
        %2597 = vmatprep.subr.mxu0 0.0
        %2598 = vmatpush1.xpose.msra.mxu0 0.0
        %2599 = vmatprep.subr.mxu0 0.0
        %2600 = vmatpush1.xpose.msra.mxu0 0.0
        %2601 = vmatprep.subr.mxu0 0.0
        %2602 = vmatpush1.xpose.msra.mxu0 0.0
        %2603 = vmatprep.subr.mxu0 0.0
        %2604 = vmatpush1.xpose.msra.mxu0 0.0
        %2605 = vmatprep.subr.mxu0 0.0
        %2606 = vmatpush1.xpose.msra.mxu0 0.0
        %2607 = vmatprep.subr.mxu0 0.0
        %2608 = vmatpush1.xpose.msra.mxu0 0.0
        %2609 = vmatprep.subr.mxu0 0.0
        %2610 = vmatpush1.xpose.msra.mxu0 0.0
        %2611 = vmatprep.subr.mxu0 0.0
        %2612 = vmatpush1.xpose.msra.mxu0 0.0
        %2613 = vmatprep.subr.mxu0 0.0
        %2614 = vmatpush1.xpose.msra.mxu0 0.0
        %2615 = vmatprep.subr.mxu0 0.0
        %2616 = vmatpush1.xpose.msra.mxu0 0.0
        %2617 = vmatprep.subr.mxu0 0.0
        %2618 = vmatpush1.xpose.msra.mxu0 0.0
        %2619 = vmatprep.subr.mxu0 0.0
        %2620 = vmatpush1.xpose.msra.mxu0 0.0
        %2621 = vmatprep.subr.mxu0 0.0
        %2622 = vmatpush1.xpose.msra.mxu0 0.0
        %2623 = vmatprep.subr.mxu0 0.0
        %2624 = vmatpush1.xpose.msra.mxu0 0.0
        %2625 = vmatprep.subr.mxu0 0.0
        %2626 = vmatpush1.xpose.msra.mxu0 0.0
        %2627 = vmatprep.subr.mxu0 0.0
        %2628 = vmatpush1.xpose.msra.mxu0 0.0
        %2629 = vmatprep.subr.mxu0 0.0
        %2630 = vmatpush1.xpose.msra.mxu0 0.0
        %2631 = vmatprep.subr.mxu0 0.0
        %2632 = vmatpush1.xpose.msra.mxu0 0.0
        %2633 = vmatprep.subr.mxu0 0.0
        %2634 = vmatpush1.xpose.msra.mxu0 0.0
        %2635 = vmatprep.subr.mxu0 0.0
        %2636 = vmatpush1.xpose.msra.mxu0 0.0
        %2637 = vmatprep.subr.mxu0 0.0
        %2638 = vmatpush1.xpose.msra.mxu0 0.0
        %2639 = vmatprep.subr.mxu0 0.0
        %2640 = vmatpush1.xpose.msra.mxu0 0.0
        %2641 = vmatprep.subr.mxu0 0.0
        %2642 = vmatpush1.xpose.msra.mxu0 0.0
        %2643 = vmatprep.subr.mxu0 0.0
        %2644 = vmatpush1.xpose.msra.mxu0 0.0
        %2645 = vmatprep.subr.mxu0 0.0
        %2646 = vmatpush1.xpose.msra.mxu0 0.0
        %2647 = vmatprep.subr.mxu0 0.0
        %2648 = vmatpush1.xpose.msra.mxu0 0.0
        %2649 = vmatprep.subr.mxu0 0.0
        %2650 = vmatpush1.xpose.msra.mxu0 0.0
        %2651 = vmatprep.subr.mxu0 0.0
        %2652 = vmatpush1.xpose.msra.mxu0 0.0
        %2653 = vmatprep.subr.mxu0 0.0
        %2654 = vmatpush1.xpose.msra.mxu0 0.0
        %2655 = vmatprep.subr.mxu0 0.0
        %2656 = vmatpush1.xpose.msra.mxu0 0.0
        %2657 = vmatprep.mubr.f32.mxu0 0.0
        %2658 = vmatmul.mubr.f32.gmra.mrb[0].mxu0 %v2589
        %v2659 = vpop.f32.mrb[0].mxu0
        %v2660 = vadd.f32 %v2587, %v2659
        %v2661 = vpop.f32.mrb[0].mxu0
        %2662 = vdwg.mxu0
        %2663 = vrot.lane.b32.xlu0 %v800, 96
        %v2664 = vpop.permute.xlu0 %2663
        %v2673 = vlaneseq
        %v2674 = vshrl.u32 %v2673, 7
        %v2675 = vsub.s32 %v1797, %v2674
        %v2676 = vrot.slane %v1764, %v2675
        %v2677 = vlaneseq
        %v2678 = vshrl.u32 %v2677, 7
        %v2679 = vsub.s32 %v1797, %v2678
        %v2680 = vrot.slane %v1767, %v2679
        %v2681 = vlaneseq
        %v2682 = vshrl.u32 %v2681, 7
        %v2683 = vsub.s32 %v1797, %v2682
        %v2684 = vrot.slane %v1770, %v2683
        %v2685 = vlaneseq
        %v2686 = vshrl.u32 %v2685, 7
        %v2687 = vsub.s32 %v1797, %v2686
        %v2688 = vrot.slane %v1773, %v2687
        %v2689 = vlaneseq
        %v2690 = vshrl.u32 %v2689, 7
        %v2691 = vsub.s32 %v1797, %v2690
        %v2692 = vrot.slane %v1776, %v2691
        %v2693 = vlaneseq
        %v2694 = vshrl.u32 %v2693, 7
        %v2695 = vsub.s32 %v1797, %v2694
        %v2696 = vrot.slane %v1779, %v2695
        %v2697 = vlaneseq
        %v2698 = vshrl.u32 %v2697, 7
        %v2699 = vsub.s32 %v1797, %v2698
        %v2700 = vrot.slane %v1782, %v2699
        %v2701 = vlaneseq
        %v2702 = vshrl.u32 %v2701, 7
        %v2703 = vsub.s32 %v1797, %v2702
        %v2704 = vrot.slane %v1785, %v2703
        %v2705 = vsel %vm1830, %v2680, %v2676
        %v2706 = vsel %vm1832, %v2684, %v2705
        %v2707 = vsel %vm1834, %v2688, %v2706
        %v2708 = vsel %vm1836, %v2692, %v2707
        %v2709 = vsel %vm1838, %v2696, %v2708
        %v2710 = vsel %vm1840, %v2700, %v2709
        %v2711 = vsel %vm1842, %v2704, %v2710
        %v2713 = vsel %vm1593, %v800, 0
        %v2715 = vsel %vm1593, %v2664, 0
        %2717 = vmatprep.subr.mxu0 0.0
        %2718 = vmatpush1.xpose.msra.mxu0 %v2715
        %2719 = vmatprep.subr.mxu0 0.0
        %2720 = vmatpush1.xpose.msra.mxu0 0.0
        %2721 = vmatprep.subr.mxu0 0.0
        %2722 = vmatpush1.xpose.msra.mxu0 0.0
        %2723 = vmatprep.subr.mxu0 0.0
        %2724 = vmatpush1.xpose.msra.mxu0 0.0
        %2725 = vmatprep.subr.mxu0 0.0
        %2726 = vmatpush1.xpose.msra.mxu0 0.0
        %2727 = vmatprep.subr.mxu0 0.0
        %2728 = vmatpush1.xpose.msra.mxu0 0.0
        %2729 = vmatprep.subr.mxu0 0.0
        %2730 = vmatpush1.xpose.msra.mxu0 0.0
        %2731 = vmatprep.subr.mxu0 0.0
        %2732 = vmatpush1.xpose.msra.mxu0 0.0
        %2733 = vmatprep.subr.mxu0 0.0
        %2734 = vmatpush1.xpose.msra.mxu0 0.0
        %2735 = vmatprep.subr.mxu0 0.0
        %2736 = vmatpush1.xpose.msra.mxu0 0.0
        %2737 = vmatprep.subr.mxu0 0.0
        %2738 = vmatpush1.xpose.msra.mxu0 0.0
        %2739 = vmatprep.subr.mxu0 0.0
        %2740 = vmatpush1.xpose.msra.mxu0 0.0
        %2741 = vmatprep.subr.mxu0 0.0
        %2742 = vmatpush1.xpose.msra.mxu0 0.0
        %2743 = vmatprep.subr.mxu0 0.0
        %2744 = vmatpush1.xpose.msra.mxu0 0.0
        %2745 = vmatprep.subr.mxu0 0.0
        %2746 = vmatpush1.xpose.msra.mxu0 0.0
        %2747 = vmatprep.subr.mxu0 0.0
        %2748 = vmatpush1.xpose.msra.mxu0 0.0
        %2749 = vmatprep.subr.mxu0 0.0
        %2750 = vmatpush1.xpose.msra.mxu0 0.0
        %2751 = vmatprep.subr.mxu0 0.0
        %2752 = vmatpush1.xpose.msra.mxu0 0.0
        %2753 = vmatprep.subr.mxu0 0.0
        %2754 = vmatpush1.xpose.msra.mxu0 0.0
        %2755 = vmatprep.subr.mxu0 0.0
        %2756 = vmatpush1.xpose.msra.mxu0 0.0
        %2757 = vmatprep.subr.mxu0 0.0
        %2758 = vmatpush1.xpose.msra.mxu0 0.0
        %2759 = vmatprep.subr.mxu0 0.0
        %2760 = vmatpush1.xpose.msra.mxu0 0.0
        %2761 = vmatprep.subr.mxu0 0.0
        %2762 = vmatpush1.xpose.msra.mxu0 0.0
        %2763 = vmatprep.subr.mxu0 0.0
        %2764 = vmatpush1.xpose.msra.mxu0 0.0
        %2765 = vmatprep.subr.mxu0 0.0
        %2766 = vmatpush1.xpose.msra.mxu0 0.0
        %2767 = vmatprep.subr.mxu0 0.0
        %2768 = vmatpush1.xpose.msra.mxu0 0.0
        %2769 = vmatprep.subr.mxu0 0.0
        %2770 = vmatpush1.xpose.msra.mxu0 0.0
        %2771 = vmatprep.subr.mxu0 0.0
        %2772 = vmatpush1.xpose.msra.mxu0 0.0
        %2773 = vmatprep.subr.mxu0 0.0
        %2774 = vmatpush1.xpose.msra.mxu0 0.0
        %2775 = vmatprep.subr.mxu0 0.0
        %2776 = vmatpush1.xpose.msra.mxu0 0.0
        %2777 = vmatprep.subr.mxu0 0.0
        %2778 = vmatpush1.xpose.msra.mxu0 0.0
        %2779 = vmatprep.subr.mxu0 0.0
        %2780 = vmatpush1.xpose.msra.mxu0 0.0
        %2781 = vmatprep.mubr.f32.mxu0 0.0
        %2782 = vmatmul.mubr.f32.gmra.mrb[0].mxu0 %v2713
        %v2783 = vpop.f32.mrb[0].mxu0
        %v2784 = vadd.f32 %v2711, %v2783
        %v2785 = vpop.f32.mrb[0].mxu0
        %2786 = vdwg.mxu0
        %v2787 = vmul.f32 %v1916, 0.35355338
        %v2788 = vmul.f32 %v2040, 0.35355338
        %v2789 = vmul.f32 %v2164, 0.35355338
        %v2790 = vmul.f32 %v2288, 0.35355338
        %v2791 = vmul.f32 %v2412, 0.35355338
        %v2792 = vmul.f32 %v2536, 0.35355338
        %v2793 = vmul.f32 %v2660, 0.35355338
        %v2794 = vmul.f32 %v2784, 0.35355338
        %s2795 = sld [smem:[#allocation4]]
        %v2796 = vstv %s2795
        %s2797 = sld [smem:[#allocation4 + $0x1]]
        %v2798 = vstv %s2797
        %vm2799 = vcmp.lt.s32.totalorder %v1797, %v2796
        %vm2800 = vcmp.lt.s32.totalorder %v1797, %v2798
        %v2801 = vsel %vm2799, %v2787, -1000000.0
        %v2802 = vsel %vm2800, %v2788, -1000000.0
        %v2803 = vsel %vm2799, %v2789, -1000000.0
        %v2804 = vsel %vm2800, %v2790, -1000000.0
        %v2805 = vsel %vm2799, %v2791, -1000000.0
        %v2806 = vsel %vm2800, %v2792, -1000000.0
        %v2807 = vsel %vm2799, %v2793, -1000000.0
        %v2808 = vsel %vm2800, %v2794, -1000000.0
        %v2809 = vsel %vm1593, %v2801, -inf
        %2810 = vmax.xlane.f32.xlu0 %v2809
        %v2811 = vpop.xlane.xlu0 %2810
        %v2812 = vsel %vm1593, %v2802, -inf
        %2813 = vmax.xlane.f32.xlu0 %v2812
        %v2814 = vpop.xlane.xlu0 %2813
        %v2815 = vsel %vm1593, %v2803, -inf
        %2816 = vmax.xlane.f32.xlu0 %v2815
        %v2817 = vpop.xlane.xlu0 %2816
        %v2818 = vsel %vm1593, %v2804, -inf
        %2819 = vmax.xlane.f32.xlu0 %v2818
        %v2820 = vpop.xlane.xlu0 %2819
        %v2821 = vsel %vm1593, %v2805, -inf
        %2822 = vmax.xlane.f32.xlu0 %v2821
        %v2823 = vpop.xlane.xlu0 %2822
        %v2824 = vsel %vm1593, %v2806, -inf
        %2825 = vmax.xlane.f32.xlu0 %v2824
        %v2826 = vpop.xlane.xlu0 %2825
        %v2827 = vsel %vm1593, %v2807, -inf
        %2828 = vmax.xlane.f32.xlu0 %v2827
        %v2829 = vpop.xlane.xlu0 %2828
        %v2830 = vsel %vm1593, %v2808, -inf
        %2831 = vmax.xlane.f32.xlu0 %v2830
        %v2832 = vpop.xlane.xlu0 %2831
        %v2833 = vsub.f32 %v2801, %v2811
        %v2834 = vsub.f32 %v2802, %v2814
        %v2835 = vsub.f32 %v2803, %v2817
        %v2836 = vsub.f32 %v2804, %v2820
        %v2837 = vsub.f32 %v2805, %v2823
        %v2838 = vsub.f32 %v2806, %v2826
        %v2839 = vsub.f32 %v2807, %v2829
        %v2840 = vsub.f32 %v2808, %v2832
        %v2841 = vmul.f32 %v2833, 1.442695
        %v2842 = vpow.pop %v2841
        %v2843 = vmul.f32 %v2834, 1.442695
        %v2844 = vpow.pop %v2843
        %v2845 = vmul.f32 %v2835, 1.442695
        %v2846 = vpow.pop %v2845
        %v2847 = vmul.f32 %v2836, 1.442695
        %v2848 = vpow.pop %v2847
        %v2849 = vmul.f32 %v2837, 1.442695
        %v2850 = vpow.pop %v2849
        %v2851 = vmul.f32 %v2838, 1.442695
        %v2852 = vpow.pop %v2851
        %v2853 = vmul.f32 %v2839, 1.442695
        %v2854 = vpow.pop %v2853
        %v2855 = vmul.f32 %v2840, 1.442695
        %v2856 = vpow.pop %v2855
        %v2857 = vsel %vm1593, %v2842, 0.0
        %2858 = vadd.xlane.f32.xlu0 %v2857
        %v2859 = vpop.xlane.xlu0 %2858
        %v2860 = vsel %vm1593, %v2844, 0.0
        %2861 = vadd.xlane.f32.xlu0 %v2860
        %v2862 = vpop.xlane.xlu0 %2861
        %v2863 = vsel %vm1593, %v2846, 0.0
        %2864 = vadd.xlane.f32.xlu0 %v2863
        %v2865 = vpop.xlane.xlu0 %2864
        %v2866 = vsel %vm1593, %v2848, 0.0
        %2867 = vadd.xlane.f32.xlu0 %v2866
        %v2868 = vpop.xlane.xlu0 %2867
        %v2869 = vsel %vm1593, %v2850, 0.0
        %2870 = vadd.xlane.f32.xlu0 %v2869
        %v2871 = vpop.xlane.xlu0 %2870
        %v2872 = vsel %vm1593, %v2852, 0.0
        %2873 = vadd.xlane.f32.xlu0 %v2872
        %v2874 = vpop.xlane.xlu0 %2873
        %v2875 = vsel %vm1593, %v2854, 0.0
        %2876 = vadd.xlane.f32.xlu0 %v2875
        %v2877 = vpop.xlane.xlu0 %2876
        %v2878 = vsel %vm1593, %v2856, 0.0
        %2879 = vadd.xlane.f32.xlu0 %v2878
        %v2880 = vpop.xlane.xlu0 %2879
        %v2881 = vrcp.pop %v2859
        %v2882 = vrcp.pop %v2862
        %v2883 = vrcp.pop %v2865
        %v2884 = vrcp.pop %v2868
        %v2885 = vrcp.pop %v2871
        %v2886 = vrcp.pop %v2874
        %v2887 = vrcp.pop %v2877
        %v2888 = vrcp.pop %v2880
        %v2889 = vmul.f32 %v2842, %v2881
        %v2890 = vmul.f32 %v2844, %v2882
        %v2891 = vmul.f32 %v2846, %v2883
        %v2892 = vmul.f32 %v2848, %v2884
        %v2893 = vmul.f32 %v2850, %v2885
        %v2894 = vmul.f32 %v2852, %v2886
        %v2895 = vmul.f32 %v2854, %v2887
        %v2896 = vmul.f32 %v2856, %v2888
        %v2897 = vlaneseq
        %v2898 = vshrl.u32 %v2897, 7
        %v2899 = vsub.s32 0, %v2898
        %v2900 = vrot.slane %v2889, %v2899
        %2902 = vbcast.lane.b32.xlu0 %v2900, 256
        %v2903 = vpop.permute.xlu0 %2902
        %v2904 = vlaneseq
        %v2905 = vshrl.u32 %v2904, 7
        %v2906 = vsub.s32 1, %v2905
        %v2907 = vrot.slane %v2889, %v2906
        %2909 = vbcast.lane.b32.xlu0 %v2907, 256
        %v2910 = vpop.permute.xlu0 %2909
        %v2911 = vlaneseq
        %v2912 = vshrl.u32 %v2911, 7
        %v2913 = vsub.s32 2, %v2912
        %v2914 = vrot.slane %v2889, %v2913
        %2916 = vbcast.lane.b32.xlu0 %v2914, 256
        %v2917 = vpop.permute.xlu0 %2916
        %v2918 = vlaneseq
        %v2919 = vshrl.u32 %v2918, 7
        %v2920 = vsub.s32 3, %v2919
        %v2921 = vrot.slane %v2889, %v2920
        %2923 = vbcast.lane.b32.xlu0 %v2921, 256
        %v2924 = vpop.permute.xlu0 %2923
        %v2925 = vlaneseq
        %v2926 = vshrl.u32 %v2925, 7
        %v2927 = vsub.s32 4, %v2926
        %v2928 = vrot.slane %v2889, %v2927
        %2930 = vbcast.lane.b32.xlu0 %v2928, 256
        %v2931 = vpop.permute.xlu0 %2930
        %v2932 = vlaneseq
        %v2933 = vshrl.u32 %v2932, 7
        %v2934 = vsub.s32 5, %v2933
        %v2935 = vrot.slane %v2889, %v2934
        %2937 = vbcast.lane.b32.xlu0 %v2935, 256
        %v2938 = vpop.permute.xlu0 %2937
        %v2939 = vlaneseq
        %v2940 = vshrl.u32 %v2939, 7
        %v2941 = vsub.s32 6, %v2940
        %v2942 = vrot.slane %v2889, %v2941
        %2944 = vbcast.lane.b32.xlu0 %v2942, 256
        %v2945 = vpop.permute.xlu0 %2944
        %v2946 = vlaneseq
        %v2947 = vshrl.u32 %v2946, 7
        %v2948 = vsub.s32 7, %v2947
        %v2949 = vrot.slane %v2889, %v2948
        %2951 = vbcast.lane.b32.xlu0 %v2949, 256
        %v2952 = vpop.permute.xlu0 %2951
        %v2953 = vlaneseq
        %v2954 = vshrl.u32 %v2953, 7
        %v2955 = vsub.s32 0, %v2954
        %v2956 = vrot.slane %v2890, %v2955
        %2958 = vbcast.lane.b32.xlu0 %v2956, 256
        %v2959 = vpop.permute.xlu0 %2958
        %v2960 = vlaneseq
        %v2961 = vshrl.u32 %v2960, 7
        %v2962 = vsub.s32 1, %v2961
        %v2963 = vrot.slane %v2890, %v2962
        %2965 = vbcast.lane.b32.xlu0 %v2963, 256
        %v2966 = vpop.permute.xlu0 %2965
        %v2967 = vlaneseq
        %v2968 = vshrl.u32 %v2967, 7
        %v2969 = vsub.s32 2, %v2968
        %v2970 = vrot.slane %v2890, %v2969
        %2972 = vbcast.lane.b32.xlu0 %v2970, 256
        %v2973 = vpop.permute.xlu0 %2972
        %v2974 = vlaneseq
        %v2975 = vshrl.u32 %v2974, 7
        %v2976 = vsub.s32 3, %v2975
        %v2977 = vrot.slane %v2890, %v2976
        %2979 = vbcast.lane.b32.xlu0 %v2977, 256
        %v2980 = vpop.permute.xlu0 %2979
        %v2981 = vlaneseq
        %v2982 = vshrl.u32 %v2981, 7
        %v2983 = vsub.s32 4, %v2982
        %v2984 = vrot.slane %v2890, %v2983
        %2986 = vbcast.lane.b32.xlu0 %v2984, 256
        %v2987 = vpop.permute.xlu0 %2986
        %v2988 = vlaneseq
        %v2989 = vshrl.u32 %v2988, 7
        %v2990 = vsub.s32 5, %v2989
        %v2991 = vrot.slane %v2890, %v2990
        %2993 = vbcast.lane.b32.xlu0 %v2991, 256
        %v2994 = vpop.permute.xlu0 %2993
        %v2995 = vlaneseq
        %v2996 = vshrl.u32 %v2995, 7
        %v2997 = vsub.s32 6, %v2996
        %v2998 = vrot.slane %v2890, %v2997
        %3000 = vbcast.lane.b32.xlu0 %v2998, 256
        %v3001 = vpop.permute.xlu0 %3000
        %v3002 = vlaneseq
        %v3003 = vshrl.u32 %v3002, 7
        %v3004 = vsub.s32 7, %v3003
        %v3005 = vrot.slane %v2890, %v3004
        %3007 = vbcast.lane.b32.xlu0 %v3005, 256
        %v3008 = vpop.permute.xlu0 %3007
        %v3009 = vlaneseq
        %v3010 = vshrl.u32 %v3009, 7
        %v3011 = vsub.s32 0, %v3010
        %v3012 = vrot.slane %v2891, %v3011
        %3014 = vbcast.lane.b32.xlu0 %v3012, 256
        %v3015 = vpop.permute.xlu0 %3014
        %v3016 = vlaneseq
        %v3017 = vshrl.u32 %v3016, 7
        %v3018 = vsub.s32 1, %v3017
        %v3019 = vrot.slane %v2891, %v3018
        %3021 = vbcast.lane.b32.xlu0 %v3019, 256
        %v3022 = vpop.permute.xlu0 %3021
        %v3023 = vlaneseq
        %v3024 = vshrl.u32 %v3023, 7
        %v3025 = vsub.s32 2, %v3024
        %v3026 = vrot.slane %v2891, %v3025
        %3028 = vbcast.lane.b32.xlu0 %v3026, 256
        %v3029 = vpop.permute.xlu0 %3028
        %v3030 = vlaneseq
        %v3031 = vshrl.u32 %v3030, 7
        %v3032 = vsub.s32 3, %v3031
        %v3033 = vrot.slane %v2891, %v3032
        %3035 = vbcast.lane.b32.xlu0 %v3033, 256
        %v3036 = vpop.permute.xlu0 %3035
        %v3037 = vlaneseq
        %v3038 = vshrl.u32 %v3037, 7
        %v3039 = vsub.s32 4, %v3038
        %v3040 = vrot.slane %v2891, %v3039
        %3042 = vbcast.lane.b32.xlu0 %v3040, 256
        %v3043 = vpop.permute.xlu0 %3042
        %v3044 = vlaneseq
        %v3045 = vshrl.u32 %v3044, 7
        %v3046 = vsub.s32 5, %v3045
        %v3047 = vrot.slane %v2891, %v3046
        %3049 = vbcast.lane.b32.xlu0 %v3047, 256
        %v3050 = vpop.permute.xlu0 %3049
        %v3051 = vlaneseq
        %v3052 = vshrl.u32 %v3051, 7
        %v3053 = vsub.s32 6, %v3052
        %v3054 = vrot.slane %v2891, %v3053
        %3056 = vbcast.lane.b32.xlu0 %v3054, 256
        %v3057 = vpop.permute.xlu0 %3056
        %v3058 = vlaneseq
        %v3059 = vshrl.u32 %v3058, 7
        %v3060 = vsub.s32 7, %v3059
        %v3061 = vrot.slane %v2891, %v3060
        %3063 = vbcast.lane.b32.xlu0 %v3061, 256
        %v3064 = vpop.permute.xlu0 %3063
        %v3065 = vlaneseq
        %v3066 = vshrl.u32 %v3065, 7
        %v3067 = vsub.s32 0, %v3066
        %v3068 = vrot.slane %v2892, %v3067
        %3070 = vbcast.lane.b32.xlu0 %v3068, 256
        %v3071 = vpop.permute.xlu0 %3070
        %v3072 = vlaneseq
        %v3073 = vshrl.u32 %v3072, 7
        %v3074 = vsub.s32 1, %v3073
        %v3075 = vrot.slane %v2892, %v3074
        %3077 = vbcast.lane.b32.xlu0 %v3075, 256
        %v3078 = vpop.permute.xlu0 %3077
        %v3079 = vlaneseq
        %v3080 = vshrl.u32 %v3079, 7
        %v3081 = vsub.s32 2, %v3080
        %v3082 = vrot.slane %v2892, %v3081
        %3084 = vbcast.lane.b32.xlu0 %v3082, 256
        %v3085 = vpop.permute.xlu0 %3084
        %v3086 = vlaneseq
        %v3087 = vshrl.u32 %v3086, 7
        %v3088 = vsub.s32 3, %v3087
        %v3089 = vrot.slane %v2892, %v3088
        %3091 = vbcast.lane.b32.xlu0 %v3089, 256
        %v3092 = vpop.permute.xlu0 %3091
        %v3093 = vlaneseq
        %v3094 = vshrl.u32 %v3093, 7
        %v3095 = vsub.s32 4, %v3094
        %v3096 = vrot.slane %v2892, %v3095
        %3098 = vbcast.lane.b32.xlu0 %v3096, 256
        %v3099 = vpop.permute.xlu0 %3098
        %v3100 = vlaneseq
        %v3101 = vshrl.u32 %v3100, 7
        %v3102 = vsub.s32 5, %v3101
        %v3103 = vrot.slane %v2892, %v3102
        %3105 = vbcast.lane.b32.xlu0 %v3103, 256
        %v3106 = vpop.permute.xlu0 %3105
        %v3107 = vlaneseq
        %v3108 = vshrl.u32 %v3107, 7
        %v3109 = vsub.s32 6, %v3108
        %v3110 = vrot.slane %v2892, %v3109
        %3112 = vbcast.lane.b32.xlu0 %v3110, 256
        %v3113 = vpop.permute.xlu0 %3112
        %v3114 = vlaneseq
        %v3115 = vshrl.u32 %v3114, 7
        %v3116 = vsub.s32 7, %v3115
        %v3117 = vrot.slane %v2892, %v3116
        %3119 = vbcast.lane.b32.xlu0 %v3117, 256
        %v3120 = vpop.permute.xlu0 %3119
        %v3121 = vlaneseq
        %v3122 = vshrl.u32 %v3121, 7
        %v3123 = vsub.s32 0, %v3122
        %v3124 = vrot.slane %v2893, %v3123
        %3126 = vbcast.lane.b32.xlu0 %v3124, 256
        %v3127 = vpop.permute.xlu0 %3126
        %v3128 = vlaneseq
        %v3129 = vshrl.u32 %v3128, 7
        %v3130 = vsub.s32 1, %v3129
        %v3131 = vrot.slane %v2893, %v3130
        %3133 = vbcast.lane.b32.xlu0 %v3131, 256
        %v3134 = vpop.permute.xlu0 %3133
        %v3135 = vlaneseq
        %v3136 = vshrl.u32 %v3135, 7
        %v3137 = vsub.s32 2, %v3136
        %v3138 = vrot.slane %v2893, %v3137
        %3140 = vbcast.lane.b32.xlu0 %v3138, 256
        %v3141 = vpop.permute.xlu0 %3140
        %v3142 = vlaneseq
        %v3143 = vshrl.u32 %v3142, 7
        %v3144 = vsub.s32 3, %v3143
        %v3145 = vrot.slane %v2893, %v3144
        %3147 = vbcast.lane.b32.xlu0 %v3145, 256
        %v3148 = vpop.permute.xlu0 %3147
        %v3149 = vlaneseq
        %v3150 = vshrl.u32 %v3149, 7
        %v3151 = vsub.s32 4, %v3150
        %v3152 = vrot.slane %v2893, %v3151
        %3154 = vbcast.lane.b32.xlu0 %v3152, 256
        %v3155 = vpop.permute.xlu0 %3154
        %v3156 = vlaneseq
        %v3157 = vshrl.u32 %v3156, 7
        %v3158 = vsub.s32 5, %v3157
        %v3159 = vrot.slane %v2893, %v3158
        %3161 = vbcast.lane.b32.xlu0 %v3159, 256
        %v3162 = vpop.permute.xlu0 %3161
        %v3163 = vlaneseq
        %v3164 = vshrl.u32 %v3163, 7
        %v3165 = vsub.s32 6, %v3164
        %v3166 = vrot.slane %v2893, %v3165
        %3168 = vbcast.lane.b32.xlu0 %v3166, 256
        %v3169 = vpop.permute.xlu0 %3168
        %v3170 = vlaneseq
        %v3171 = vshrl.u32 %v3170, 7
        %v3172 = vsub.s32 7, %v3171
        %v3173 = vrot.slane %v2893, %v3172
        %3175 = vbcast.lane.b32.xlu0 %v3173, 256
        %v3176 = vpop.permute.xlu0 %3175
        %v3177 = vlaneseq
        %v3178 = vshrl.u32 %v3177, 7
        %v3179 = vsub.s32 0, %v3178
        %v3180 = vrot.slane %v2894, %v3179
        %3182 = vbcast.lane.b32.xlu0 %v3180, 256
        %v3183 = vpop.permute.xlu0 %3182
        %v3184 = vlaneseq
        %v3185 = vshrl.u32 %v3184, 7
        %v3186 = vsub.s32 1, %v3185
        %v3187 = vrot.slane %v2894, %v3186
        %3189 = vbcast.lane.b32.xlu0 %v3187, 256
        %v3190 = vpop.permute.xlu0 %3189
        %v3191 = vlaneseq
        %v3192 = vshrl.u32 %v3191, 7
        %v3193 = vsub.s32 2, %v3192
        %v3194 = vrot.slane %v2894, %v3193
        %3196 = vbcast.lane.b32.xlu0 %v3194, 256
        %v3197 = vpop.permute.xlu0 %3196
        %v3198 = vlaneseq
        %v3199 = vshrl.u32 %v3198, 7
        %v3200 = vsub.s32 3, %v3199
        %v3201 = vrot.slane %v2894, %v3200
        %3203 = vbcast.lane.b32.xlu0 %v3201, 256
        %v3204 = vpop.permute.xlu0 %3203
        %v3205 = vlaneseq
        %v3206 = vshrl.u32 %v3205, 7
        %v3207 = vsub.s32 4, %v3206
        %v3208 = vrot.slane %v2894, %v3207
        %3210 = vbcast.lane.b32.xlu0 %v3208, 256
        %v3211 = vpop.permute.xlu0 %3210
        %v3212 = vlaneseq
        %v3213 = vshrl.u32 %v3212, 7
        %v3214 = vsub.s32 5, %v3213
        %v3215 = vrot.slane %v2894, %v3214
        %3217 = vbcast.lane.b32.xlu0 %v3215, 256
        %v3218 = vpop.permute.xlu0 %3217
        %v3219 = vlaneseq
        %v3220 = vshrl.u32 %v3219, 7
        %v3221 = vsub.s32 6, %v3220
        %v3222 = vrot.slane %v2894, %v3221
        %3224 = vbcast.lane.b32.xlu0 %v3222, 256
        %v3225 = vpop.permute.xlu0 %3224
        %v3226 = vlaneseq
        %v3227 = vshrl.u32 %v3226, 7
        %v3228 = vsub.s32 7, %v3227
        %v3229 = vrot.slane %v2894, %v3228
        %3231 = vbcast.lane.b32.xlu0 %v3229, 256
        %v3232 = vpop.permute.xlu0 %3231
        %v3233 = vlaneseq
        %v3234 = vshrl.u32 %v3233, 7
        %v3235 = vsub.s32 0, %v3234
        %v3236 = vrot.slane %v2895, %v3235
        %3238 = vbcast.lane.b32.xlu0 %v3236, 256
        %v3239 = vpop.permute.xlu0 %3238
        %v3240 = vlaneseq
        %v3241 = vshrl.u32 %v3240, 7
        %v3242 = vsub.s32 1, %v3241
        %v3243 = vrot.slane %v2895, %v3242
        %3245 = vbcast.lane.b32.xlu0 %v3243, 256
        %v3246 = vpop.permute.xlu0 %3245
        %v3247 = vlaneseq
        %v3248 = vshrl.u32 %v3247, 7
        %v3249 = vsub.s32 2, %v3248
        %v3250 = vrot.slane %v2895, %v3249
        %3252 = vbcast.lane.b32.xlu0 %v3250, 256
        %v3253 = vpop.permute.xlu0 %3252
        %v3254 = vlaneseq
        %v3255 = vshrl.u32 %v3254, 7
        %v3256 = vsub.s32 3, %v3255
        %v3257 = vrot.slane %v2895, %v3256
        %3259 = vbcast.lane.b32.xlu0 %v3257, 256
        %v3260 = vpop.permute.xlu0 %3259
        %v3261 = vlaneseq
        %v3262 = vshrl.u32 %v3261, 7
        %v3263 = vsub.s32 4, %v3262
        %v3264 = vrot.slane %v2895, %v3263
        %3266 = vbcast.lane.b32.xlu0 %v3264, 256
        %v3267 = vpop.permute.xlu0 %3266
        %v3268 = vlaneseq
        %v3269 = vshrl.u32 %v3268, 7
        %v3270 = vsub.s32 5, %v3269
        %v3271 = vrot.slane %v2895, %v3270
        %3273 = vbcast.lane.b32.xlu0 %v3271, 256
        %v3274 = vpop.permute.xlu0 %3273
        %v3275 = vlaneseq
        %v3276 = vshrl.u32 %v3275, 7
        %v3277 = vsub.s32 6, %v3276
        %v3278 = vrot.slane %v2895, %v3277
        %3280 = vbcast.lane.b32.xlu0 %v3278, 256
        %v3281 = vpop.permute.xlu0 %3280
        %v3282 = vlaneseq
        %v3283 = vshrl.u32 %v3282, 7
        %v3284 = vsub.s32 7, %v3283
        %v3285 = vrot.slane %v2895, %v3284
        %3287 = vbcast.lane.b32.xlu0 %v3285, 256
        %v3288 = vpop.permute.xlu0 %3287
        %v3289 = vlaneseq
        %v3290 = vshrl.u32 %v3289, 7
        %v3291 = vsub.s32 0, %v3290
        %v3292 = vrot.slane %v2896, %v3291
        %3294 = vbcast.lane.b32.xlu0 %v3292, 256
        %v3295 = vpop.permute.xlu0 %3294
        %v3296 = vlaneseq
        %v3297 = vshrl.u32 %v3296, 7
        %v3298 = vsub.s32 1, %v3297
        %v3299 = vrot.slane %v2896, %v3298
        %3301 = vbcast.lane.b32.xlu0 %v3299, 256
        %v3302 = vpop.permute.xlu0 %3301
        %v3303 = vlaneseq
        %v3304 = vshrl.u32 %v3303, 7
        %v3305 = vsub.s32 2, %v3304
        %v3306 = vrot.slane %v2896, %v3305
        %3308 = vbcast.lane.b32.xlu0 %v3306, 256
        %v3309 = vpop.permute.xlu0 %3308
        %v3310 = vlaneseq
        %v3311 = vshrl.u32 %v3310, 7
        %v3312 = vsub.s32 3, %v3311
        %v3313 = vrot.slane %v2896, %v3312
        %3315 = vbcast.lane.b32.xlu0 %v3313, 256
        %v3316 = vpop.permute.xlu0 %3315
        %v3317 = vlaneseq
        %v3318 = vshrl.u32 %v3317, 7
        %v3319 = vsub.s32 4, %v3318
        %v3320 = vrot.slane %v2896, %v3319
        %3322 = vbcast.lane.b32.xlu0 %v3320, 256
        %v3323 = vpop.permute.xlu0 %3322
        %v3324 = vlaneseq
        %v3325 = vshrl.u32 %v3324, 7
        %v3326 = vsub.s32 5, %v3325
        %v3327 = vrot.slane %v2896, %v3326
        %3329 = vbcast.lane.b32.xlu0 %v3327, 256
        %v3330 = vpop.permute.xlu0 %3329
        %v3331 = vlaneseq
        %v3332 = vshrl.u32 %v3331, 7
        %v3333 = vsub.s32 6, %v3332
        %v3334 = vrot.slane %v2896, %v3333
        %3336 = vbcast.lane.b32.xlu0 %v3334, 256
        %v3337 = vpop.permute.xlu0 %3336
        %v3338 = vlaneseq
        %v3339 = vshrl.u32 %v3338, 7
        %v3340 = vsub.s32 7, %v3339
        %v3341 = vrot.slane %v2896, %v3340
        %3343 = vbcast.lane.b32.xlu0 %v3341, 256
        %v3344 = vpop.permute.xlu0 %3343
        %v3345 = vmul.f32 %v2903, %v809
        %v3346 = vmul.f32 %v2910, %v810
        %v3347 = vmul.f32 %v2917, %v811
        %v3348 = vmul.f32 %v2924, %v812
        %v3349 = vmul.f32 %v2931, %v813
        %v3350 = vmul.f32 %v2938, %v814
        %v3351 = vmul.f32 %v2945, %v815
        %v3352 = vmul.f32 %v2952, %v816
        %v3353 = vmul.f32 %v2959, %v809
        %v3354 = vmul.f32 %v2966, %v810
        %v3355 = vmul.f32 %v2973, %v811
        %v3356 = vmul.f32 %v2980, %v812
        %v3357 = vmul.f32 %v2987, %v813
        %v3358 = vmul.f32 %v2994, %v814
        %v3359 = vmul.f32 %v3001, %v815
        %v3360 = vmul.f32 %v3008, %v816
        %v3361 = vmul.f32 %v3015, %v809
        %v3362 = vmul.f32 %v3022, %v810
        %v3363 = vmul.f32 %v3029, %v811
        %v3364 = vmul.f32 %v3036, %v812
        %v3365 = vmul.f32 %v3043, %v813
        %v3366 = vmul.f32 %v3050, %v814
        %v3367 = vmul.f32 %v3057, %v815
        %v3368 = vmul.f32 %v3064, %v816
        %v3369 = vmul.f32 %v3071, %v809
        %v3370 = vmul.f32 %v3078, %v810
        %v3371 = vmul.f32 %v3085, %v811
        %v3372 = vmul.f32 %v3092, %v812
        %v3373 = vmul.f32 %v3099, %v813
        %v3374 = vmul.f32 %v3106, %v814
        %v3375 = vmul.f32 %v3113, %v815
        %v3376 = vmul.f32 %v3120, %v816
        %v3377 = vmul.f32 %v3127, %v809
        %v3378 = vmul.f32 %v3134, %v810
        %v3379 = vmul.f32 %v3141, %v811
        %v3380 = vmul.f32 %v3148, %v812
        %v3381 = vmul.f32 %v3155, %v813
        %v3382 = vmul.f32 %v3162, %v814
        %v3383 = vmul.f32 %v3169, %v815
        %v3384 = vmul.f32 %v3176, %v816
        %v3385 = vmul.f32 %v3183, %v809
        %v3386 = vmul.f32 %v3190, %v810
        %v3387 = vmul.f32 %v3197, %v811
        %v3388 = vmul.f32 %v3204, %v812
        %v3389 = vmul.f32 %v3211, %v813
        %v3390 = vmul.f32 %v3218, %v814
        %v3391 = vmul.f32 %v3225, %v815
        %v3392 = vmul.f32 %v3232, %v816
        %v3393 = vmul.f32 %v3239, %v809
        %v3394 = vmul.f32 %v3246, %v810
        %v3395 = vmul.f32 %v3253, %v811
        %v3396 = vmul.f32 %v3260, %v812
        %v3397 = vmul.f32 %v3267, %v813
        %v3398 = vmul.f32 %v3274, %v814
        %v3399 = vmul.f32 %v3281, %v815
        %v3400 = vmul.f32 %v3288, %v816
        %v3401 = vmul.f32 %v3295, %v809
        %v3402 = vmul.f32 %v3302, %v810
        %v3403 = vmul.f32 %v3309, %v811
        %v3404 = vmul.f32 %v3316, %v812
        %v3405 = vmul.f32 %v3323, %v813
        %v3406 = vmul.f32 %v3330, %v814
        %v3407 = vmul.f32 %v3337, %v815
        %v3408 = vmul.f32 %v3344, %v816
        %v3409 = vsel %vm1593, %v3345, 0.0
        %v3410 = vrot.slane %v3409, 4
        %v3411 = vadd.f32 %v3409, %v3410
        %v3412 = vrot.slane %v3411, 2
        %v3413 = vadd.f32 %v3411, %v3412
        %v3414 = vrot.slane %v3413, 1
        %v3415 = vadd.f32 %v3413, %v3414
        %v3416 = vsel %vm1593, %v3346, 0.0
        %v3417 = vrot.slane %v3416, 4
        %v3418 = vadd.f32 %v3416, %v3417
        %v3419 = vrot.slane %v3418, 2
        %v3420 = vadd.f32 %v3418, %v3419
        %v3421 = vrot.slane %v3420, 1
        %v3422 = vadd.f32 %v3420, %v3421
        %v3423 = vsel %vm1593, %v3347, 0.0
        %v3424 = vrot.slane %v3423, 4
        %v3425 = vadd.f32 %v3423, %v3424
        %v3426 = vrot.slane %v3425, 2
        %v3427 = vadd.f32 %v3425, %v3426
        %v3428 = vrot.slane %v3427, 1
        %v3429 = vadd.f32 %v3427, %v3428
        %v3430 = vsel %vm1593, %v3348, 0.0
        %v3431 = vrot.slane %v3430, 4
        %v3432 = vadd.f32 %v3430, %v3431
        %v3433 = vrot.slane %v3432, 2
        %v3434 = vadd.f32 %v3432, %v3433
        %v3435 = vrot.slane %v3434, 1
        %v3436 = vadd.f32 %v3434, %v3435
        %v3437 = vsel %vm1593, %v3349, 0.0
        %v3438 = vrot.slane %v3437, 4
        %v3439 = vadd.f32 %v3437, %v3438
        %v3440 = vrot.slane %v3439, 2
        %v3441 = vadd.f32 %v3439, %v3440
        %v3442 = vrot.slane %v3441, 1
        %v3443 = vadd.f32 %v3441, %v3442
        %v3444 = vsel %vm1593, %v3350, 0.0
        %v3445 = vrot.slane %v3444, 4
        %v3446 = vadd.f32 %v3444, %v3445
        %v3447 = vrot.slane %v3446, 2
        %v3448 = vadd.f32 %v3446, %v3447
        %v3449 = vrot.slane %v3448, 1
        %v3450 = vadd.f32 %v3448, %v3449
        %v3451 = vsel %vm1593, %v3351, 0.0
        %v3452 = vrot.slane %v3451, 4
        %v3453 = vadd.f32 %v3451, %v3452
        %v3454 = vrot.slane %v3453, 2
        %v3455 = vadd.f32 %v3453, %v3454
        %v3456 = vrot.slane %v3455, 1
        %v3457 = vadd.f32 %v3455, %v3456
        %v3458 = vsel %vm1593, %v3352, 0.0
        %v3459 = vrot.slane %v3458, 4
        %v3460 = vadd.f32 %v3458, %v3459
        %v3461 = vrot.slane %v3460, 2
        %v3462 = vadd.f32 %v3460, %v3461
        %v3463 = vrot.slane %v3462, 1
        %v3464 = vadd.f32 %v3462, %v3463
        %v3465 = vsel %vm1593, %v3353, 0.0
        %v3466 = vrot.slane %v3465, 4
        %v3467 = vadd.f32 %v3465, %v3466
        %v3468 = vrot.slane %v3467, 2
        %v3469 = vadd.f32 %v3467, %v3468
        %v3470 = vrot.slane %v3469, 1
        %v3471 = vadd.f32 %v3469, %v3470
        %v3472 = vsel %vm1593, %v3354, 0.0
        %v3473 = vrot.slane %v3472, 4
        %v3474 = vadd.f32 %v3472, %v3473
        %v3475 = vrot.slane %v3474, 2
        %v3476 = vadd.f32 %v3474, %v3475
        %v3477 = vrot.slane %v3476, 1
        %v3478 = vadd.f32 %v3476, %v3477
        %v3479 = vsel %vm1593, %v3355, 0.0
        %v3480 = vrot.slane %v3479, 4
        %v3481 = vadd.f32 %v3479, %v3480
        %v3482 = vrot.slane %v3481, 2
        %v3483 = vadd.f32 %v3481, %v3482
        %v3484 = vrot.slane %v3483, 1
        %v3485 = vadd.f32 %v3483, %v3484
        %v3486 = vsel %vm1593, %v3356, 0.0
        %v3487 = vrot.slane %v3486, 4
        %v3488 = vadd.f32 %v3486, %v3487
        %v3489 = vrot.slane %v3488, 2
        %v3490 = vadd.f32 %v3488, %v3489
        %v3491 = vrot.slane %v3490, 1
        %v3492 = vadd.f32 %v3490, %v3491
        %v3493 = vsel %vm1593, %v3357, 0.0
        %v3494 = vrot.slane %v3493, 4
        %v3495 = vadd.f32 %v3493, %v3494
        %v3496 = vrot.slane %v3495, 2
        %v3497 = vadd.f32 %v3495, %v3496
        %v3498 = vrot.slane %v3497, 1
        %v3499 = vadd.f32 %v3497, %v3498
        %v3500 = vsel %vm1593, %v3358, 0.0
        %v3501 = vrot.slane %v3500, 4
        %v3502 = vadd.f32 %v3500, %v3501
        %v3503 = vrot.slane %v3502, 2
        %v3504 = vadd.f32 %v3502, %v3503
        %v3505 = vrot.slane %v3504, 1
        %v3506 = vadd.f32 %v3504, %v3505
        %v3507 = vsel %vm1593, %v3359, 0.0
        %v3508 = vrot.slane %v3507, 4
        %v3509 = vadd.f32 %v3507, %v3508
        %v3510 = vrot.slane %v3509, 2
        %v3511 = vadd.f32 %v3509, %v3510
        %v3512 = vrot.slane %v3511, 1
        %v3513 = vadd.f32 %v3511, %v3512
        %v3514 = vsel %vm1593, %v3360, 0.0
        %v3515 = vrot.slane %v3514, 4
        %v3516 = vadd.f32 %v3514, %v3515
        %v3517 = vrot.slane %v3516, 2
        %v3518 = vadd.f32 %v3516, %v3517
        %v3519 = vrot.slane %v3518, 1
        %v3520 = vadd.f32 %v3518, %v3519
        %v3521 = vsel %vm1593, %v3361, 0.0
        %v3522 = vrot.slane %v3521, 4
        %v3523 = vadd.f32 %v3521, %v3522
        %v3524 = vrot.slane %v3523, 2
        %v3525 = vadd.f32 %v3523, %v3524
        %v3526 = vrot.slane %v3525, 1
        %v3527 = vadd.f32 %v3525, %v3526
        %v3528 = vsel %vm1593, %v3362, 0.0
        %v3529 = vrot.slane %v3528, 4
        %v3530 = vadd.f32 %v3528, %v3529
        %v3531 = vrot.slane %v3530, 2
        %v3532 = vadd.f32 %v3530, %v3531
        %v3533 = vrot.slane %v3532, 1
        %v3534 = vadd.f32 %v3532, %v3533
        %v3535 = vsel %vm1593, %v3363, 0.0
        %v3536 = vrot.slane %v3535, 4
        %v3537 = vadd.f32 %v3535, %v3536
        %v3538 = vrot.slane %v3537, 2
        %v3539 = vadd.f32 %v3537, %v3538
        %v3540 = vrot.slane %v3539, 1
        %v3541 = vadd.f32 %v3539, %v3540
        %v3542 = vsel %vm1593, %v3364, 0.0
        %v3543 = vrot.slane %v3542, 4
        %v3544 = vadd.f32 %v3542, %v3543
        %v3545 = vrot.slane %v3544, 2
        %v3546 = vadd.f32 %v3544, %v3545
        %v3547 = vrot.slane %v3546, 1
        %v3548 = vadd.f32 %v3546, %v3547
        %v3549 = vsel %vm1593, %v3365, 0.0
        %v3550 = vrot.slane %v3549, 4
        %v3551 = vadd.f32 %v3549, %v3550
        %v3552 = vrot.slane %v3551, 2
        %v3553 = vadd.f32 %v3551, %v3552
        %v3554 = vrot.slane %v3553, 1
        %v3555 = vadd.f32 %v3553, %v3554
        %v3556 = vsel %vm1593, %v3366, 0.0
        %v3557 = vrot.slane %v3556, 4
        %v3558 = vadd.f32 %v3556, %v3557
        %v3559 = vrot.slane %v3558, 2
        %v3560 = vadd.f32 %v3558, %v3559
        %v3561 = vrot.slane %v3560, 1
        %v3562 = vadd.f32 %v3560, %v3561
        %v3563 = vsel %vm1593, %v3367, 0.0
        %v3564 = vrot.slane %v3563, 4
        %v3565 = vadd.f32 %v3563, %v3564
        %v3566 = vrot.slane %v3565, 2
        %v3567 = vadd.f32 %v3565, %v3566
        %v3568 = vrot.slane %v3567, 1
        %v3569 = vadd.f32 %v3567, %v3568
        %v3570 = vsel %vm1593, %v3368, 0.0
        %v3571 = vrot.slane %v3570, 4
        %v3572 = vadd.f32 %v3570, %v3571
        %v3573 = vrot.slane %v3572, 2
        %v3574 = vadd.f32 %v3572, %v3573
        %v3575 = vrot.slane %v3574, 1
        %v3576 = vadd.f32 %v3574, %v3575
        %v3577 = vsel %vm1593, %v3369, 0.0
        %v3578 = vrot.slane %v3577, 4
        %v3579 = vadd.f32 %v3577, %v3578
        %v3580 = vrot.slane %v3579, 2
        %v3581 = vadd.f32 %v3579, %v3580
        %v3582 = vrot.slane %v3581, 1
        %v3583 = vadd.f32 %v3581, %v3582
        %v3584 = vsel %vm1593, %v3370, 0.0
        %v3585 = vrot.slane %v3584, 4
        %v3586 = vadd.f32 %v3584, %v3585
        %v3587 = vrot.slane %v3586, 2
        %v3588 = vadd.f32 %v3586, %v3587
        %v3589 = vrot.slane %v3588, 1
        %v3590 = vadd.f32 %v3588, %v3589
        %v3591 = vsel %vm1593, %v3371, 0.0
        %v3592 = vrot.slane %v3591, 4
        %v3593 = vadd.f32 %v3591, %v3592
        %v3594 = vrot.slane %v3593, 2
        %v3595 = vadd.f32 %v3593, %v3594
        %v3596 = vrot.slane %v3595, 1
        %v3597 = vadd.f32 %v3595, %v3596
        %v3598 = vsel %vm1593, %v3372, 0.0
        %v3599 = vrot.slane %v3598, 4
        %v3600 = vadd.f32 %v3598, %v3599
        %v3601 = vrot.slane %v3600, 2
        %v3602 = vadd.f32 %v3600, %v3601
        %v3603 = vrot.slane %v3602, 1
        %v3604 = vadd.f32 %v3602, %v3603
        %v3605 = vsel %vm1593, %v3373, 0.0
        %v3606 = vrot.slane %v3605, 4
        %v3607 = vadd.f32 %v3605, %v3606
        %v3608 = vrot.slane %v3607, 2
        %v3609 = vadd.f32 %v3607, %v3608
        %v3610 = vrot.slane %v3609, 1
        %v3611 = vadd.f32 %v3609, %v3610
        %v3612 = vsel %vm1593, %v3374, 0.0
        %v3613 = vrot.slane %v3612, 4
        %v3614 = vadd.f32 %v3612, %v3613
        %v3615 = vrot.slane %v3614, 2
        %v3616 = vadd.f32 %v3614, %v3615
        %v3617 = vrot.slane %v3616, 1
        %v3618 = vadd.f32 %v3616, %v3617
        %v3619 = vsel %vm1593, %v3375, 0.0
        %v3620 = vrot.slane %v3619, 4
        %v3621 = vadd.f32 %v3619, %v3620
        %v3622 = vrot.slane %v3621, 2
        %v3623 = vadd.f32 %v3621, %v3622
        %v3624 = vrot.slane %v3623, 1
        %v3625 = vadd.f32 %v3623, %v3624
        %v3626 = vsel %vm1593, %v3376, 0.0
        %v3627 = vrot.slane %v3626, 4
        %v3628 = vadd.f32 %v3626, %v3627
        %v3629 = vrot.slane %v3628, 2
        %v3630 = vadd.f32 %v3628, %v3629
        %v3631 = vrot.slane %v3630, 1
        %v3632 = vadd.f32 %v3630, %v3631
        %v3633 = vsel %vm1593, %v3377, 0.0
        %v3634 = vrot.slane %v3633, 4
        %v3635 = vadd.f32 %v3633, %v3634
        %v3636 = vrot.slane %v3635, 2
        %v3637 = vadd.f32 %v3635, %v3636
        %v3638 = vrot.slane %v3637, 1
        %v3639 = vadd.f32 %v3637, %v3638
        %v3640 = vsel %vm1593, %v3378, 0.0
        %v3641 = vrot.slane %v3640, 4
        %v3642 = vadd.f32 %v3640, %v3641
        %v3643 = vrot.slane %v3642, 2
        %v3644 = vadd.f32 %v3642, %v3643
        %v3645 = vrot.slane %v3644, 1
        %v3646 = vadd.f32 %v3644, %v3645
        %v3647 = vsel %vm1593, %v3379, 0.0
        %v3648 = vrot.slane %v3647, 4
        %v3649 = vadd.f32 %v3647, %v3648
        %v3650 = vrot.slane %v3649, 2
        %v3651 = vadd.f32 %v3649, %v3650
        %v3652 = vrot.slane %v3651, 1
        %v3653 = vadd.f32 %v3651, %v3652
        %v3654 = vsel %vm1593, %v3380, 0.0
        %v3655 = vrot.slane %v3654, 4
        %v3656 = vadd.f32 %v3654, %v3655
        %v3657 = vrot.slane %v3656, 2
        %v3658 = vadd.f32 %v3656, %v3657
        %v3659 = vrot.slane %v3658, 1
        %v3660 = vadd.f32 %v3658, %v3659
        %v3661 = vsel %vm1593, %v3381, 0.0
        %v3662 = vrot.slane %v3661, 4
        %v3663 = vadd.f32 %v3661, %v3662
        %v3664 = vrot.slane %v3663, 2
        %v3665 = vadd.f32 %v3663, %v3664
        %v3666 = vrot.slane %v3665, 1
        %v3667 = vadd.f32 %v3665, %v3666
        %v3668 = vsel %vm1593, %v3382, 0.0
        %v3669 = vrot.slane %v3668, 4
        %v3670 = vadd.f32 %v3668, %v3669
        %v3671 = vrot.slane %v3670, 2
        %v3672 = vadd.f32 %v3670, %v3671
        %v3673 = vrot.slane %v3672, 1
        %v3674 = vadd.f32 %v3672, %v3673
        %v3675 = vsel %vm1593, %v3383, 0.0
        %v3676 = vrot.slane %v3675, 4
        %v3677 = vadd.f32 %v3675, %v3676
        %v3678 = vrot.slane %v3677, 2
        %v3679 = vadd.f32 %v3677, %v3678
        %v3680 = vrot.slane %v3679, 1
        %v3681 = vadd.f32 %v3679, %v3680
        %v3682 = vsel %vm1593, %v3384, 0.0
        %v3683 = vrot.slane %v3682, 4
        %v3684 = vadd.f32 %v3682, %v3683
        %v3685 = vrot.slane %v3684, 2
        %v3686 = vadd.f32 %v3684, %v3685
        %v3687 = vrot.slane %v3686, 1
        %v3688 = vadd.f32 %v3686, %v3687
        %v3689 = vsel %vm1593, %v3385, 0.0
        %v3690 = vrot.slane %v3689, 4
        %v3691 = vadd.f32 %v3689, %v3690
        %v3692 = vrot.slane %v3691, 2
        %v3693 = vadd.f32 %v3691, %v3692
        %v3694 = vrot.slane %v3693, 1
        %v3695 = vadd.f32 %v3693, %v3694
        %v3696 = vsel %vm1593, %v3386, 0.0
        %v3697 = vrot.slane %v3696, 4
        %v3698 = vadd.f32 %v3696, %v3697
        %v3699 = vrot.slane %v3698, 2
        %v3700 = vadd.f32 %v3698, %v3699
        %v3701 = vrot.slane %v3700, 1
        %v3702 = vadd.f32 %v3700, %v3701
        %v3703 = vsel %vm1593, %v3387, 0.0
        %v3704 = vrot.slane %v3703, 4
        %v3705 = vadd.f32 %v3703, %v3704
        %v3706 = vrot.slane %v3705, 2
        %v3707 = vadd.f32 %v3705, %v3706
        %v3708 = vrot.slane %v3707, 1
        %v3709 = vadd.f32 %v3707, %v3708
        %v3710 = vsel %vm1593, %v3388, 0.0
        %v3711 = vrot.slane %v3710, 4
        %v3712 = vadd.f32 %v3710, %v3711
        %v3713 = vrot.slane %v3712, 2
        %v3714 = vadd.f32 %v3712, %v3713
        %v3715 = vrot.slane %v3714, 1
        %v3716 = vadd.f32 %v3714, %v3715
        %v3717 = vsel %vm1593, %v3389, 0.0
        %v3718 = vrot.slane %v3717, 4
        %v3719 = vadd.f32 %v3717, %v3718
        %v3720 = vrot.slane %v3719, 2
        %v3721 = vadd.f32 %v3719, %v3720
        %v3722 = vrot.slane %v3721, 1
        %v3723 = vadd.f32 %v3721, %v3722
        %v3724 = vsel %vm1593, %v3390, 0.0
        %v3725 = vrot.slane %v3724, 4
        %v3726 = vadd.f32 %v3724, %v3725
        %v3727 = vrot.slane %v3726, 2
        %v3728 = vadd.f32 %v3726, %v3727
        %v3729 = vrot.slane %v3728, 1
        %v3730 = vadd.f32 %v3728, %v3729
        %v3731 = vsel %vm1593, %v3391, 0.0
        %v3732 = vrot.slane %v3731, 4
        %v3733 = vadd.f32 %v3731, %v3732
        %v3734 = vrot.slane %v3733, 2
        %v3735 = vadd.f32 %v3733, %v3734
        %v3736 = vrot.slane %v3735, 1
        %v3737 = vadd.f32 %v3735, %v3736
        %v3738 = vsel %vm1593, %v3392, 0.0
        %v3739 = vrot.slane %v3738, 4
        %v3740 = vadd.f32 %v3738, %v3739
        %v3741 = vrot.slane %v3740, 2
        %v3742 = vadd.f32 %v3740, %v3741
        %v3743 = vrot.slane %v3742, 1
        %v3744 = vadd.f32 %v3742, %v3743
        %v3745 = vsel %vm1593, %v3393, 0.0
        %v3746 = vrot.slane %v3745, 4
        %v3747 = vadd.f32 %v3745, %v3746
        %v3748 = vrot.slane %v3747, 2
        %v3749 = vadd.f32 %v3747, %v3748
        %v3750 = vrot.slane %v3749, 1
        %v3751 = vadd.f32 %v3749, %v3750
        %v3752 = vsel %vm1593, %v3394, 0.0
        %v3753 = vrot.slane %v3752, 4
        %v3754 = vadd.f32 %v3752, %v3753
        %v3755 = vrot.slane %v3754, 2
        %v3756 = vadd.f32 %v3754, %v3755
        %v3757 = vrot.slane %v3756, 1
        %v3758 = vadd.f32 %v3756, %v3757
        %v3759 = vsel %vm1593, %v3395, 0.0
        %v3760 = vrot.slane %v3759, 4
        %v3761 = vadd.f32 %v3759, %v3760
        %v3762 = vrot.slane %v3761, 2
        %v3763 = vadd.f32 %v3761, %v3762
        %v3764 = vrot.slane %v3763, 1
        %v3765 = vadd.f32 %v3763, %v3764
        %v3766 = vsel %vm1593, %v3396, 0.0
        %v3767 = vrot.slane %v3766, 4
        %v3768 = vadd.f32 %v3766, %v3767
        %v3769 = vrot.slane %v3768, 2
        %v3770 = vadd.f32 %v3768, %v3769
        %v3771 = vrot.slane %v3770, 1
        %v3772 = vadd.f32 %v3770, %v3771
        %v3773 = vsel %vm1593, %v3397, 0.0
        %v3774 = vrot.slane %v3773, 4
        %v3775 = vadd.f32 %v3773, %v3774
        %v3776 = vrot.slane %v3775, 2
        %v3777 = vadd.f32 %v3775, %v3776
        %v3778 = vrot.slane %v3777, 1
        %v3779 = vadd.f32 %v3777, %v3778
        %v3780 = vsel %vm1593, %v3398, 0.0
        %v3781 = vrot.slane %v3780, 4
        %v3782 = vadd.f32 %v3780, %v3781
        %v3783 = vrot.slane %v3782, 2
        %v3784 = vadd.f32 %v3782, %v3783
        %v3785 = vrot.slane %v3784, 1
        %v3786 = vadd.f32 %v3784, %v3785
        %v3787 = vsel %vm1593, %v3399, 0.0
        %v3788 = vrot.slane %v3787, 4
        %v3789 = vadd.f32 %v3787, %v3788
        %v3790 = vrot.slane %v3789, 2
        %v3791 = vadd.f32 %v3789, %v3790
        %v3792 = vrot.slane %v3791, 1
        %v3793 = vadd.f32 %v3791, %v3792
        %v3794 = vsel %vm1593, %v3400, 0.0
        %v3795 = vrot.slane %v3794, 4
        %v3796 = vadd.f32 %v3794, %v3795
        %v3797 = vrot.slane %v3796, 2
        %v3798 = vadd.f32 %v3796, %v3797
        %v3799 = vrot.slane %v3798, 1
        %v3800 = vadd.f32 %v3798, %v3799
        %v3801 = vsel %vm1593, %v3401, 0.0
        %v3802 = vrot.slane %v3801, 4
        %v3803 = vadd.f32 %v3801, %v3802
        %v3804 = vrot.slane %v3803, 2
        %v3805 = vadd.f32 %v3803, %v3804
        %v3806 = vrot.slane %v3805, 1
        %v3807 = vadd.f32 %v3805, %v3806
        %v3808 = vsel %vm1593, %v3402, 0.0
        %v3809 = vrot.slane %v3808, 4
        %v3810 = vadd.f32 %v3808, %v3809
        %v3811 = vrot.slane %v3810, 2
        %v3812 = vadd.f32 %v3810, %v3811
        %v3813 = vrot.slane %v3812, 1
        %v3814 = vadd.f32 %v3812, %v3813
        %v3815 = vsel %vm1593, %v3403, 0.0
        %v3816 = vrot.slane %v3815, 4
        %v3817 = vadd.f32 %v3815, %v3816
        %v3818 = vrot.slane %v3817, 2
        %v3819 = vadd.f32 %v3817, %v3818
        %v3820 = vrot.slane %v3819, 1
        %v3821 = vadd.f32 %v3819, %v3820
        %v3822 = vsel %vm1593, %v3404, 0.0
        %v3823 = vrot.slane %v3822, 4
        %v3824 = vadd.f32 %v3822, %v3823
        %v3825 = vrot.slane %v3824, 2
        %v3826 = vadd.f32 %v3824, %v3825
        %v3827 = vrot.slane %v3826, 1
        %v3828 = vadd.f32 %v3826, %v3827
        %v3829 = vsel %vm1593, %v3405, 0.0
        %v3830 = vrot.slane %v3829, 4
        %v3831 = vadd.f32 %v3829, %v3830
        %v3832 = vrot.slane %v3831, 2
        %v3833 = vadd.f32 %v3831, %v3832
        %v3834 = vrot.slane %v3833, 1
        %v3835 = vadd.f32 %v3833, %v3834
        %v3836 = vsel %vm1593, %v3406, 0.0
        %v3837 = vrot.slane %v3836, 4
        %v3838 = vadd.f32 %v3836, %v3837
        %v3839 = vrot.slane %v3838, 2
        %v3840 = vadd.f32 %v3838, %v3839
        %v3841 = vrot.slane %v3840, 1
        %v3842 = vadd.f32 %v3840, %v3841
        %v3843 = vsel %vm1593, %v3407, 0.0
        %v3844 = vrot.slane %v3843, 4
        %v3845 = vadd.f32 %v3843, %v3844
        %v3846 = vrot.slane %v3845, 2
        %v3847 = vadd.f32 %v3845, %v3846
        %v3848 = vrot.slane %v3847, 1
        %v3849 = vadd.f32 %v3847, %v3848
        %v3850 = vsel %vm1593, %v3408, 0.0
        %v3851 = vrot.slane %v3850, 4
        %v3852 = vadd.f32 %v3850, %v3851
        %v3853 = vrot.slane %v3852, 2
        %v3854 = vadd.f32 %v3852, %v3853
        %v3855 = vrot.slane %v3854, 1
        %v3856 = vadd.f32 %v3854, %v3855
        %3857 = vrot.lane.b32.xlu0 %v779, 64
        %v3858 = vpop.permute.xlu0 %3857
        %v3868 = vsel %vm1830, %v3422, %v3415
        %v3869 = vsel %vm1832, %v3429, %v3868
        %v3870 = vsel %vm1834, %v3436, %v3869
        %v3871 = vsel %vm1836, %v3443, %v3870
        %v3872 = vsel %vm1838, %v3450, %v3871
        %v3873 = vsel %vm1840, %v3457, %v3872
        %v3874 = vsel %vm1842, %v3464, %v3873
        %v3877 = vsel %vm1593, %v2889, 0
        %3879 = vmatprep.subr.mxu0 0.0
        %3880 = vmatpush1.msra.mxu0 %v3858
        %3881 = vmatprep.subr.mxu0 0.0
        %3882 = vmatpush1.msra.mxu0 0.0
        %3883 = vmatprep.subr.mxu0 0.0
        %3884 = vmatpush1.msra.mxu0 0.0
        %3885 = vmatprep.subr.mxu0 0.0
        %3886 = vmatpush1.msra.mxu0 0.0
        %3887 = vmatprep.subr.mxu0 0.0
        %3888 = vmatpush1.msra.mxu0 0.0
        %3889 = vmatprep.subr.mxu0 0.0
        %3890 = vmatpush1.msra.mxu0 0.0
        %3891 = vmatprep.subr.mxu0 0.0
        %3892 = vmatpush1.msra.mxu0 0.0
        %3893 = vmatprep.subr.mxu0 0.0
        %3894 = vmatpush1.msra.mxu0 0.0
        %3895 = vmatprep.subr.mxu0 0.0
        %3896 = vmatpush1.msra.mxu0 0.0
        %3897 = vmatprep.subr.mxu0 0.0
        %3898 = vmatpush1.msra.mxu0 0.0
        %3899 = vmatprep.subr.mxu0 0.0
        %3900 = vmatpush1.msra.mxu0 0.0
        %3901 = vmatprep.subr.mxu0 0.0
        %3902 = vmatpush1.msra.mxu0 0.0
        %3903 = vmatprep.subr.mxu0 0.0
        %3904 = vmatpush1.msra.mxu0 0.0
        %3905 = vmatprep.subr.mxu0 0.0
        %3906 = vmatpush1.msra.mxu0 0.0
        %3907 = vmatprep.subr.mxu0 0.0
        %3908 = vmatpush1.msra.mxu0 0.0
        %3909 = vmatprep.subr.mxu0 0.0
        %3910 = vmatpush1.msra.mxu0 0.0
        %3911 = vmatprep.subr.mxu0 0.0
        %3912 = vmatpush1.msra.mxu0 0.0
        %3913 = vmatprep.subr.mxu0 0.0
        %3914 = vmatpush1.msra.mxu0 0.0
        %3915 = vmatprep.subr.mxu0 0.0
        %3916 = vmatpush1.msra.mxu0 0.0
        %3917 = vmatprep.subr.mxu0 0.0
        %3918 = vmatpush1.msra.mxu0 0.0
        %3919 = vmatprep.subr.mxu0 0.0
        %3920 = vmatpush1.msra.mxu0 0.0
        %3921 = vmatprep.subr.mxu0 0.0
        %3922 = vmatpush1.msra.mxu0 0.0
        %3923 = vmatprep.subr.mxu0 0.0
        %3924 = vmatpush1.msra.mxu0 0.0
        %3925 = vmatprep.subr.mxu0 0.0
        %3926 = vmatpush1.msra.mxu0 0.0
        %3927 = vmatprep.subr.mxu0 0.0
        %3928 = vmatpush1.msra.mxu0 0.0
        %3929 = vmatprep.subr.mxu0 0.0
        %3930 = vmatpush1.msra.mxu0 0.0
        %3931 = vmatprep.subr.mxu0 0.0
        %3932 = vmatpush1.msra.mxu0 0.0
        %3933 = vmatprep.subr.mxu0 0.0
        %3934 = vmatpush1.msra.mxu0 0.0
        %3935 = vmatprep.subr.mxu0 0.0
        %3936 = vmatpush1.msra.mxu0 0.0
        %3937 = vmatprep.subr.mxu0 0.0
        %3938 = vmatpush1.msra.mxu0 0.0
        %3939 = vmatprep.subr.mxu0 0.0
        %3940 = vmatpush1.msra.mxu0 0.0
        %3941 = vmatprep.subr.mxu0 0.0
        %3942 = vmatpush1.msra.mxu0 0.0
        %3943 = vmatprep.mubr.f32.mxu0 0.0
        %3944 = vmatmul.mubr.f32.gmra.mrb[0].mxu0 %v3877
        %v3945 = vpop.f32.mrb[0].mxu0
        %v3946 = vadd.f32 %v3874, %v3945
        %v3947 = vpop.f32.mrb[0].mxu0
        %3948 = vdwg.mxu0
        %3949 = vrot.lane.b32.xlu0 %v784, 64
        %v3950 = vpop.permute.xlu0 %3949
        %v3960 = vsel %vm1830, %v3478, %v3471
        %v3961 = vsel %vm1832, %v3485, %v3960
        %v3962 = vsel %vm1834, %v3492, %v3961
        %v3963 = vsel %vm1836, %v3499, %v3962
        %v3964 = vsel %vm1838, %v3506, %v3963
        %v3965 = vsel %vm1840, %v3513, %v3964
        %v3966 = vsel %vm1842, %v3520, %v3965
        %v3969 = vsel %vm1593, %v2890, 0
        %3971 = vmatprep.subr.mxu0 0.0
        %3972 = vmatpush1.msra.mxu0 %v3950
        %3973 = vmatprep.subr.mxu0 0.0
        %3974 = vmatpush1.msra.mxu0 0.0
        %3975 = vmatprep.subr.mxu0 0.0
        %3976 = vmatpush1.msra.mxu0 0.0
        %3977 = vmatprep.subr.mxu0 0.0
        %3978 = vmatpush1.msra.mxu0 0.0
        %3979 = vmatprep.subr.mxu0 0.0
        %3980 = vmatpush1.msra.mxu0 0.0
        %3981 = vmatprep.subr.mxu0 0.0
        %3982 = vmatpush1.msra.mxu0 0.0
        %3983 = vmatprep.subr.mxu0 0.0
        %3984 = vmatpush1.msra.mxu0 0.0
        %3985 = vmatprep.subr.mxu0 0.0
        %3986 = vmatpush1.msra.mxu0 0.0
        %3987 = vmatprep.subr.mxu0 0.0
        %3988 = vmatpush1.msra.mxu0 0.0
        %3989 = vmatprep.subr.mxu0 0.0
        %3990 = vmatpush1.msra.mxu0 0.0
        %3991 = vmatprep.subr.mxu0 0.0
        %3992 = vmatpush1.msra.mxu0 0.0
        %3993 = vmatprep.subr.mxu0 0.0
        %3994 = vmatpush1.msra.mxu0 0.0
        %3995 = vmatprep.subr.mxu0 0.0
        %3996 = vmatpush1.msra.mxu0 0.0
        %3997 = vmatprep.subr.mxu0 0.0
        %3998 = vmatpush1.msra.mxu0 0.0
        %3999 = vmatprep.subr.mxu0 0.0
        %4000 = vmatpush1.msra.mxu0 0.0
        %4001 = vmatprep.subr.mxu0 0.0
        %4002 = vmatpush1.msra.mxu0 0.0
        %4003 = vmatprep.subr.mxu0 0.0
        %4004 = vmatpush1.msra.mxu0 0.0
        %4005 = vmatprep.subr.mxu0 0.0
        %4006 = vmatpush1.msra.mxu0 0.0
        %4007 = vmatprep.subr.mxu0 0.0
        %4008 = vmatpush1.msra.mxu0 0.0
        %4009 = vmatprep.subr.mxu0 0.0
        %4010 = vmatpush1.msra.mxu0 0.0
        %4011 = vmatprep.subr.mxu0 0.0
        %4012 = vmatpush1.msra.mxu0 0.0
        %4013 = vmatprep.subr.mxu0 0.0
        %4014 = vmatpush1.msra.mxu0 0.0
        %4015 = vmatprep.subr.mxu0 0.0
        %4016 = vmatpush1.msra.mxu0 0.0
        %4017 = vmatprep.subr.mxu0 0.0
        %4018 = vmatpush1.msra.mxu0 0.0
        %4019 = vmatprep.subr.mxu0 0.0
        %4020 = vmatpush1.msra.mxu0 0.0
        %4021 = vmatprep.subr.mxu0 0.0
        %4022 = vmatpush1.msra.mxu0 0.0
        %4023 = vmatprep.subr.mxu0 0.0
        %4024 = vmatpush1.msra.mxu0 0.0
        %4025 = vmatprep.subr.mxu0 0.0
        %4026 = vmatpush1.msra.mxu0 0.0
        %4027 = vmatprep.subr.mxu0 0.0
        %4028 = vmatpush1.msra.mxu0 0.0
        %4029 = vmatprep.subr.mxu0 0.0
        %4030 = vmatpush1.msra.mxu0 0.0
        %4031 = vmatprep.subr.mxu0 0.0
        %4032 = vmatpush1.msra.mxu0 0.0
        %4033 = vmatprep.subr.mxu0 0.0
        %4034 = vmatpush1.msra.mxu0 0.0
        %4035 = vmatprep.mubr.f32.mxu0 0.0
        %4036 = vmatmul.mubr.f32.gmra.mrb[0].mxu0 %v3969
        %v4037 = vpop.f32.mrb[0].mxu0
        %v4038 = vadd.f32 %v3966, %v4037
        %v4039 = vpop.f32.mrb[0].mxu0
        %4040 = vdwg.mxu0
        %4041 = vrot.lane.b32.xlu0 %v789, 64
        %v4042 = vpop.permute.xlu0 %4041
        %v4052 = vsel %vm1830, %v3534, %v3527
        %v4053 = vsel %vm1832, %v3541, %v4052
        %v4054 = vsel %vm1834, %v3548, %v4053
        %v4055 = vsel %vm1836, %v3555, %v4054
        %v4056 = vsel %vm1838, %v3562, %v4055
        %v4057 = vsel %vm1840, %v3569, %v4056
        %v4058 = vsel %vm1842, %v3576, %v4057
        %v4061 = vsel %vm1593, %v2891, 0
        %4063 = vmatprep.subr.mxu0 0.0
        %4064 = vmatpush1.msra.mxu0 %v4042
        %4065 = vmatprep.subr.mxu0 0.0
        %4066 = vmatpush1.msra.mxu0 0.0
        %4067 = vmatprep.subr.mxu0 0.0
        %4068 = vmatpush1.msra.mxu0 0.0
        %4069 = vmatprep.subr.mxu0 0.0
        %4070 = vmatpush1.msra.mxu0 0.0
        %4071 = vmatprep.subr.mxu0 0.0
        %4072 = vmatpush1.msra.mxu0 0.0
        %4073 = vmatprep.subr.mxu0 0.0
        %4074 = vmatpush1.msra.mxu0 0.0
        %4075 = vmatprep.subr.mxu0 0.0
        %4076 = vmatpush1.msra.mxu0 0.0
        %4077 = vmatprep.subr.mxu0 0.0
        %4078 = vmatpush1.msra.mxu0 0.0
        %4079 = vmatprep.subr.mxu0 0.0
        %4080 = vmatpush1.msra.mxu0 0.0
        %4081 = vmatprep.subr.mxu0 0.0
        %4082 = vmatpush1.msra.mxu0 0.0
        %4083 = vmatprep.subr.mxu0 0.0
        %4084 = vmatpush1.msra.mxu0 0.0
        %4085 = vmatprep.subr.mxu0 0.0
        %4086 = vmatpush1.msra.mxu0 0.0
        %4087 = vmatprep.subr.mxu0 0.0
        %4088 = vmatpush1.msra.mxu0 0.0
        %4089 = vmatprep.subr.mxu0 0.0
        %4090 = vmatpush1.msra.mxu0 0.0
        %4091 = vmatprep.subr.mxu0 0.0
        %4092 = vmatpush1.msra.mxu0 0.0
        %4093 = vmatprep.subr.mxu0 0.0
        %4094 = vmatpush1.msra.mxu0 0.0
        %4095 = vmatprep.subr.mxu0 0.0
        %4096 = vmatpush1.msra.mxu0 0.0
        %4097 = vmatprep.subr.mxu0 0.0
        %4098 = vmatpush1.msra.mxu0 0.0
        %4099 = vmatprep.subr.mxu0 0.0
        %4100 = vmatpush1.msra.mxu0 0.0
        %4101 = vmatprep.subr.mxu0 0.0
        %4102 = vmatpush1.msra.mxu0 0.0
        %4103 = vmatprep.subr.mxu0 0.0
        %4104 = vmatpush1.msra.mxu0 0.0
        %4105 = vmatprep.subr.mxu0 0.0
        %4106 = vmatpush1.msra.mxu0 0.0
        %4107 = vmatprep.subr.mxu0 0.0
        %4108 = vmatpush1.msra.mxu0 0.0
        %4109 = vmatprep.subr.mxu0 0.0
        %4110 = vmatpush1.msra.mxu0 0.0
        %4111 = vmatprep.subr.mxu0 0.0
        %4112 = vmatpush1.msra.mxu0 0.0
        %4113 = vmatprep.subr.mxu0 0.0
        %4114 = vmatpush1.msra.mxu0 0.0
        %4115 = vmatprep.subr.mxu0 0.0
        %4116 = vmatpush1.msra.mxu0 0.0
        %4117 = vmatprep.subr.mxu0 0.0
        %4118 = vmatpush1.msra.mxu0 0.0
        %4119 = vmatprep.subr.mxu0 0.0
        %4120 = vmatpush1.msra.mxu0 0.0
        %4121 = vmatprep.subr.mxu0 0.0
        %4122 = vmatpush1.msra.mxu0 0.0
        %4123 = vmatprep.subr.mxu0 0.0
        %4124 = vmatpush1.msra.mxu0 0.0
        %4125 = vmatprep.subr.mxu0 0.0
        %4126 = vmatpush1.msra.mxu0 0.0
        %4127 = vmatprep.mubr.f32.mxu0 0.0
        %4128 = vmatmul.mubr.f32.gmra.mrb[0].mxu0 %v4061
        %v4129 = vpop.f32.mrb[0].mxu0
        %v4130 = vadd.f32 %v4058, %v4129
        %v4131 = vpop.f32.mrb[0].mxu0
        %4132 = vdwg.mxu0
        %4133 = vrot.lane.b32.xlu0 %v792, 64
        %v4134 = vpop.permute.xlu0 %4133
        %v4144 = vsel %vm1830, %v3590, %v3583
        %v4145 = vsel %vm1832, %v3597, %v4144
        %v4146 = vsel %vm1834, %v3604, %v4145
        %v4147 = vsel %vm1836, %v3611, %v4146
        %v4148 = vsel %vm1838, %v3618, %v4147
        %v4149 = vsel %vm1840, %v3625, %v4148
        %v4150 = vsel %vm1842, %v3632, %v4149
        %v4153 = vsel %vm1593, %v2892, 0
        %4155 = vmatprep.subr.mxu0 0.0
        %4156 = vmatpush1.msra.mxu0 %v4134
        %4157 = vmatprep.subr.mxu0 0.0
        %4158 = vmatpush1.msra.mxu0 0.0
        %4159 = vmatprep.subr.mxu0 0.0
        %4160 = vmatpush1.msra.mxu0 0.0
        %4161 = vmatprep.subr.mxu0 0.0
        %4162 = vmatpush1.msra.mxu0 0.0
        %4163 = vmatprep.subr.mxu0 0.0
        %4164 = vmatpush1.msra.mxu0 0.0
        %4165 = vmatprep.subr.mxu0 0.0
        %4166 = vmatpush1.msra.mxu0 0.0
        %4167 = vmatprep.subr.mxu0 0.0
        %4168 = vmatpush1.msra.mxu0 0.0
        %4169 = vmatprep.subr.mxu0 0.0
        %4170 = vmatpush1.msra.mxu0 0.0
        %4171 = vmatprep.subr.mxu0 0.0
        %4172 = vmatpush1.msra.mxu0 0.0
        %4173 = vmatprep.subr.mxu0 0.0
        %4174 = vmatpush1.msra.mxu0 0.0
        %4175 = vmatprep.subr.mxu0 0.0
        %4176 = vmatpush1.msra.mxu0 0.0
        %4177 = vmatprep.subr.mxu0 0.0
        %4178 = vmatpush1.msra.mxu0 0.0
        %4179 = vmatprep.subr.mxu0 0.0
        %4180 = vmatpush1.msra.mxu0 0.0
        %4181 = vmatprep.subr.mxu0 0.0
        %4182 = vmatpush1.msra.mxu0 0.0
        %4183 = vmatprep.subr.mxu0 0.0
        %4184 = vmatpush1.msra.mxu0 0.0
        %4185 = vmatprep.subr.mxu0 0.0
        %4186 = vmatpush1.msra.mxu0 0.0
        %4187 = vmatprep.subr.mxu0 0.0
        %4188 = vmatpush1.msra.mxu0 0.0
        %4189 = vmatprep.subr.mxu0 0.0
        %4190 = vmatpush1.msra.mxu0 0.0
        %4191 = vmatprep.subr.mxu0 0.0
        %4192 = vmatpush1.msra.mxu0 0.0
        %4193 = vmatprep.subr.mxu0 0.0
        %4194 = vmatpush1.msra.mxu0 0.0
        %4195 = vmatprep.subr.mxu0 0.0
        %4196 = vmatpush1.msra.mxu0 0.0
        %4197 = vmatprep.subr.mxu0 0.0
        %4198 = vmatpush1.msra.mxu0 0.0
        %4199 = vmatprep.subr.mxu0 0.0
        %4200 = vmatpush1.msra.mxu0 0.0
        %4201 = vmatprep.subr.mxu0 0.0
        %4202 = vmatpush1.msra.mxu0 0.0
        %4203 = vmatprep.subr.mxu0 0.0
        %4204 = vmatpush1.msra.mxu0 0.0
        %4205 = vmatprep.subr.mxu0 0.0
        %4206 = vmatpush1.msra.mxu0 0.0
        %4207 = vmatprep.subr.mxu0 0.0
        %4208 = vmatpush1.msra.mxu0 0.0
        %4209 = vmatprep.subr.mxu0 0.0
        %4210 = vmatpush1.msra.mxu0 0.0
        %4211 = vmatprep.subr.mxu0 0.0
        %4212 = vmatpush1.msra.mxu0 0.0
        %4213 = vmatprep.subr.mxu0 0.0
        %4214 = vmatpush1.msra.mxu0 0.0
        %4215 = vmatprep.subr.mxu0 0.0
        %4216 = vmatpush1.msra.mxu0 0.0
        %4217 = vmatprep.subr.mxu0 0.0
        %4218 = vmatpush1.msra.mxu0 0.0
        %4219 = vmatprep.mubr.f32.mxu0 0.0
        %4220 = vmatmul.mubr.f32.gmra.mrb[0].mxu0 %v4153
        %v4221 = vpop.f32.mrb[0].mxu0
        %v4222 = vadd.f32 %v4150, %v4221
        %v4223 = vpop.f32.mrb[0].mxu0
        %4224 = vdwg.mxu0
        %4225 = vrot.lane.b32.xlu0 %v794, 64
        %v4226 = vpop.permute.xlu0 %4225
        %v4236 = vsel %vm1830, %v3646, %v3639
        %v4237 = vsel %vm1832, %v3653, %v4236
        %v4238 = vsel %vm1834, %v3660, %v4237
        %v4239 = vsel %vm1836, %v3667, %v4238
        %v4240 = vsel %vm1838, %v3674, %v4239
        %v4241 = vsel %vm1840, %v3681, %v4240
        %v4242 = vsel %vm1842, %v3688, %v4241
        %v4245 = vsel %vm1593, %v2893, 0
        %4247 = vmatprep.subr.mxu0 0.0
        %4248 = vmatpush1.msra.mxu0 %v4226
        %4249 = vmatprep.subr.mxu0 0.0
        %4250 = vmatpush1.msra.mxu0 0.0
        %4251 = vmatprep.subr.mxu0 0.0
        %4252 = vmatpush1.msra.mxu0 0.0
        %4253 = vmatprep.subr.mxu0 0.0
        %4254 = vmatpush1.msra.mxu0 0.0
        %4255 = vmatprep.subr.mxu0 0.0
        %4256 = vmatpush1.msra.mxu0 0.0
        %4257 = vmatprep.subr.mxu0 0.0
        %4258 = vmatpush1.msra.mxu0 0.0
        %4259 = vmatprep.subr.mxu0 0.0
        %4260 = vmatpush1.msra.mxu0 0.0
        %4261 = vmatprep.subr.mxu0 0.0
        %4262 = vmatpush1.msra.mxu0 0.0
        %4263 = vmatprep.subr.mxu0 0.0
        %4264 = vmatpush1.msra.mxu0 0.0
        %4265 = vmatprep.subr.mxu0 0.0
        %4266 = vmatpush1.msra.mxu0 0.0
        %4267 = vmatprep.subr.mxu0 0.0
        %4268 = vmatpush1.msra.mxu0 0.0
        %4269 = vmatprep.subr.mxu0 0.0
        %4270 = vmatpush1.msra.mxu0 0.0
        %4271 = vmatprep.subr.mxu0 0.0
        %4272 = vmatpush1.msra.mxu0 0.0
        %4273 = vmatprep.subr.mxu0 0.0
        %4274 = vmatpush1.msra.mxu0 0.0
        %4275 = vmatprep.subr.mxu0 0.0
        %4276 = vmatpush1.msra.mxu0 0.0
        %4277 = vmatprep.subr.mxu0 0.0
        %4278 = vmatpush1.msra.mxu0 0.0
        %4279 = vmatprep.subr.mxu0 0.0
        %4280 = vmatpush1.msra.mxu0 0.0
        %4281 = vmatprep.subr.mxu0 0.0
        %4282 = vmatpush1.msra.mxu0 0.0
        %4283 = vmatprep.subr.mxu0 0.0
        %4284 = vmatpush1.msra.mxu0 0.0
        %4285 = vmatprep.subr.mxu0 0.0
        %4286 = vmatpush1.msra.mxu0 0.0
        %4287 = vmatprep.subr.mxu0 0.0
        %4288 = vmatpush1.msra.mxu0 0.0
        %4289 = vmatprep.subr.mxu0 0.0
        %4290 = vmatpush1.msra.mxu0 0.0
        %4291 = vmatprep.subr.mxu0 0.0
        %4292 = vmatpush1.msra.mxu0 0.0
        %4293 = vmatprep.subr.mxu0 0.0
        %4294 = vmatpush1.msra.mxu0 0.0
        %4295 = vmatprep.subr.mxu0 0.0
        %4296 = vmatpush1.msra.mxu0 0.0
        %4297 = vmatprep.subr.mxu0 0.0
        %4298 = vmatpush1.msra.mxu0 0.0
        %4299 = vmatprep.subr.mxu0 0.0
        %4300 = vmatpush1.msra.mxu0 0.0
        %4301 = vmatprep.subr.mxu0 0.0
        %4302 = vmatpush1.msra.mxu0 0.0
        %4303 = vmatprep.subr.mxu0 0.0
        %4304 = vmatpush1.msra.mxu0 0.0
        %4305 = vmatprep.subr.mxu0 0.0
        %4306 = vmatpush1.msra.mxu0 0.0
        %4307 = vmatprep.subr.mxu0 0.0
        %4308 = vmatpush1.msra.mxu0 0.0
        %4309 = vmatprep.subr.mxu0 0.0
        %4310 = vmatpush1.msra.mxu0 0.0
        %4311 = vmatprep.mubr.f32.mxu0 0.0
        %4312 = vmatmul.mubr.f32.gmra.mrb[0].mxu0 %v4245
        %v4313 = vpop.f32.mrb[0].mxu0
        %v4314 = vadd.f32 %v4242, %v4313
        %v4315 = vpop.f32.mrb[0].mxu0
        %4316 = vdwg.mxu0
        %4317 = vrot.lane.b32.xlu0 %v796, 64
        %v4318 = vpop.permute.xlu0 %4317
        %v4328 = vsel %vm1830, %v3702, %v3695
        %v4329 = vsel %vm1832, %v3709, %v4328
        %v4330 = vsel %vm1834, %v3716, %v4329
        %v4331 = vsel %vm1836, %v3723, %v4330
        %v4332 = vsel %vm1838, %v3730, %v4331
        %v4333 = vsel %vm1840, %v3737, %v4332
        %v4334 = vsel %vm1842, %v3744, %v4333
        %v4337 = vsel %vm1593, %v2894, 0
        %4339 = vmatprep.subr.mxu0 0.0
        %4340 = vmatpush1.msra.mxu0 %v4318
        %4341 = vmatprep.subr.mxu0 0.0
        %4342 = vmatpush1.msra.mxu0 0.0
        %4343 = vmatprep.subr.mxu0 0.0
        %4344 = vmatpush1.msra.mxu0 0.0
        %4345 = vmatprep.subr.mxu0 0.0
        %4346 = vmatpush1.msra.mxu0 0.0
        %4347 = vmatprep.subr.mxu0 0.0
        %4348 = vmatpush1.msra.mxu0 0.0
        %4349 = vmatprep.subr.mxu0 0.0
        %4350 = vmatpush1.msra.mxu0 0.0
        %4351 = vmatprep.subr.mxu0 0.0
        %4352 = vmatpush1.msra.mxu0 0.0
        %4353 = vmatprep.subr.mxu0 0.0
        %4354 = vmatpush1.msra.mxu0 0.0
        %4355 = vmatprep.subr.mxu0 0.0
        %4356 = vmatpush1.msra.mxu0 0.0
        %4357 = vmatprep.subr.mxu0 0.0
        %4358 = vmatpush1.msra.mxu0 0.0
        %4359 = vmatprep.subr.mxu0 0.0
        %4360 = vmatpush1.msra.mxu0 0.0
        %4361 = vmatprep.subr.mxu0 0.0
        %4362 = vmatpush1.msra.mxu0 0.0
        %4363 = vmatprep.subr.mxu0 0.0
        %4364 = vmatpush1.msra.mxu0 0.0
        %4365 = vmatprep.subr.mxu0 0.0
        %4366 = vmatpush1.msra.mxu0 0.0
        %4367 = vmatprep.subr.mxu0 0.0
        %4368 = vmatpush1.msra.mxu0 0.0
        %4369 = vmatprep.subr.mxu0 0.0
        %4370 = vmatpush1.msra.mxu0 0.0
        %4371 = vmatprep.subr.mxu0 0.0
        %4372 = vmatpush1.msra.mxu0 0.0
        %4373 = vmatprep.subr.mxu0 0.0
        %4374 = vmatpush1.msra.mxu0 0.0
        %4375 = vmatprep.subr.mxu0 0.0
        %4376 = vmatpush1.msra.mxu0 0.0
        %4377 = vmatprep.subr.mxu0 0.0
        %4378 = vmatpush1.msra.mxu0 0.0
        %4379 = vmatprep.subr.mxu0 0.0
        %4380 = vmatpush1.msra.mxu0 0.0
        %4381 = vmatprep.subr.mxu0 0.0
        %4382 = vmatpush1.msra.mxu0 0.0
        %4383 = vmatprep.subr.mxu0 0.0
        %4384 = vmatpush1.msra.mxu0 0.0
        %4385 = vmatprep.subr.mxu0 0.0
        %4386 = vmatpush1.msra.mxu0 0.0
        %4387 = vmatprep.subr.mxu0 0.0
        %4388 = vmatpush1.msra.mxu0 0.0
        %4389 = vmatprep.subr.mxu0 0.0
        %4390 = vmatpush1.msra.mxu0 0.0
        %4391 = vmatprep.subr.mxu0 0.0
        %4392 = vmatpush1.msra.mxu0 0.0
        %4393 = vmatprep.subr.mxu0 0.0
        %4394 = vmatpush1.msra.mxu0 0.0
        %4395 = vmatprep.subr.mxu0 0.0
        %4396 = vmatpush1.msra.mxu0 0.0
        %4397 = vmatprep.subr.mxu0 0.0
        %4398 = vmatpush1.msra.mxu0 0.0
        %4399 = vmatprep.subr.mxu0 0.0
        %4400 = vmatpush1.msra.mxu0 0.0
        %4401 = vmatprep.subr.mxu0 0.0
        %4402 = vmatpush1.msra.mxu0 0.0
        %4403 = vmatprep.mubr.f32.mxu0 0.0
        %4404 = vmatmul.mubr.f32.gmra.mrb[0].mxu0 %v4337
        %v4405 = vpop.f32.mrb[0].mxu0
        %v4406 = vadd.f32 %v4334, %v4405
        %v4407 = vpop.f32.mrb[0].mxu0
        %4408 = vdwg.mxu0
        %4409 = vrot.lane.b32.xlu0 %v798, 64
        %v4410 = vpop.permute.xlu0 %4409
        %v4420 = vsel %vm1830, %v3758, %v3751
        %v4421 = vsel %vm1832, %v3765, %v4420
        %v4422 = vsel %vm1834, %v3772, %v4421
        %v4423 = vsel %vm1836, %v3779, %v4422
        %v4424 = vsel %vm1838, %v3786, %v4423
        %v4425 = vsel %vm1840, %v3793, %v4424
        %v4426 = vsel %vm1842, %v3800, %v4425
        %v4429 = vsel %vm1593, %v2895, 0
        %4431 = vmatprep.subr.mxu0 0.0
        %4432 = vmatpush1.msra.mxu0 %v4410
        %4433 = vmatprep.subr.mxu0 0.0
        %4434 = vmatpush1.msra.mxu0 0.0
        %4435 = vmatprep.subr.mxu0 0.0
        %4436 = vmatpush1.msra.mxu0 0.0
        %4437 = vmatprep.subr.mxu0 0.0
        %4438 = vmatpush1.msra.mxu0 0.0
        %4439 = vmatprep.subr.mxu0 0.0
        %4440 = vmatpush1.msra.mxu0 0.0
        %4441 = vmatprep.subr.mxu0 0.0
        %4442 = vmatpush1.msra.mxu0 0.0
        %4443 = vmatprep.subr.mxu0 0.0
        %4444 = vmatpush1.msra.mxu0 0.0
        %4445 = vmatprep.subr.mxu0 0.0
        %4446 = vmatpush1.msra.mxu0 0.0
        %4447 = vmatprep.subr.mxu0 0.0
        %4448 = vmatpush1.msra.mxu0 0.0
        %4449 = vmatprep.subr.mxu0 0.0
        %4450 = vmatpush1.msra.mxu0 0.0
        %4451 = vmatprep.subr.mxu0 0.0
        %4452 = vmatpush1.msra.mxu0 0.0
        %4453 = vmatprep.subr.mxu0 0.0
        %4454 = vmatpush1.msra.mxu0 0.0
        %4455 = vmatprep.subr.mxu0 0.0
        %4456 = vmatpush1.msra.mxu0 0.0
        %4457 = vmatprep.subr.mxu0 0.0
        %4458 = vmatpush1.msra.mxu0 0.0
        %4459 = vmatprep.subr.mxu0 0.0
        %4460 = vmatpush1.msra.mxu0 0.0
        %4461 = vmatprep.subr.mxu0 0.0
        %4462 = vmatpush1.msra.mxu0 0.0
        %4463 = vmatprep.subr.mxu0 0.0
        %4464 = vmatpush1.msra.mxu0 0.0
        %4465 = vmatprep.subr.mxu0 0.0
        %4466 = vmatpush1.msra.mxu0 0.0
        %4467 = vmatprep.subr.mxu0 0.0
        %4468 = vmatpush1.msra.mxu0 0.0
        %4469 = vmatprep.subr.mxu0 0.0
        %4470 = vmatpush1.msra.mxu0 0.0
        %4471 = vmatprep.subr.mxu0 0.0
        %4472 = vmatpush1.msra.mxu0 0.0
        %4473 = vmatprep.subr.mxu0 0.0
        %4474 = vmatpush1.msra.mxu0 0.0
        %4475 = vmatprep.subr.mxu0 0.0
        %4476 = vmatpush1.msra.mxu0 0.0
        %4477 = vmatprep.subr.mxu0 0.0
        %4478 = vmatpush1.msra.mxu0 0.0
        %4479 = vmatprep.subr.mxu0 0.0
        %4480 = vmatpush1.msra.mxu0 0.0
        %4481 = vmatprep.subr.mxu0 0.0
        %4482 = vmatpush1.msra.mxu0 0.0
        %4483 = vmatprep.subr.mxu0 0.0
        %4484 = vmatpush1.msra.mxu0 0.0
        %4485 = vmatprep.subr.mxu0 0.0
        %4486 = vmatpush1.msra.mxu0 0.0
        %4487 = vmatprep.subr.mxu0 0.0
        %4488 = vmatpush1.msra.mxu0 0.0
        %4489 = vmatprep.subr.mxu0 0.0
        %4490 = vmatpush1.msra.mxu0 0.0
        %4491 = vmatprep.subr.mxu0 0.0
        %4492 = vmatpush1.msra.mxu0 0.0
        %4493 = vmatprep.subr.mxu0 0.0
        %4494 = vmatpush1.msra.mxu0 0.0
        %4495 = vmatprep.mubr.f32.mxu0 0.0
        %4496 = vmatmul.mubr.f32.gmra.mrb[0].mxu0 %v4429
        %v4497 = vpop.f32.mrb[0].mxu0
        %v4498 = vadd.f32 %v4426, %v4497
        %v4499 = vpop.f32.mrb[0].mxu0
        %4500 = vdwg.mxu0
        %4501 = vrot.lane.b32.xlu0 %v800, 64
        %v4502 = vpop.permute.xlu0 %4501
        %v4512 = vsel %vm1830, %v3814, %v3807
        %v4513 = vsel %vm1832, %v3821, %v4512
        %v4514 = vsel %vm1834, %v3828, %v4513
        %v4515 = vsel %vm1836, %v3835, %v4514
        %v4516 = vsel %vm1838, %v3842, %v4515
        %v4517 = vsel %vm1840, %v3849, %v4516
        %v4518 = vsel %vm1842, %v3856, %v4517
        %v4521 = vsel %vm1593, %v2896, 0
        %4523 = vmatprep.subr.mxu0 0.0
        %4524 = vmatpush1.msra.mxu0 %v4502
        %4525 = vmatprep.subr.mxu0 0.0
        %4526 = vmatpush1.msra.mxu0 0.0
        %4527 = vmatprep.subr.mxu0 0.0
        %4528 = vmatpush1.msra.mxu0 0.0
        %4529 = vmatprep.subr.mxu0 0.0
        %4530 = vmatpush1.msra.mxu0 0.0
        %4531 = vmatprep.subr.mxu0 0.0
        %4532 = vmatpush1.msra.mxu0 0.0
        %4533 = vmatprep.subr.mxu0 0.0
        %4534 = vmatpush1.msra.mxu0 0.0
        %4535 = vmatprep.subr.mxu0 0.0
        %4536 = vmatpush1.msra.mxu0 0.0
        %4537 = vmatprep.subr.mxu0 0.0
        %4538 = vmatpush1.msra.mxu0 0.0
        %4539 = vmatprep.subr.mxu0 0.0
        %4540 = vmatpush1.msra.mxu0 0.0
        %4541 = vmatprep.subr.mxu0 0.0
        %4542 = vmatpush1.msra.mxu0 0.0
        %4543 = vmatprep.subr.mxu0 0.0
        %4544 = vmatpush1.msra.mxu0 0.0
        %4545 = vmatprep.subr.mxu0 0.0
        %4546 = vmatpush1.msra.mxu0 0.0
        %4547 = vmatprep.subr.mxu0 0.0
        %4548 = vmatpush1.msra.mxu0 0.0
        %4549 = vmatprep.subr.mxu0 0.0
        %4550 = vmatpush1.msra.mxu0 0.0
        %4551 = vmatprep.subr.mxu0 0.0
        %4552 = vmatpush1.msra.mxu0 0.0
        %4553 = vmatprep.subr.mxu0 0.0
        %4554 = vmatpush1.msra.mxu0 0.0
        %4555 = vmatprep.subr.mxu0 0.0
        %4556 = vmatpush1.msra.mxu0 0.0
        %4557 = vmatprep.subr.mxu0 0.0
        %4558 = vmatpush1.msra.mxu0 0.0
        %4559 = vmatprep.subr.mxu0 0.0
        %4560 = vmatpush1.msra.mxu0 0.0
        %4561 = vmatprep.subr.mxu0 0.0
        %4562 = vmatpush1.msra.mxu0 0.0
        %4563 = vmatprep.subr.mxu0 0.0
        %4564 = vmatpush1.msra.mxu0 0.0
        %4565 = vmatprep.subr.mxu0 0.0
        %4566 = vmatpush1.msra.mxu0 0.0
        %4567 = vmatprep.subr.mxu0 0.0
        %4568 = vmatpush1.msra.mxu0 0.0
        %4569 = vmatprep.subr.mxu0 0.0
        %4570 = vmatpush1.msra.mxu0 0.0
        %4571 = vmatprep.subr.mxu0 0.0
        %4572 = vmatpush1.msra.mxu0 0.0
        %4573 = vmatprep.subr.mxu0 0.0
        %4574 = vmatpush1.msra.mxu0 0.0
        %4575 = vmatprep.subr.mxu0 0.0
        %4576 = vmatpush1.msra.mxu0 0.0
        %4577 = vmatprep.subr.mxu0 0.0
        %4578 = vmatpush1.msra.mxu0 0.0
        %4579 = vmatprep.subr.mxu0 0.0
        %4580 = vmatpush1.msra.mxu0 0.0
        %4581 = vmatprep.subr.mxu0 0.0
        %4582 = vmatpush1.msra.mxu0 0.0
        %4583 = vmatprep.subr.mxu0 0.0
        %4584 = vmatpush1.msra.mxu0 0.0
        %4585 = vmatprep.subr.mxu0 0.0
        %4586 = vmatpush1.msra.mxu0 0.0
        %4587 = vmatprep.mubr.f32.mxu0 0.0
        %4588 = vmatmul.mubr.f32.gmra.mrb[0].mxu0 %v4521
        %v4589 = vpop.f32.mrb[0].mxu0
        %v4590 = vadd.f32 %v4518, %v4589
        %v4591 = vpop.f32.mrb[0].mxu0
        %4592 = vdwg.mxu0
        %4594 = vrot.lane.b32.xlu0 %v4130, 8
        %v4595 = vpop.permute.xlu0 %4594
        %4598 = vrot.lane.b32.xlu0 %v4314, 16
        %v4599 = vpop.permute.xlu0 %4598
        %4602 = vrot.lane.b32.xlu0 %v4498, 24
        %v4603 = vpop.permute.xlu0 %4602
        %v4605 = vsel %vm1593, %v3946, %v4595
        %vm4606 = vcmask 130048
        %v4607 = vsel %vm4606, %v4605, %v4599
        %vm4608 = vcmask 195584
        %v4609 = vsel %vm4608, %v4607, %v4603
        %4611 = vrot.lane.b32.xlu0 %v4222, 8
        %v4612 = vpop.permute.xlu0 %4611
        %4615 = vrot.lane.b32.xlu0 %v4406, 16
        %v4616 = vpop.permute.xlu0 %4615
        %4619 = vrot.lane.b32.xlu0 %v4590, 24
        %v4620 = vpop.permute.xlu0 %4619
        %v4622 = vsel %vm1593, %v4038, %v4612
        %v4623 = vsel %vm4606, %v4622, %v4616
        %v4624 = vsel %vm4608, %v4623, %v4620
        %v4625 = vld [vmem:[%s558] sm:$0xff]
        %v4626 = vld [vmem:[%s558 + $0x8] sm:$0xff]
        %v4627 = vld [vmem:[%s558 + $0x10] sm:$0xff]
        %v4628 = vld [vmem:[%s558 + $0x18] sm:$0xff]
        %v4630 = vsel %vm705, %v4609, 0
        %v4633 = vsel %vm705, %v4624, 0
        %4635 = vmatprep.subr.mxu0 0.0
        %4636 = vmatpush1.msra.mxu0 %v4625
        %4637 = vmatprep.subr.mxu0 0.0
        %4638 = vmatpush1.msra.mxu0 %v4626
        %4639 = vmatprep.subr.mxu0 0.0
        %4640 = vmatpush1.msra.mxu0 %v4627
        %4641 = vmatprep.subr.mxu0 0.0
        %4642 = vmatpush1.msra.mxu0 %v4628
        %4643 = vmatprep.subr.mxu0 0.0
        %4644 = vmatpush1.msra.mxu0 0.0
        %4645 = vmatprep.subr.mxu0 0.0
        %4646 = vmatpush1.msra.mxu0 0.0
        %4647 = vmatprep.subr.mxu0 0.0
        %4648 = vmatpush1.msra.mxu0 0.0
        %4649 = vmatprep.subr.mxu0 0.0
        %4650 = vmatpush1.msra.mxu0 0.0
        %4651 = vmatprep.subr.mxu0 0.0
        %4652 = vmatpush1.msra.mxu0 0.0
        %4653 = vmatprep.subr.mxu0 0.0
        %4654 = vmatpush1.msra.mxu0 0.0
        %4655 = vmatprep.subr.mxu0 0.0
        %4656 = vmatpush1.msra.mxu0 0.0
        %4657 = vmatprep.subr.mxu0 0.0
        %4658 = vmatpush1.msra.mxu0 0.0
        %4659 = vmatprep.subr.mxu0 0.0
        %4660 = vmatpush1.msra.mxu0 0.0
        %4661 = vmatprep.subr.mxu0 0.0
        %4662 = vmatpush1.msra.mxu0 0.0
        %4663 = vmatprep.subr.mxu0 0.0
        %4664 = vmatpush1.msra.mxu0 0.0
        %4665 = vmatprep.subr.mxu0 0.0
        %4666 = vmatpush1.msra.mxu0 0.0
        %4667 = vmatprep.subr.mxu0 0.0
        %4668 = vmatpush1.msra.mxu0 0.0
        %4669 = vmatprep.subr.mxu0 0.0
        %4670 = vmatpush1.msra.mxu0 0.0
        %4671 = vmatprep.subr.mxu0 0.0
        %4672 = vmatpush1.msra.mxu0 0.0
        %4673 = vmatprep.subr.mxu0 0.0
        %4674 = vmatpush1.msra.mxu0 0.0
        %4675 = vmatprep.subr.mxu0 0.0
        %4676 = vmatpush1.msra.mxu0 0.0
        %4677 = vmatprep.subr.mxu0 0.0
        %4678 = vmatpush1.msra.mxu0 0.0
        %4679 = vmatprep.subr.mxu0 0.0
        %4680 = vmatpush1.msra.mxu0 0.0
        %4681 = vmatprep.subr.mxu0 0.0
        %4682 = vmatpush1.msra.mxu0 0.0
        %4683 = vmatprep.subr.mxu0 0.0
        %4684 = vmatpush1.msra.mxu0 0.0
        %4685 = vmatprep.subr.mxu0 0.0
        %4686 = vmatpush1.msra.mxu0 0.0
        %4687 = vmatprep.subr.mxu0 0.0
        %4688 = vmatpush1.msra.mxu0 0.0
        %4689 = vmatprep.subr.mxu0 0.0
        %4690 = vmatpush1.msra.mxu0 0.0
        %4691 = vmatprep.subr.mxu0 0.0
        %4692 = vmatpush1.msra.mxu0 0.0
        %4693 = vmatprep.subr.mxu0 0.0
        %4694 = vmatpush1.msra.mxu0 0.0
        %4695 = vmatprep.subr.mxu0 0.0
        %4696 = vmatpush1.msra.mxu0 0.0
        %4697 = vmatprep.subr.mxu0 0.0
        %4698 = vmatpush1.msra.mxu0 0.0
        %4699 = vmatprep.mubr.f32.mxu0 0.0
        %4700 = vmatmul.mubr.f32.gmra.mrb[0].mxu0 %v4630
        %v4701 = vpop.f32.mrb[0].mxu0
        %v4702 = vadd.f32 0.0, %v4701
        %v4703 = vpop.f32.mrb[0].mxu0
        %4704 = vmatprep.mubr.f32.mxu0 0.0
        %4705 = vmatmul.mubr.f32.gmra.mrb[0].mxu0 %v4633
        %v4706 = vpop.f32.mrb[0].mxu0
        %v4707 = vadd.f32 0.0, %v4706
        %v4708 = vpop.f32.mrb[0].mxu0
        %4709 = vdwg.mxu0
        %v4710 = vadd.f32 %v699, %v4702
        %v4711 = vadd.f32 %v700, %v4707
        %v4712 = vld [vmem:[%s680] sm:$0x1]
        %v4713 = vld [vmem:[%s683] sm:$0x1]
        %v4714 = vsel %vm705, %v4710, 0.0
        %4715 = vadd.xlane.f32.xlu0 %v4714
        %v4716 = vpop.xlane.xlu0 %4715
        %v4717 = vsel %vm705, %v4711, 0.0
        %4718 = vadd.xlane.f32.xlu0 %v4717
        %v4719 = vpop.xlane.xlu0 %4718
        %v4720 = vrcp.pop 32.0
        %v4721 = vmul.f32 %v4716, %v4720
        %v4722 = vmul.f32 %v4719, %v4720
        %v4723 = vsub.f32 %v4710, %v4721
        %v4724 = vsub.f32 %v4711, %v4722
        %v4725 = vmul.f32 %v4723, %v4723
        %v4726 = vmul.f32 %v4724, %v4724
        %v4727 = vsel %vm705, %v4725, 0.0
        %4728 = vadd.xlane.f32.xlu0 %v4727
        %v4729 = vpop.xlane.xlu0 %4728
        %v4730 = vsel %vm705, %v4726, 0.0
        %4731 = vadd.xlane.f32.xlu0 %v4730
        %v4732 = vpop.xlane.xlu0 %4731
        %v4733 = vmul.f32 %v4729, %v4720
        %v4734 = vmul.f32 %v4732, %v4720
        %v4735 = vadd.f32 %v4733, 1e-05
        %v4736 = vadd.f32 %v4734, 1e-05
        %v4737 = vrsqrt.pop %v4735
        %v4738 = vrsqrt.pop %v4736
        %v4739 = vmul.f32 %v4723, %v4737
        %v4740 = vmul.f32 %v4724, %v4738
        %v4742 = vlaneseq
        %v4743 = vshrl.u32 %v4742, 7
        %v4744 = vsub.s32 0, %v4743
        %v4745 = vrot.slane %v4712, %v4744
        %v4747 = vmul.f32 %v4739, %v4745
        %v4748 = vmul.f32 %v4740, %v4745
        %v4750 = vlaneseq
        %v4751 = vshrl.u32 %v4750, 7
        %v4752 = vsub.s32 0, %v4751
        %v4753 = vrot.slane %v4713, %v4752
        %v4755 = vadd.f32 %v4747, %v4753
        %v4756 = vadd.f32 %v4748, %v4753
        %v4757 = vld [vmem:[%s576] sm:$0xff]
        %v4758 = vld [vmem:[%s576 + $0x8] sm:$0xff]
        %v4759 = vld [vmem:[%s576 + $0x10] sm:$0xff]
        %v4760 = vld [vmem:[%s576 + $0x18] sm:$0xff]
        %v4761 = vld [vmem:[%s669] sm:$0x1]
        %v4763 = vlaneseq
        %v4764 = vshrl.u32 %v4763, 7
        %v4765 = vsub.s32 0, %v4764
        %v4766 = vrot.slane %v4761, %v4765
        %v4769 = vsel %vm705, %v4755, 0
        %v4772 = vsel %vm705, %v4756, 0
        %4774 = vmatprep.subr.mxu0 0.0
        %4775 = vmatpush1.msra.mxu0 %v4757
        %4776 = vmatprep.subr.mxu0 0.0
        %4777 = vmatpush1.msra.mxu0 %v4758
        %4778 = vmatprep.subr.mxu0 0.0
        %4779 = vmatpush1.msra.mxu0 %v4759
        %4780 = vmatprep.subr.mxu0 0.0
        %4781 = vmatpush1.msra.mxu0 %v4760
        %4782 = vmatprep.subr.mxu0 0.0
        %4783 = vmatpush1.msra.mxu0 0.0
        %4784 = vmatprep.subr.mxu0 0.0
        %4785 = vmatpush1.msra.mxu0 0.0
        %4786 = vmatprep.subr.mxu0 0.0
        %4787 = vmatpush1.msra.mxu0 0.0
        %4788 = vmatprep.subr.mxu0 0.0
        %4789 = vmatpush1.msra.mxu0 0.0
        %4790 = vmatprep.subr.mxu0 0.0
        %4791 = vmatpush1.msra.mxu0 0.0
        %4792 = vmatprep.subr.mxu0 0.0
        %4793 = vmatpush1.msra.mxu0 0.0
        %4794 = vmatprep.subr.mxu0 0.0
        %4795 = vmatpush1.msra.mxu0 0.0
        %4796 = vmatprep.subr.mxu0 0.0
        %4797 = vmatpush1.msra.mxu0 0.0
        %4798 = vmatprep.subr.mxu0 0.0
        %4799 = vmatpush1.msra.mxu0 0.0
        %4800 = vmatprep.subr.mxu0 0.0
        %4801 = vmatpush1.msra.mxu0 0.0
        %4802 = vmatprep.subr.mxu0 0.0
        %4803 = vmatpush1.msra.mxu0 0.0
        %4804 = vmatprep.subr.mxu0 0.0
        %4805 = vmatpush1.msra.mxu0 0.0
        %4806 = vmatprep.subr.mxu0 0.0
        %4807 = vmatpush1.msra.mxu0 0.0
        %4808 = vmatprep.subr.mxu0 0.0
        %4809 = vmatpush1.msra.mxu0 0.0
        %4810 = vmatprep.subr.mxu0 0.0
        %4811 = vmatpush1.msra.mxu0 0.0
        %4812 = vmatprep.subr.mxu0 0.0
        %4813 = vmatpush1.msra.mxu0 0.0
        %4814 = vmatprep.subr.mxu0 0.0
        %4815 = vmatpush1.msra.mxu0 0.0
        %4816 = vmatprep.subr.mxu0 0.0
        %4817 = vmatpush1.msra.mxu0 0.0
        %4818 = vmatprep.subr.mxu0 0.0
        %4819 = vmatpush1.msra.mxu0 0.0
        %4820 = vmatprep.subr.mxu0 0.0
        %4821 = vmatpush1.msra.mxu0 0.0
        %4822 = vmatprep.subr.mxu0 0.0
        %4823 = vmatpush1.msra.mxu0 0.0
        %4824 = vmatprep.subr.mxu0 0.0
        %4825 = vmatpush1.msra.mxu0 0.0
        %4826 = vmatprep.subr.mxu0 0.0
        %4827 = vmatpush1.msra.mxu0 0.0
        %4828 = vmatprep.subr.mxu0 0.0
        %4829 = vmatpush1.msra.mxu0 0.0
        %4830 = vmatprep.subr.mxu0 0.0
        %4831 = vmatpush1.msra.mxu0 0.0
        %4832 = vmatprep.subr.mxu0 0.0
        %4833 = vmatpush1.msra.mxu0 0.0
        %4834 = vmatprep.subr.mxu0 0.0
        %4835 = vmatpush1.msra.mxu0 0.0
        %4836 = vmatprep.subr.mxu0 0.0
        %4837 = vmatpush1.msra.mxu0 0.0
        %4838 = vmatprep.mubr.f32.mxu0 0.0
        %4839 = vmatmul.mubr.f32.gmra.mrb[0].mxu0 %v4769
        %v4840 = vpop.f32.mrb[0].mxu0
        %v4841 = vadd.f32 %v4766, %v4840
        %v4842 = vpop.f32.mrb[0].mxu0
        %4843 = vmatprep.mubr.f32.mxu0 0.0
        %4844 = vmatmul.mubr.f32.gmra.mrb[0].mxu0 %v4772
        %v4845 = vpop.f32.mrb[0].mxu0
        %v4846 = vadd.f32 %v4766, %v4845
        %v4847 = vpop.f32.mrb[0].mxu0
        %4848 = vdwg.mxu0
        %v4849 = vmax.f32 %v4841, 0.0
        %v4850 = vmax.f32 %v4846, 0.0
        %v4851 = vld [vmem:[%s674] sm:$0xff]
        %v4852 = vld [vmem:[%s674 + $0x8] sm:$0xff]
        %v4853 = vld [vmem:[%s674 + $0x10] sm:$0xff]
        %v4854 = vld [vmem:[%s674 + $0x18] sm:$0xff]
        %v4855 = vld [vmem:[%s674 + $0x20] sm:$0xff]
        %v4856 = vld [vmem:[%s674 + $0x28] sm:$0xff]
        %v4857 = vld [vmem:[%s674 + $0x30] sm:$0xff]
        %v4858 = vld [vmem:[%s674 + $0x38] sm:$0xff]
        %v4859 = vld [vmem:[%s677] sm:$0x1]
        %v4861 = vlaneseq
        %v4862 = vshrl.u32 %v4861, 7
        %v4863 = vsub.s32 0, %v4862
        %v4864 = vrot.slane %v4859, %v4863
        %vm4866 = vcmask 523264
        %v4868 = vsel %vm4866, %v4849, 0
        %v4871 = vsel %vm4866, %v4850, 0
        %4873 = vmatprep.subr.mxu0 0.0
        %4874 = vmatpush1.msra.mxu0 %v4851
        %4875 = vmatprep.subr.mxu0 0.0
        %4876 = vmatpush1.msra.mxu0 %v4852
        %4877 = vmatprep.subr.mxu0 0.0
        %4878 = vmatpush1.msra.mxu0 %v4853
        %4879 = vmatprep.subr.mxu0 0.0
        %4880 = vmatpush1.msra.mxu0 %v4854
        %4881 = vmatprep.subr.mxu0 0.0
        %4882 = vmatpush1.msra.mxu0 %v4855
        %4883 = vmatprep.subr.mxu0 0.0
        %4884 = vmatpush1.msra.mxu0 %v4856
        %4885 = vmatprep.subr.mxu0 0.0
        %4886 = vmatpush1.msra.mxu0 %v4857
        %4887 = vmatprep.subr.mxu0 0.0
        %4888 = vmatpush1.msra.mxu0 %v4858
        %4889 = vmatprep.subr.mxu0 0.0
        %4890 = vmatpush1.msra.mxu0 0.0
        %4891 = vmatprep.subr.mxu0 0.0
        %4892 = vmatpush1.msra.mxu0 0.0
        %4893 = vmatprep.subr.mxu0 0.0
        %4894 = vmatpush1.msra.mxu0 0.0
        %4895 = vmatprep.subr.mxu0 0.0
        %4896 = vmatpush1.msra.mxu0 0.0
        %4897 = vmatprep.subr.mxu0 0.0
        %4898 = vmatpush1.msra.mxu0 0.0
        %4899 = vmatprep.subr.mxu0 0.0
        %4900 = vmatpush1.msra.mxu0 0.0
        %4901 = vmatprep.subr.mxu0 0.0
        %4902 = vmatpush1.msra.mxu0 0.0
        %4903 = vmatprep.subr.mxu0 0.0
        %4904 = vmatpush1.msra.mxu0 0.0
        %4905 = vmatprep.subr.mxu0 0.0
        %4906 = vmatpush1.msra.mxu0 0.0
        %4907 = vmatprep.subr.mxu0 0.0
        %4908 = vmatpush1.msra.mxu0 0.0
        %4909 = vmatprep.subr.mxu0 0.0
        %4910 = vmatpush1.msra.mxu0 0.0
        %4911 = vmatprep.subr.mxu0 0.0
        %4912 = vmatpush1.msra.mxu0 0.0
        %4913 = vmatprep.subr.mxu0 0.0
        %4914 = vmatpush1.msra.mxu0 0.0
        %4915 = vmatprep.subr.mxu0 0.0
        %4916 = vmatpush1.msra.mxu0 0.0
        %4917 = vmatprep.subr.mxu0 0.0
        %4918 = vmatpush1.msra.mxu0 0.0
        %4919 = vmatprep.subr.mxu0 0.0
        %4920 = vmatpush1.msra.mxu0 0.0
        %4921 = vmatprep.subr.mxu0 0.0
        %4922 = vmatpush1.msra.mxu0 0.0
        %4923 = vmatprep.subr.mxu0 0.0
        %4924 = vmatpush1.msra.mxu0 0.0
        %4925 = vmatprep.subr.mxu0 0.0
        %4926 = vmatpush1.msra.mxu0 0.0
        %4927 = vmatprep.subr.mxu0 0.0
        %4928 = vmatpush1.msra.mxu0 0.0
        %4929 = vmatprep.subr.mxu0 0.0
        %4930 = vmatpush1.msra.mxu0 0.0
        %4931 = vmatprep.subr.mxu0 0.0
        %4932 = vmatpush1.msra.mxu0 0.0
        %4933 = vmatprep.subr.mxu0 0.0
        %4934 = vmatpush1.msra.mxu0 0.0
        %4935 = vmatprep.subr.mxu0 0.0
        %4936 = vmatpush1.msra.mxu0 0.0
        %4937 = vmatprep.mubr.f32.mxu0 0.0
        %4938 = vmatmul.mubr.f32.gmra.mrb[0].mxu0 %v4868
        %v4939 = vpop.f32.mrb[0].mxu0
        %v4940 = vadd.f32 %v4864, %v4939
        %v4941 = vpop.f32.mrb[0].mxu0
        %4942 = vmatprep.mubr.f32.mxu0 0.0
        %4943 = vmatmul.mubr.f32.gmra.mrb[0].mxu0 %v4871
        %v4944 = vpop.f32.mrb[0].mxu0
        %v4945 = vadd.f32 %v4864, %v4944
        %v4946 = vpop.f32.mrb[0].mxu0
        %4947 = vdwg.mxu0
        %v4948 = vadd.f32 %v4755, %v4940
        %v4949 = vadd.f32 %v4756, %v4945
        %v4950 = vld [vmem:[%s686] sm:$0x1]
        %v4951 = vld [vmem:[%s689] sm:$0x1]
        %v4952 = vsel %vm705, %v4948, 0.0
        %4953 = vadd.xlane.f32.xlu0 %v4952
        %v4954 = vpop.xlane.xlu0 %4953
        %v4955 = vsel %vm705, %v4949, 0.0
        %4956 = vadd.xlane.f32.xlu0 %v4955
        %v4957 = vpop.xlane.xlu0 %4956
        %v4958 = vmul.f32 %v4954, %v4720
        %v4959 = vmul.f32 %v4957, %v4720
        %v4960 = vsub.f32 %v4948, %v4958
        %v4961 = vsub.f32 %v4949, %v4959
        %v4962 = vmul.f32 %v4960, %v4960
        %v4963 = vmul.f32 %v4961, %v4961
        %v4964 = vsel %vm705, %v4962, 0.0
        %4965 = vadd.xlane.f32.xlu0 %v4964
        %v4966 = vpop.xlane.xlu0 %4965
        %v4967 = vsel %vm705, %v4963, 0.0
        %4968 = vadd.xlane.f32.xlu0 %v4967
        %v4969 = vpop.xlane.xlu0 %4968
        %v4970 = vmul.f32 %v4966, %v4720
        %v4971 = vmul.f32 %v4969, %v4720
        %v4972 = vadd.f32 %v4970, 1e-05
        %v4973 = vadd.f32 %v4971, 1e-05
        %v4974 = vrsqrt.pop %v4972
        %v4975 = vrsqrt.pop %v4973
        %v4976 = vmul.f32 %v4960, %v4974
        %v4977 = vmul.f32 %v4961, %v4975
        %v4979 = vlaneseq
        %v4980 = vshrl.u32 %v4979, 7
        %v4981 = vsub.s32 0, %v4980
        %v4982 = vrot.slane %v4950, %v4981
        %v4984 = vmul.f32 %v4976, %v4982
        %v4985 = vmul.f32 %v4977, %v4982
        %v4987 = vlaneseq
        %v4988 = vshrl.u32 %v4987, 7
        %v4989 = vsub.s32 0, %v4988
        %v4990 = vrot.slane %v4951, %v4989
        %v4992 = vadd.f32 %v4984, %v4990
        %v4993 = vadd.f32 %v4985, %v4990
        %4994 = vst.msk [vmem:[#allocation2] sm:$0xff] %vm705, %v4992
        %4995 = vst.msk [vmem:[#allocation2 + $0x8] sm:$0xff] %vm705, %v4993
        %p4996 = scmp.eq.s32.totalorder %s39, 1
        // Predicated region
        $region93: #{tpu_custom_call.1} parent=71 // pred_check
          %p4997 = pneg %p4996
        $region94: #{tpu_custom_call.1} parent=71 // pred_check_branch
          %4999 = sbr.rel (%p4997) target = $region96
        $region95: #{tpu_custom_call.1} parent=71 // pred_region
          %5000 = vst.msk [vmem:[#allocation13] sm:$0xff] %vm705, %v4992
          %5001 = vst.msk [vmem:[#allocation13 + $0x8] sm:$0xff] %vm705, %v4993
        $region96: #{tpu_custom_call.1} parent=71 // pred_fallthru
          _
        // Predicated region
        $region97: #{tpu_custom_call.1} parent=71 // pred_check
          %p5002 = pneg %p385
        $region98: #{tpu_custom_call.1} parent=71 // pred_check_branch
          %5004 = sbr.rel (%p5002) target = $region100
        $region99: #{tpu_custom_call.1} parent=71 // pred_region
          %s5006 = ssub.s32 256, 256
          %5007 = vsyncadd [#allocation7], %s5006
          %s5008 = sshll.u32 [#allocation13], 4
          %s5009 = int_to_ptr.vmem [resolvable:$true] %s5008
          %5014 = dma.vmem_to_hbm [thread:$0]  %s5009, 256, %s14, [#allocation7], 128, 128, 8
        $region100: #{tpu_custom_call.1} parent=71 // pred_fallthru
          _
        // Predicated region
        $region101: #{tpu_custom_call.1} parent=71 // pred_check
          %p5015 = pneg %p385
        $region102: #{tpu_custom_call.1} parent=71 // pred_check_branch
          %5017 = sbr.rel (%p5015) target = $region104
        $region103: #{tpu_custom_call.1} parent=71 // pred_region
          %5018 = dma.done [#allocation7], 256
        $region104: #{tpu_custom_call.1} parent=71 // pred_fallthru
          _
      $region72: #{tpu_custom_call.1} parent=5 // pred_fallthru
        _
      %p5019 = scmp.le.s32.totalorder 2, %s34
      // Predicated region
      $region105: #{tpu_custom_call.1} parent=5 // pred_check
        %p5020 = pneg %p5019
      $region106: #{tpu_custom_call.1} parent=5 // pred_check_branch
        %5022 = sbr.rel (%p5020) target = $region108
      $region107: #{tpu_custom_call.1} parent=5 // pred_region
        %s5023 = ssub.s32 %s34, 2
      $region108: #{tpu_custom_call.1} parent=5 // pred_fallthru
        _
    $region6: #{tpu_custom_call.1} parent=1 // loop_footer
      %s38 = sadd.s32 1, %s34
    $region7: #{tpu_custom_call.1} parent=1 // loop_footer_branch
      %33 = sbr.rel target = $region3
    $region8: #{tpu_custom_call.1} parent=1 // loop_exit
      _
    %5024 = vsyncpa [#allocation6], 1
    %s5025 = scalar_lea.sflag [#allocation6], 1
    %5026 = vsyncpa %s5025, 1
    %5027 = vsyncpa [#allocation9], 1
    %s5028 = scalar_lea.sflag [#allocation9], 1
    %5029 = vsyncpa %s5028, 1
    %5030 = vsyncpa [#allocation12], 1
    %s5031 = scalar_lea.sflag [#allocation12], 1
    %5032 = vsyncpa %s5031, 1
    %5033 = vsyncpa [#allocation7], 1
    %s5034 = scalar_lea.sflag [#allocation7], 1
    %5035 = vsyncpa %s5034, 1

</llo_original>
